<compile_context>
chip_gen: v5e
topology: v5e:2x2
jax: 0.10.0
libtpu: 0.0.40
codegen_flags: <defaults>
</compile_context>

<pallas_src>
import functools

import jax
import jax.numpy as jnp
from jax.experimental import pallas as pl
from jax.experimental.pallas import tpu as pltpu

H = 100
N_CLASSES = 10
N_FEATURES = 3072

H_PAD = 128   # hidden width padded to the 128-lane vreg width
C_PAD = 128   # class width padded to the 128-lane vreg width


def mlp_kernel(x_ref, w1_ref, w2_ref, w3_ref, b_ref, o_ref):
    """One batch tile of the MLP; all operands lane-dense (..., 128)."""
    x = x_ref[...]                       # (bm, 3072) bf16
    b = b_ref[...]                       # (8, 128) f32; rows 0/1/2 = b1/b2/b3 (zero-padded)
    b1 = b[0:1, :]
    b2 = b[1:2, :]
    b3 = b[2:3, :]

    # l1 + ReLU (MXU matmul, f32 accumulate; elementwise in f32)
    h1 = jnp.dot(x, w1_ref[...], preferred_element_type=jnp.float32) + b1
    h1 = jnp.maximum(h1, 0.0).astype(jnp.bfloat16)
    # l2 + ReLU
    h2 = jnp.dot(h1, w2_ref[...], preferred_element_type=jnp.float32) + b2
    h2 = jnp.maximum(h2, 0.0).astype(jnp.bfloat16)
    # l3 (logits, no activation)
    out = jnp.dot(h2, w3_ref[...], preferred_element_type=jnp.float32) + b3
    o_ref[...] = out.astype(o_ref.dtype)


def _pad_to(a, shape):
    return jnp.pad(a, [(0, t - s) for s, t in zip(a.shape, shape)])


def prepare_params(params):
    """Zero-pad weights to lane-dense shapes, cast matmul operands to bf16,
    and fold the three biases into one (8, 128) f32 block."""
    w1 = _pad_to(params["w1"], (N_FEATURES, H_PAD)).astype(jnp.bfloat16)
    w2 = _pad_to(params["w2"], (H_PAD, H_PAD)).astype(jnp.bfloat16)
    w3 = _pad_to(params["w3"], (H_PAD, C_PAD)).astype(jnp.bfloat16)
    b = jnp.zeros((8, H_PAD), jnp.float32)
    b = b.at[0, :H].set(params["b1"].reshape(-1))
    b = b.at[1, :H].set(params["b2"].reshape(-1))
    b = b.at[2, :N_CLASSES].set(params["b3"].reshape(-1))
    return w1, w2, w3, b


@functools.partial(jax.jit, static_argnames=("batch_tile",))
def classifier_forward(x, params, *, batch_tile=512):
    """x: (N, 3072) float32. params: PyTorch-layout (in,out) weights / (1,out) biases."""
    n, f = x.shape
    assert f == N_FEATURES
    assert batch_tile % 8 == 0, "batch_tile must be a multiple of 8 (128+ recommended)"

    w1, w2, w3, b = prepare_params(params)

    # Pad the batch to a tile multiple (real batches won't be multiples of 512).
    n_tiles = pl.cdiv(n, batch_tile)
    n_pad = n_tiles * batch_tile
    x_p = jnp.pad(x, ((0, n_pad - n), (0, 0))).astype(jnp.bfloat16)

    full = lambda shape: pl.BlockSpec(shape, lambda i: (0, 0))  # resident weights

    out_padded = pl.pallas_call(
        mlp_kernel,
        out_shape=jax.ShapeDtypeStruct((n_pad, C_PAD), jnp.float32),
        grid_spec=pltpu.PrefetchScalarGridSpec(
            num_scalar_prefetch=0,
            grid=(n_tiles,),
            in_specs=[
                pl.BlockSpec((batch_tile, f), lambda i: (i, 0)),  # x tile (streamed)
                full((f, H_PAD)),                                 # w1
                full((H_PAD, H_PAD)),                             # w2
                full((H_PAD, C_PAD)),                             # w3
                full((8, H_PAD)),                                 # folded biases
            ],
            out_specs=pl.BlockSpec((batch_tile, C_PAD), lambda i: (i, 0)),
        ),
        compiler_params=pltpu.CompilerParams(
            dimension_semantics=("parallel",),      # shard batch tiles across TCs
            vmem_limit_bytes=48 * 1024 * 1024,      # > 32 MiB default, < 64 MiB v7x VMEM
        ),
    )(x_p, w1, w2, w3, b)

    return out_padded[:n, :N_CLASSES]


def init_params(key):
    """Deterministic init mimicking nn.Linear's uniform(-1/sqrt(fan_in), 1/sqrt(fan_in))."""
    ks = jax.random.split(key, 6)

    def linear(kw, kb, fan_in, fan_out):
        bound = 1.0 / jnp.sqrt(fan_in)
        w = jax.random.uniform(kw, (fan_in, fan_out), jnp.float32, -bound, bound)
        b = jax.random.uniform(kb, (1, fan_out), jnp.float32, -bound, bound)
        return w, b

    w1, b1 = linear(ks[0], ks[1], N_FEATURES, H)
    w2, b2 = linear(ks[2], ks[3], H, H)
    w3, b3 = linear(ks[4], ks[5], H, N_CLASSES)
    return {"w1": w1, "b1": b1, "w2": w2, "b2": b2, "w3": w3, "b3": b3}


def reference_forward(x, params, *, round_to_bf16=False):
    def cast(a):
        return a.astype(jnp.bfloat16).astype(jnp.float32) if round_to_bf16 else a

    h1 = jnp.maximum(jnp.dot(cast(x), cast(params["w1"])) + params["b1"], 0.0)
    h2 = jnp.maximum(jnp.dot(cast(h1), cast(params["w2"])) + params["b2"], 0.0)
    return jnp.dot(cast(h2), cast(params["w3"])) + params["b3"]


if __name__ == "__main__":
    key = jax.random.PRNGKey(0)
    kx, kp = jax.random.split(key)

    # Small demo shapes: n_features is fixed at 3072 by the module; batch is
    # deliberately NOT a multiple of the tile to exercise the padding path.
    batch = 300
    x = jax.random.normal(kx, (batch, N_FEATURES), jnp.float32)
    params = init_params(kp)

    # Small tile for the small demo batch (3 grid steps); production default is 512.
    out = classifier_forward(x, params, batch_tile=128)
    out = jax.block_until_ready(out)
    assert out.shape == (batch, N_CLASSES)

    # Compare against a reference using the same bf16-rounded operands ...
    ref_bf16 = reference_forward(x, params, round_to_bf16=True)
    assert jnp.allclose(out, ref_bf16, atol=1e-2, rtol=1e-2), float(
        jnp.max(jnp.abs(out - ref_bf16)))
    # ... and sanity-check against the full-f32 reference.
    ref_f32 = reference_forward(x, params)
    assert float(jnp.max(jnp.abs(out - ref_f32))) < 0.1

    print("KERNEL_OK")
</pallas_src>

<mosaic_0001>
module attributes {stable_mosaic.version = 11 : i64} {
  func.func @mlp_kernel(%arg0: i32, %arg1: memref<128x3072xbf16, #tpu.memory_space<vmem>>, %arg2: memref<3072x128xbf16, #tpu.memory_space<vmem>>, %arg3: memref<128x128xbf16, #tpu.memory_space<vmem>>, %arg4: memref<128x128xbf16, #tpu.memory_space<vmem>>, %arg5: memref<8x128xf32, #tpu.memory_space<vmem>>, %arg6: memref<128x128xf32, #tpu.memory_space<vmem>>) attributes {dimension_semantics = [#tpu.dimension_semantics<parallel>], iteration_bounds = array<i64: 3>, scalar_prefetch = 0 : i64, scratch_operands = 0 : i64, tpu.core_type = #tpu.core_type<tc>, window_params = [{transform_indices = @transform_0, window_bounds = array<i64: 128, 3072>}, {pipeline_mode = #tpu.pipeline_mode<synchronous>, transform_indices = @transform_1, window_bounds = array<i64: 3072, 128>}, {pipeline_mode = #tpu.pipeline_mode<synchronous>, transform_indices = @transform_2, window_bounds = array<i64: 128, 128>}, {pipeline_mode = #tpu.pipeline_mode<synchronous>, transform_indices = @transform_3, window_bounds = array<i64: 128, 128>}, {pipeline_mode = #tpu.pipeline_mode<synchronous>, transform_indices = @transform_4, window_bounds = array<i64: 8, 128>}, {transform_indices = @transform_5, window_bounds = array<i64: 128, 128>}]} {
    %c0 = arith.constant 0 : index
    %c0_0 = arith.constant 0 : index
    %0 = vector.load %arg1[%c0, %c0_0] : memref<128x3072xbf16, #tpu.memory_space<vmem>>, vector<128x3072xbf16>
    %c0_1 = arith.constant 0 : index
    %c0_2 = arith.constant 0 : index
    %1 = vector.load %arg5[%c0_1, %c0_2] : memref<8x128xf32, #tpu.memory_space<vmem>>, vector<8x128xf32>
    %2 = vector.extract_strided_slice %1 {offsets = [0, 0], sizes = [1, 128], strides = [1, 1]} : vector<8x128xf32> to vector<1x128xf32>
    %3 = vector.extract_strided_slice %1 {offsets = [1, 0], sizes = [1, 128], strides = [1, 1]} : vector<8x128xf32> to vector<1x128xf32>
    %4 = vector.extract_strided_slice %1 {offsets = [2, 0], sizes = [1, 128], strides = [1, 1]} : vector<8x128xf32> to vector<1x128xf32>
    %c0_3 = arith.constant 0 : index
    %c0_4 = arith.constant 0 : index
    %5 = vector.load %arg2[%c0_3, %c0_4] : memref<3072x128xbf16, #tpu.memory_space<vmem>>, vector<3072x128xbf16>
    %cst = arith.constant dense<0.000000e+00> : vector<128x128xf32>
    %6 = tpu.matmul %0, %5, %cst {dimension_numbers = #tpu.dot_dimension_numbers<[1], [0], [0], [1], [0, 0, 1, 1], [], []>} : vector<128x3072xbf16>, vector<3072x128xbf16>, vector<128x128xf32> -> vector<128x128xf32>
    %7 = vector.broadcast %2 : vector<1x128xf32> to vector<128x128xf32>
    %8 = arith.addf %6, %7 : vector<128x128xf32>
    %cst_5 = arith.constant 0.000000e+00 : f32
    %9 = vector.broadcast %cst_5 : f32 to vector<128x128xf32>
    %10 = arith.maximumf %8, %9 : vector<128x128xf32>
    %11 = arith.truncf %10 : vector<128x128xf32> to vector<128x128xbf16>
    %c0_6 = arith.constant 0 : index
    %c0_7 = arith.constant 0 : index
    %12 = vector.load %arg3[%c0_6, %c0_7] : memref<128x128xbf16, #tpu.memory_space<vmem>>, vector<128x128xbf16>
    %cst_8 = arith.constant dense<0.000000e+00> : vector<128x128xf32>
    %13 = tpu.matmul %11, %12, %cst_8 {dimension_numbers = #tpu.dot_dimension_numbers<[1], [0], [0], [1], [0, 0, 1, 1], [], []>} : vector<128x128xbf16>, vector<128x128xbf16>, vector<128x128xf32> -> vector<128x128xf32>
    %14 = vector.broadcast %3 : vector<1x128xf32> to vector<128x128xf32>
    %15 = arith.addf %13, %14 : vector<128x128xf32>
    %cst_9 = arith.constant 0.000000e+00 : f32
    %16 = vector.broadcast %cst_9 : f32 to vector<128x128xf32>
    %17 = arith.maximumf %15, %16 : vector<128x128xf32>
    %18 = arith.truncf %17 : vector<128x128xf32> to vector<128x128xbf16>
    %c0_10 = arith.constant 0 : index
    %c0_11 = arith.constant 0 : index
    %19 = vector.load %arg4[%c0_10, %c0_11] : memref<128x128xbf16, #tpu.memory_space<vmem>>, vector<128x128xbf16>
    %cst_12 = arith.constant dense<0.000000e+00> : vector<128x128xf32>
    %20 = tpu.matmul %18, %19, %cst_12 {dimension_numbers = #tpu.dot_dimension_numbers<[1], [0], [0], [1], [0, 0, 1, 1], [], []>} : vector<128x128xbf16>, vector<128x128xbf16>, vector<128x128xf32> -> vector<128x128xf32>
    %21 = vector.broadcast %4 : vector<1x128xf32> to vector<128x128xf32>
    %22 = arith.addf %20, %21 : vector<128x128xf32>
    %c0_13 = arith.constant 0 : index
    %c0_14 = arith.constant 0 : index
    %23 = vector.load %arg6[%c0_13, %c0_14] : memref<128x128xf32, #tpu.memory_space<vmem>>, vector<128x128xf32>
    tpu.vector_store %arg6[%c0_13, %c0_14], %22 {strides = array<i32>} : memref<128x128xf32, #tpu.memory_space<vmem>>, vector<128x128xf32>,
    return
  }
  func.func @transform_0(%arg0: i32) -> (i32, i32) {
    %c0_i32 = arith.constant 0 : i32
    %c0_i32_0 = arith.constant 0 : i32
    return %arg0, %c0_i32 : i32, i32
  }
  func.func @transform_1(%arg0: i32) -> (i32, i32) {
    %c0_i32 = arith.constant 0 : i32
    %c0_i32_0 = arith.constant 0 : i32
    %c0_i32_1 = arith.constant 0 : i32
    return %c0_i32, %c0_i32_0 : i32, i32
  }
  func.func @transform_2(%arg0: i32) -> (i32, i32) {
    %c0_i32 = arith.constant 0 : i32
    %c0_i32_0 = arith.constant 0 : i32
    %c0_i32_1 = arith.constant 0 : i32
    return %c0_i32, %c0_i32_0 : i32, i32
  }
  func.func @transform_3(%arg0: i32) -> (i32, i32) {
    %c0_i32 = arith.constant 0 : i32
    %c0_i32_0 = arith.constant 0 : i32
    %c0_i32_1 = arith.constant 0 : i32
    return %c0_i32, %c0_i32_0 : i32, i32
  }
  func.func @transform_4(%arg0: i32) -> (i32, i32) {
    %c0_i32 = arith.constant 0 : i32
    %c0_i32_0 = arith.constant 0 : i32
    %c0_i32_1 = arith.constant 0 : i32
    return %c0_i32, %c0_i32_0 : i32, i32
  }
  func.func @transform_5(%arg0: i32) -> (i32, i32) {
    %c0_i32 = arith.constant 0 : i32
    %c0_i32_0 = arith.constant 0 : i32
    return %arg0, %c0_i32 : i32, i32
  }
}

</mosaic_0001>

<llo_original>
// kernel: classifier_forward.1
$region0: #{classifier_forward.1}
  #allocation0 [shape = 'u32[]', space=smem, size = 0x4, offset = 0x4, fixed_abs, tag = 'smem constant byte address 0x4 - core index']
  #allocation1 [shape = 'u32[72,128]{1,0:T(1,128)}', space=vmem, size = 0x9000, scoped, tag = 'internal scratch']
  %s0 = inlined_call_operand.vmem [shape: bf16[384,3072], index: 0, kind: input, shape index: {}]
  %s1 = inlined_call_operand.vmem [shape: bf16[3072,128], index: 1, kind: input, shape index: {}]
  %s2 = inlined_call_operand.vmem [shape: bf16[128,128], index: 2, kind: input, shape index: {}]
  %s3 = inlined_call_operand.vmem [shape: bf16[128,128], index: 3, kind: input, shape index: {}]
  %s4 = inlined_call_operand.vmem [shape: f32[8,128], index: 4, kind: input, shape index: {}]
  %s5 = inlined_call_operand.vmem [shape: f32[384,128], index: 5, kind: output, shape index: {}]
  %s6 = sld [smem:[#allocation0]]
  $region53: #{classifier_forward.1} parent=0
    _
  %s8 = ssub.s32 1, %s6
  %s9 = scalar_select 0, %s8, %s6
  loop: start=0, step=1, limit=5
  $region2: #{classifier_forward.1} parent=0 // loop_pre_header
    _
  $region3: #{classifier_forward.1} parent=0 // loop_header
    %s11 = sphi 0, %s15
    %p12 = scmp.ge.s32.totalorder %s11, 5
    %s21 = sphi 0, %s23
    %s24 = sphi 0, %s21
    %s25 = sphi 0, %s24
    %s41 = sphi 0, %s25
    %s45 = sphi 0, %s45
    %s47 = sphi 0, %s45
    %s48 = sphi 0, %s47
    %s62 = sphi 0, %s48
    %s66 = sphi 0, %s66
    %s68 = sphi 0, %s66
    %s69 = sphi 0, %s68
    %s83 = sphi 0, %s69
    %s87 = sphi 0, %s87
    %s89 = sphi 0, %s87
    %s90 = sphi 0, %s89
    %s104 = sphi 0, %s90
    %s108 = sphi 0, %s108
    %s110 = sphi 0, %s108
    %s111 = sphi 0, %s110
    %s125 = sphi 0, %s111
    %s131 = sphi 0, %s133
    %s134 = sphi 0, %s131
    %s135 = sphi 0, %s134
    %s151 = sphi 0, %s135
  $region4: #{classifier_forward.1} parent=0 // loop_header_branch
    %14 = sbr.rel (%p12) target = $region8
  $region5: #{classifier_forward.1} parent=0 // loop_body
    %s16 = ssub.s32 %s11, 1
    %s17 = ssub.s32 %s11, 2
    %s18 = sadd.s32 %s11, 1
    %s19 = ssub.s32 %s11, %s18
    %p20 = scmp.eq.s32.totalorder %s19, 0
    %s22 = sadd.s32 %s21, 1
    %s23 = scalar_select %p20, %s21, %s22
    %p26 = pneg %p20
    %p27 = scmp.eq.s32.totalorder %s11, 2
    %p28 = por %p26, %p27
    %p29 = scmp.ne.s32.totalorder %s21, %s24
    %p30 = scmp.eq.s32.totalorder %s11, 0
    %p31 = por %p29, %p30
    %p32 = scmp.ne.s32.totalorder %s21, %s24
    %p33 = scmp.eq.s32.totalorder %s16, 2
    %p34 = por %p32, %p33
    %p35 = scmp.ne.s32.totalorder %s24, %s25
    %p36 = scmp.eq.s32.totalorder %s16, 0
    %p37 = por %p35, %p36
    %p38 = scmp.ne.s32.totalorder %s24, %s25
    %p39 = scmp.eq.s32.totalorder %s17, 2
    %p40 = por %p38, %p39
    %p42 = scmp.ne.s32.totalorder %s25, %s41
    %p43 = scmp.eq.s32.totalorder %s17, 0
    %p44 = por %p42, %p43
    %s46 = sadd.s32 %s45, 1
    %p49 = scmp.eq.s32.totalorder %s11, 2
    %p50 = scmp.ne.s32.totalorder %s45, %s47
    %p51 = scmp.eq.s32.totalorder %s11, 0
    %p52 = por %p50, %p51
    %p53 = scmp.ne.s32.totalorder %s45, %s47
    %p54 = scmp.eq.s32.totalorder %s16, 2
    %p55 = por %p53, %p54
    %p56 = scmp.ne.s32.totalorder %s47, %s48
    %p57 = scmp.eq.s32.totalorder %s16, 0
    %p58 = por %p56, %p57
    %p59 = scmp.ne.s32.totalorder %s47, %s48
    %p60 = scmp.eq.s32.totalorder %s17, 2
    %p61 = por %p59, %p60
    %p63 = scmp.ne.s32.totalorder %s48, %s62
    %p64 = scmp.eq.s32.totalorder %s17, 0
    %p65 = por %p63, %p64
    %s67 = sadd.s32 %s66, 1
    %p70 = scmp.eq.s32.totalorder %s11, 2
    %p71 = scmp.ne.s32.totalorder %s66, %s68
    %p72 = scmp.eq.s32.totalorder %s11, 0
    %p73 = por %p71, %p72
    %p74 = scmp.ne.s32.totalorder %s66, %s68
    %p75 = scmp.eq.s32.totalorder %s16, 2
    %p76 = por %p74, %p75
    %p77 = scmp.ne.s32.totalorder %s68, %s69
    %p78 = scmp.eq.s32.totalorder %s16, 0
    %p79 = por %p77, %p78
    %p80 = scmp.ne.s32.totalorder %s68, %s69
    %p81 = scmp.eq.s32.totalorder %s17, 2
    %p82 = por %p80, %p81
    %p84 = scmp.ne.s32.totalorder %s69, %s83
    %p85 = scmp.eq.s32.totalorder %s17, 0
    %p86 = por %p84, %p85
    %s88 = sadd.s32 %s87, 1
    %p91 = scmp.eq.s32.totalorder %s11, 2
    %p92 = scmp.ne.s32.totalorder %s87, %s89
    %p93 = scmp.eq.s32.totalorder %s11, 0
    %p94 = por %p92, %p93
    %p95 = scmp.ne.s32.totalorder %s87, %s89
    %p96 = scmp.eq.s32.totalorder %s16, 2
    %p97 = por %p95, %p96
    %p98 = scmp.ne.s32.totalorder %s89, %s90
    %p99 = scmp.eq.s32.totalorder %s16, 0
    %p100 = por %p98, %p99
    %p101 = scmp.ne.s32.totalorder %s89, %s90
    %p102 = scmp.eq.s32.totalorder %s17, 2
    %p103 = por %p101, %p102
    %p105 = scmp.ne.s32.totalorder %s90, %s104
    %p106 = scmp.eq.s32.totalorder %s17, 0
    %p107 = por %p105, %p106
    %s109 = sadd.s32 %s108, 1
    %p112 = scmp.eq.s32.totalorder %s11, 2
    %p113 = scmp.ne.s32.totalorder %s108, %s110
    %p114 = scmp.eq.s32.totalorder %s11, 0
    %p115 = por %p113, %p114
    %p116 = scmp.ne.s32.totalorder %s108, %s110
    %p117 = scmp.eq.s32.totalorder %s16, 2
    %p118 = por %p116, %p117
    %p119 = scmp.ne.s32.totalorder %s110, %s111
    %p120 = scmp.eq.s32.totalorder %s16, 0
    %p121 = por %p119, %p120
    %p122 = scmp.ne.s32.totalorder %s110, %s111
    %p123 = scmp.eq.s32.totalorder %s17, 2
    %p124 = por %p122, %p123
    %p126 = scmp.ne.s32.totalorder %s111, %s125
    %p127 = scmp.eq.s32.totalorder %s17, 0
    %p128 = por %p126, %p127
    %s129 = ssub.s32 %s11, %s18
    %p130 = scmp.eq.s32.totalorder %s129, 0
    %s132 = sadd.s32 %s131, 1
    %s133 = scalar_select %p130, %s131, %s132
    %p136 = pneg %p130
    %p137 = scmp.eq.s32.totalorder %s11, 2
    %p138 = por %p136, %p137
    %p139 = scmp.ne.s32.totalorder %s131, %s134
    %p140 = scmp.eq.s32.totalorder %s11, 0
    %p141 = por %p139, %p140
    %p142 = scmp.ne.s32.totalorder %s131, %s134
    %p143 = scmp.eq.s32.totalorder %s16, 2
    %p144 = por %p142, %p143
    %p145 = scmp.ne.s32.totalorder %s134, %s135
    %p146 = scmp.eq.s32.totalorder %s16, 0
    %p147 = por %p145, %p146
    %p148 = scmp.ne.s32.totalorder %s134, %s135
    %p149 = scmp.eq.s32.totalorder %s17, 2
    %p150 = por %p148, %p149
    %p152 = scmp.ne.s32.totalorder %s135, %s151
    %p153 = scmp.eq.s32.totalorder %s17, 0
    %p154 = por %p152, %p153
    %p155 = scmp.le.s32.totalorder 1, %s11
    %p156 = scmp.lt.s32.totalorder %s11, 4
    %p157 = pnand %p155, %p156
    %p158 = pneg %p157
    // Predicated region
    $region9: #{classifier_forward.1} parent=5 // pred_check
      _
    $region10: #{classifier_forward.1} parent=5 // pred_check_branch
      %160 = sbr.rel (%p157) target = $region12
    $region11: #{classifier_forward.1} parent=5 // pred_region
      %s161 = ssub.s32 %s11, 1
      // Predicated region
      $region13: #{classifier_forward.1} parent=11 // pred_check
        %p162 = pneg %p58
      $region14: #{classifier_forward.1} parent=11 // pred_check_branch
        %164 = sbr.rel (%p162) target = $region16
      $region15: #{classifier_forward.1} parent=11 // pred_region
        _
      $region16: #{classifier_forward.1} parent=11 // pred_fallthru
        _
      // Predicated region
      $region17: #{classifier_forward.1} parent=11 // pred_check
        %p165 = pneg %p79
      $region18: #{classifier_forward.1} parent=11 // pred_check_branch
        %167 = sbr.rel (%p165) target = $region20
      $region19: #{classifier_forward.1} parent=11 // pred_region
        _
      $region20: #{classifier_forward.1} parent=11 // pred_fallthru
        _
      // Predicated region
      $region21: #{classifier_forward.1} parent=11 // pred_check
        %p168 = pneg %p100
      $region22: #{classifier_forward.1} parent=11 // pred_check_branch
        %170 = sbr.rel (%p168) target = $region24
      $region23: #{classifier_forward.1} parent=11 // pred_region
        _
      $region24: #{classifier_forward.1} parent=11 // pred_fallthru
        _
      // Predicated region
      $region25: #{classifier_forward.1} parent=11 // pred_check
        %p171 = pneg %p121
      $region26: #{classifier_forward.1} parent=11 // pred_check_branch
        %173 = sbr.rel (%p171) target = $region28
      $region27: #{classifier_forward.1} parent=11 // pred_region
        _
      $region28: #{classifier_forward.1} parent=11 // pred_fallthru
        _
    $region12: #{classifier_forward.1} parent=5 // pred_fallthru
      _
    %p174 = scmp.lt.s32.totalorder %s11, 3
    // Predicated region
    $region29: #{classifier_forward.1} parent=5 // pred_check
      %p175 = pneg %p174
    $region30: #{classifier_forward.1} parent=5 // pred_check_branch
      %177 = sbr.rel (%p175) target = $region32
    $region31: #{classifier_forward.1} parent=5 // pred_region
      // Predicated region
      $region33: #{classifier_forward.1} parent=31 // pred_check
        %p178 = pneg %p31
      $region34: #{classifier_forward.1} parent=31 // pred_check_branch
        %180 = sbr.rel (%p178) target = $region36
      $region35: #{classifier_forward.1} parent=31 // pred_region
        %s181 = smul.u32 16, %s11
        %p182 = scmp.lt.s32.totalorder %s181, 47
        %s183 = scalar_select %p182, %s181, 47
        %s184 = smul.addr %s183, 24
        %s185 = smul.addr %s184, 4
        %s186 = scalar_lea.vmem %s0, %s185
        %s187 = smul.u32 16, %s11
      $region36: #{classifier_forward.1} parent=31 // pred_fallthru
        _
    $region32: #{classifier_forward.1} parent=5 // pred_fallthru
      _
    %p188 = scmp.le.s32.totalorder 1, %s11
    %p189 = scmp.lt.s32.totalorder %s11, 4
    %p190 = pnand %p188, %p189
    %p191 = pneg %p190
    // Predicated region
    $region37: #{classifier_forward.1} parent=5 // pred_check
      _
    $region38: #{classifier_forward.1} parent=5 // pred_check_branch
      %193 = sbr.rel (%p190) target = $region40
    $region39: #{classifier_forward.1} parent=5 // pred_region
      %s194 = ssub.s32 %s11, 1
      %s195 = smul.u32 16, %s16
      %p196 = scmp.lt.s32.totalorder %s195, 47
      %s197 = scalar_select %p196, %s195, 47
      %s198 = smul.addr %s197, 24
      %s199 = smul.addr %s198, 4
      %s200 = scalar_lea.vmem %s0, %s199
      %p201 = pneg %p37
      %p202 = pneg %p34
      %p203 = pneg %p58
      %p204 = pneg %p55
      %p205 = pneg %p79
      %p206 = pneg %p76
      %p207 = pneg %p100
      %p208 = pneg %p97
      %p209 = pneg %p121
      %p210 = pneg %p118
      %p211 = pneg %p147
      %p212 = pneg %p144
      %s213 = smul.u32 16, %s16
      %p214 = scmp.lt.s32.totalorder %s213, 47
      %s215 = scalar_select %p214, %s213, 47
      %s216 = smul.addr %s215, 8
      %s217 = scalar_lea.vmem %s5, %s216
      %s218 = smul.u32 16, %s16
      %p219 = scmp.lt.s32.totalorder %s218, 47
      %s220 = scalar_select %p219, %s218, 47
      %s221 = smul.addr %s220, 24
      %s222 = smul.addr %s221, 4
      %s223 = scalar_lea.vmem %s0, %s222
      %s224 = smul.u32 16, %s16
      %s225 = smul.u32 16, %s16
      %p226 = scmp.lt.s32.totalorder %s225, 47
      %s227 = scalar_select %p226, %s225, 47
      %s228 = smul.addr %s227, 8
      %s229 = scalar_lea.vmem %s5, %s228
      %s230 = smul.u32 16, %s16
      %v231 = vld [vmem:[%s223] sm:$0xff]
      %v232 = vld [vmem:[%s223 + $0x8] sm:$0xff]
      %v233 = vld [vmem:[%s223 + $0x10] sm:$0xff]
      %v234 = vld [vmem:[%s223 + $0x18] sm:$0xff]
      %v235 = vld [vmem:[%s223 + $0x20] sm:$0xff]
      %v236 = vld [vmem:[%s223 + $0x28] sm:$0xff]
      %v237 = vld [vmem:[%s223 + $0x30] sm:$0xff]
      %v238 = vld [vmem:[%s223 + $0x38] sm:$0xff]
      %v239 = vld [vmem:[%s223 + $0x40] sm:$0xff]
      %v240 = vld [vmem:[%s223 + $0x48] sm:$0xff]
      %v241 = vld [vmem:[%s223 + $0x50] sm:$0xff]
      %v242 = vld [vmem:[%s223 + $0x58] sm:$0xff]
      %v243 = vld [vmem:[%s223 + $0x60] sm:$0xff]
      %v244 = vld [vmem:[%s223 + $0x68] sm:$0xff]
      %v245 = vld [vmem:[%s223 + $0x70] sm:$0xff]
      %v246 = vld [vmem:[%s223 + $0x78] sm:$0xff]
      %v247 = vld [vmem:[%s223 + $0x80] sm:$0xff]
      %v248 = vld [vmem:[%s223 + $0x88] sm:$0xff]
      %v249 = vld [vmem:[%s223 + $0x90] sm:$0xff]
      %v250 = vld [vmem:[%s223 + $0x98] sm:$0xff]
      %v251 = vld [vmem:[%s223 + $0xa0] sm:$0xff]
      %v252 = vld [vmem:[%s223 + $0xa8] sm:$0xff]
      %v253 = vld [vmem:[%s223 + $0xb0] sm:$0xff]
      %v254 = vld [vmem:[%s223 + $0xb8] sm:$0xff]
      %v255 = vld [vmem:[%s223 + $0xc0] sm:$0xff]
      %v256 = vld [vmem:[%s223 + $0xc8] sm:$0xff]
      %v257 = vld [vmem:[%s223 + $0xd0] sm:$0xff]
      %v258 = vld [vmem:[%s223 + $0xd8] sm:$0xff]
      %v259 = vld [vmem:[%s223 + $0xe0] sm:$0xff]
      %v260 = vld [vmem:[%s223 + $0xe8] sm:$0xff]
      %v261 = vld [vmem:[%s223 + $0xf0] sm:$0xff]
      %v262 = vld [vmem:[%s223 + $0xf8] sm:$0xff]
      %v263 = vld [vmem:[%s223 + $0x100] sm:$0xff]
      %v264 = vld [vmem:[%s223 + $0x108] sm:$0xff]
      %v265 = vld [vmem:[%s223 + $0x110] sm:$0xff]
      %v266 = vld [vmem:[%s223 + $0x118] sm:$0xff]
      %v267 = vld [vmem:[%s223 + $0x120] sm:$0xff]
      %v268 = vld [vmem:[%s223 + $0x128] sm:$0xff]
      %v269 = vld [vmem:[%s223 + $0x130] sm:$0xff]
      %v270 = vld [vmem:[%s223 + $0x138] sm:$0xff]
      %v271 = vld [vmem:[%s223 + $0x140] sm:$0xff]
      %v272 = vld [vmem:[%s223 + $0x148] sm:$0xff]
      %v273 = vld [vmem:[%s223 + $0x150] sm:$0xff]
      %v274 = vld [vmem:[%s223 + $0x158] sm:$0xff]
      %v275 = vld [vmem:[%s223 + $0x160] sm:$0xff]
      %v276 = vld [vmem:[%s223 + $0x168] sm:$0xff]
      %v277 = vld [vmem:[%s223 + $0x170] sm:$0xff]
      %v278 = vld [vmem:[%s223 + $0x178] sm:$0xff]
      %v279 = vld [vmem:[%s223 + $0x180] sm:$0xff]
      %v280 = vld [vmem:[%s223 + $0x188] sm:$0xff]
      %v281 = vld [vmem:[%s223 + $0x190] sm:$0xff]
      %v282 = vld [vmem:[%s223 + $0x198] sm:$0xff]
      %v283 = vld [vmem:[%s223 + $0x1a0] sm:$0xff]
      %v284 = vld [vmem:[%s223 + $0x1a8] sm:$0xff]
      %v285 = vld [vmem:[%s223 + $0x1b0] sm:$0xff]
      %v286 = vld [vmem:[%s223 + $0x1b8] sm:$0xff]
      %v287 = vld [vmem:[%s223 + $0x1c0] sm:$0xff]
      %v288 = vld [vmem:[%s223 + $0x1c8] sm:$0xff]
      %v289 = vld [vmem:[%s223 + $0x1d0] sm:$0xff]
      %v290 = vld [vmem:[%s223 + $0x1d8] sm:$0xff]
      %v291 = vld [vmem:[%s223 + $0x1e0] sm:$0xff]
      %v292 = vld [vmem:[%s223 + $0x1e8] sm:$0xff]
      %v293 = vld [vmem:[%s223 + $0x1f0] sm:$0xff]
      %v294 = vld [vmem:[%s223 + $0x1f8] sm:$0xff]
      %v295 = vld [vmem:[%s223 + $0x200] sm:$0xff]
      %v296 = vld [vmem:[%s223 + $0x208] sm:$0xff]
      %v297 = vld [vmem:[%s223 + $0x210] sm:$0xff]
      %v298 = vld [vmem:[%s223 + $0x218] sm:$0xff]
      %v299 = vld [vmem:[%s223 + $0x220] sm:$0xff]
      %v300 = vld [vmem:[%s223 + $0x228] sm:$0xff]
      %v301 = vld [vmem:[%s223 + $0x230] sm:$0xff]
      %v302 = vld [vmem:[%s223 + $0x238] sm:$0xff]
      %v303 = vld [vmem:[%s223 + $0x240] sm:$0xff]
      %v304 = vld [vmem:[%s223 + $0x248] sm:$0xff]
      %v305 = vld [vmem:[%s223 + $0x250] sm:$0xff]
      %v306 = vld [vmem:[%s223 + $0x258] sm:$0xff]
      %v307 = vld [vmem:[%s223 + $0x260] sm:$0xff]
      %v308 = vld [vmem:[%s223 + $0x268] sm:$0xff]
      %v309 = vld [vmem:[%s223 + $0x270] sm:$0xff]
      %v310 = vld [vmem:[%s223 + $0x278] sm:$0xff]
      %v311 = vld [vmem:[%s223 + $0x280] sm:$0xff]
      %v312 = vld [vmem:[%s223 + $0x288] sm:$0xff]
      %v313 = vld [vmem:[%s223 + $0x290] sm:$0xff]
      %v314 = vld [vmem:[%s223 + $0x298] sm:$0xff]
      %v315 = vld [vmem:[%s223 + $0x2a0] sm:$0xff]
      %v316 = vld [vmem:[%s223 + $0x2a8] sm:$0xff]
      %v317 = vld [vmem:[%s223 + $0x2b0] sm:$0xff]
      %v318 = vld [vmem:[%s223 + $0x2b8] sm:$0xff]
      %v319 = vld [vmem:[%s223 + $0x2c0] sm:$0xff]
      %v320 = vld [vmem:[%s223 + $0x2c8] sm:$0xff]
      %v321 = vld [vmem:[%s223 + $0x2d0] sm:$0xff]
      %v322 = vld [vmem:[%s223 + $0x2d8] sm:$0xff]
      %v323 = vld [vmem:[%s223 + $0x2e0] sm:$0xff]
      %v324 = vld [vmem:[%s223 + $0x2e8] sm:$0xff]
      %v325 = vld [vmem:[%s223 + $0x2f0] sm:$0xff]
      %v326 = vld [vmem:[%s223 + $0x2f8] sm:$0xff]
      %v327 = vld [vmem:[%s223 + $0x300] sm:$0xff]
      %v328 = vld [vmem:[%s223 + $0x308] sm:$0xff]
      %v329 = vld [vmem:[%s223 + $0x310] sm:$0xff]
      %v330 = vld [vmem:[%s223 + $0x318] sm:$0xff]
      %v331 = vld [vmem:[%s223 + $0x320] sm:$0xff]
      %v332 = vld [vmem:[%s223 + $0x328] sm:$0xff]
      %v333 = vld [vmem:[%s223 + $0x330] sm:$0xff]
      %v334 = vld [vmem:[%s223 + $0x338] sm:$0xff]
      %v335 = vld [vmem:[%s223 + $0x340] sm:$0xff]
      %v336 = vld [vmem:[%s223 + $0x348] sm:$0xff]
      %v337 = vld [vmem:[%s223 + $0x350] sm:$0xff]
      %v338 = vld [vmem:[%s223 + $0x358] sm:$0xff]
      %v339 = vld [vmem:[%s223 + $0x360] sm:$0xff]
      %v340 = vld [vmem:[%s223 + $0x368] sm:$0xff]
      %v341 = vld [vmem:[%s223 + $0x370] sm:$0xff]
      %v342 = vld [vmem:[%s223 + $0x378] sm:$0xff]
      %v343 = vld [vmem:[%s223 + $0x380] sm:$0xff]
      %v344 = vld [vmem:[%s223 + $0x388] sm:$0xff]
      %v345 = vld [vmem:[%s223 + $0x390] sm:$0xff]
      %v346 = vld [vmem:[%s223 + $0x398] sm:$0xff]
      %v347 = vld [vmem:[%s223 + $0x3a0] sm:$0xff]
      %v348 = vld [vmem:[%s223 + $0x3a8] sm:$0xff]
      %v349 = vld [vmem:[%s223 + $0x3b0] sm:$0xff]
      %v350 = vld [vmem:[%s223 + $0x3b8] sm:$0xff]
      %v351 = vld [vmem:[%s223 + $0x3c0] sm:$0xff]
      %v352 = vld [vmem:[%s223 + $0x3c8] sm:$0xff]
      %v353 = vld [vmem:[%s223 + $0x3d0] sm:$0xff]
      %v354 = vld [vmem:[%s223 + $0x3d8] sm:$0xff]
      %v355 = vld [vmem:[%s223 + $0x3e0] sm:$0xff]
      %v356 = vld [vmem:[%s223 + $0x3e8] sm:$0xff]
      %v357 = vld [vmem:[%s223 + $0x3f0] sm:$0xff]
      %v358 = vld [vmem:[%s223 + $0x3f8] sm:$0xff]
      %v359 = vld [vmem:[%s223 + $0x400] sm:$0xff]
      %v360 = vld [vmem:[%s223 + $0x408] sm:$0xff]
      %v361 = vld [vmem:[%s223 + $0x410] sm:$0xff]
      %v362 = vld [vmem:[%s223 + $0x418] sm:$0xff]
      %v363 = vld [vmem:[%s223 + $0x420] sm:$0xff]
      %v364 = vld [vmem:[%s223 + $0x428] sm:$0xff]
      %v365 = vld [vmem:[%s223 + $0x430] sm:$0xff]
      %v366 = vld [vmem:[%s223 + $0x438] sm:$0xff]
      %v367 = vld [vmem:[%s223 + $0x440] sm:$0xff]
      %v368 = vld [vmem:[%s223 + $0x448] sm:$0xff]
      %v369 = vld [vmem:[%s223 + $0x450] sm:$0xff]
      %v370 = vld [vmem:[%s223 + $0x458] sm:$0xff]
      %v371 = vld [vmem:[%s223 + $0x460] sm:$0xff]
      %v372 = vld [vmem:[%s223 + $0x468] sm:$0xff]
      %v373 = vld [vmem:[%s223 + $0x470] sm:$0xff]
      %v374 = vld [vmem:[%s223 + $0x478] sm:$0xff]
      %v375 = vld [vmem:[%s223 + $0x480] sm:$0xff]
      %v376 = vld [vmem:[%s223 + $0x488] sm:$0xff]
      %v377 = vld [vmem:[%s223 + $0x490] sm:$0xff]
      %v378 = vld [vmem:[%s223 + $0x498] sm:$0xff]
      %v379 = vld [vmem:[%s223 + $0x4a0] sm:$0xff]
      %v380 = vld [vmem:[%s223 + $0x4a8] sm:$0xff]
      %v381 = vld [vmem:[%s223 + $0x4b0] sm:$0xff]
      %v382 = vld [vmem:[%s223 + $0x4b8] sm:$0xff]
      %v383 = vld [vmem:[%s223 + $0x4c0] sm:$0xff]
      %v384 = vld [vmem:[%s223 + $0x4c8] sm:$0xff]
      %v385 = vld [vmem:[%s223 + $0x4d0] sm:$0xff]
      %v386 = vld [vmem:[%s223 + $0x4d8] sm:$0xff]
      %v387 = vld [vmem:[%s223 + $0x4e0] sm:$0xff]
      %v388 = vld [vmem:[%s223 + $0x4e8] sm:$0xff]
      %v389 = vld [vmem:[%s223 + $0x4f0] sm:$0xff]
      %v390 = vld [vmem:[%s223 + $0x4f8] sm:$0xff]
      %v391 = vld [vmem:[%s223 + $0x500] sm:$0xff]
      %v392 = vld [vmem:[%s223 + $0x508] sm:$0xff]
      %v393 = vld [vmem:[%s223 + $0x510] sm:$0xff]
      %v394 = vld [vmem:[%s223 + $0x518] sm:$0xff]
      %v395 = vld [vmem:[%s223 + $0x520] sm:$0xff]
      %v396 = vld [vmem:[%s223 + $0x528] sm:$0xff]
      %v397 = vld [vmem:[%s223 + $0x530] sm:$0xff]
      %v398 = vld [vmem:[%s223 + $0x538] sm:$0xff]
      %v399 = vld [vmem:[%s223 + $0x540] sm:$0xff]
      %v400 = vld [vmem:[%s223 + $0x548] sm:$0xff]
      %v401 = vld [vmem:[%s223 + $0x550] sm:$0xff]
      %v402 = vld [vmem:[%s223 + $0x558] sm:$0xff]
      %v403 = vld [vmem:[%s223 + $0x560] sm:$0xff]
      %v404 = vld [vmem:[%s223 + $0x568] sm:$0xff]
      %v405 = vld [vmem:[%s223 + $0x570] sm:$0xff]
      %v406 = vld [vmem:[%s223 + $0x578] sm:$0xff]
      %v407 = vld [vmem:[%s223 + $0x580] sm:$0xff]
      %v408 = vld [vmem:[%s223 + $0x588] sm:$0xff]
      %v409 = vld [vmem:[%s223 + $0x590] sm:$0xff]
      %v410 = vld [vmem:[%s223 + $0x598] sm:$0xff]
      %v411 = vld [vmem:[%s223 + $0x5a0] sm:$0xff]
      %v412 = vld [vmem:[%s223 + $0x5a8] sm:$0xff]
      %v413 = vld [vmem:[%s223 + $0x5b0] sm:$0xff]
      %v414 = vld [vmem:[%s223 + $0x5b8] sm:$0xff]
      %v415 = vld [vmem:[%s223 + $0x5c0] sm:$0xff]
      %v416 = vld [vmem:[%s223 + $0x5c8] sm:$0xff]
      %v417 = vld [vmem:[%s223 + $0x5d0] sm:$0xff]
      %v418 = vld [vmem:[%s223 + $0x5d8] sm:$0xff]
      %v419 = vld [vmem:[%s223 + $0x5e0] sm:$0xff]
      %v420 = vld [vmem:[%s223 + $0x5e8] sm:$0xff]
      %v421 = vld [vmem:[%s223 + $0x5f0] sm:$0xff]
      %v422 = vld [vmem:[%s223 + $0x5f8] sm:$0xff]
      %v423 = vld [vmem:[%s4] sm:$0xff]
      %v424 = vld [vmem:[%s1] sm:$0xf]
      %v425 = vld [vmem:[%s1 + $0x4] sm:$0xf]
      %v426 = vld [vmem:[%s1 + $0x8] sm:$0xf]
      %v427 = vld [vmem:[%s1 + $0xc] sm:$0xf]
      %v428 = vld [vmem:[%s1 + $0x10] sm:$0xf]
      %v429 = vld [vmem:[%s1 + $0x14] sm:$0xf]
      %v430 = vld [vmem:[%s1 + $0x18] sm:$0xf]
      %v431 = vld [vmem:[%s1 + $0x1c] sm:$0xf]
      %v432 = vld [vmem:[%s1 + $0x20] sm:$0xf]
      %v433 = vld [vmem:[%s1 + $0x24] sm:$0xf]
      %v434 = vld [vmem:[%s1 + $0x28] sm:$0xf]
      %v435 = vld [vmem:[%s1 + $0x2c] sm:$0xf]
      %v436 = vld [vmem:[%s1 + $0x30] sm:$0xf]
      %v437 = vld [vmem:[%s1 + $0x34] sm:$0xf]
      %v438 = vld [vmem:[%s1 + $0x38] sm:$0xf]
      %v439 = vld [vmem:[%s1 + $0x3c] sm:$0xf]
      %v440 = vld [vmem:[%s1 + $0x40] sm:$0xf]
      %v441 = vld [vmem:[%s1 + $0x44] sm:$0xf]
      %v442 = vld [vmem:[%s1 + $0x48] sm:$0xf]
      %v443 = vld [vmem:[%s1 + $0x4c] sm:$0xf]
      %v444 = vld [vmem:[%s1 + $0x50] sm:$0xf]
      %v445 = vld [vmem:[%s1 + $0x54] sm:$0xf]
      %v446 = vld [vmem:[%s1 + $0x58] sm:$0xf]
      %v447 = vld [vmem:[%s1 + $0x5c] sm:$0xf]
      %v448 = vld [vmem:[%s1 + $0x60] sm:$0xf]
      %v449 = vld [vmem:[%s1 + $0x64] sm:$0xf]
      %v450 = vld [vmem:[%s1 + $0x68] sm:$0xf]
      %v451 = vld [vmem:[%s1 + $0x6c] sm:$0xf]
      %v452 = vld [vmem:[%s1 + $0x70] sm:$0xf]
      %v453 = vld [vmem:[%s1 + $0x74] sm:$0xf]
      %v454 = vld [vmem:[%s1 + $0x78] sm:$0xf]
      %v455 = vld [vmem:[%s1 + $0x7c] sm:$0xf]
      %v456 = vld [vmem:[%s1 + $0x80] sm:$0xf]
      %v457 = vld [vmem:[%s1 + $0x84] sm:$0xf]
      %v458 = vld [vmem:[%s1 + $0x88] sm:$0xf]
      %v459 = vld [vmem:[%s1 + $0x8c] sm:$0xf]
      %v460 = vld [vmem:[%s1 + $0x90] sm:$0xf]
      %v461 = vld [vmem:[%s1 + $0x94] sm:$0xf]
      %v462 = vld [vmem:[%s1 + $0x98] sm:$0xf]
      %v463 = vld [vmem:[%s1 + $0x9c] sm:$0xf]
      %v464 = vld [vmem:[%s1 + $0xa0] sm:$0xf]
      %v465 = vld [vmem:[%s1 + $0xa4] sm:$0xf]
      %v466 = vld [vmem:[%s1 + $0xa8] sm:$0xf]
      %v467 = vld [vmem:[%s1 + $0xac] sm:$0xf]
      %v468 = vld [vmem:[%s1 + $0xb0] sm:$0xf]
      %v469 = vld [vmem:[%s1 + $0xb4] sm:$0xf]
      %v470 = vld [vmem:[%s1 + $0xb8] sm:$0xf]
      %v471 = vld [vmem:[%s1 + $0xbc] sm:$0xf]
      %v472 = vld [vmem:[%s1 + $0xc0] sm:$0xf]
      %v473 = vld [vmem:[%s1 + $0xc4] sm:$0xf]
      %v474 = vld [vmem:[%s1 + $0xc8] sm:$0xf]
      %v475 = vld [vmem:[%s1 + $0xcc] sm:$0xf]
      %v476 = vld [vmem:[%s1 + $0xd0] sm:$0xf]
      %v477 = vld [vmem:[%s1 + $0xd4] sm:$0xf]
      %v478 = vld [vmem:[%s1 + $0xd8] sm:$0xf]
      %v479 = vld [vmem:[%s1 + $0xdc] sm:$0xf]
      %v480 = vld [vmem:[%s1 + $0xe0] sm:$0xf]
      %v481 = vld [vmem:[%s1 + $0xe4] sm:$0xf]
      %v482 = vld [vmem:[%s1 + $0xe8] sm:$0xf]
      %v483 = vld [vmem:[%s1 + $0xec] sm:$0xf]
      %v484 = vld [vmem:[%s1 + $0xf0] sm:$0xf]
      %v485 = vld [vmem:[%s1 + $0xf4] sm:$0xf]
      %v486 = vld [vmem:[%s1 + $0xf8] sm:$0xf]
      %v487 = vld [vmem:[%s1 + $0xfc] sm:$0xf]
      %v488 = vld [vmem:[%s1 + $0x100] sm:$0xf]
      %v489 = vld [vmem:[%s1 + $0x104] sm:$0xf]
      %v490 = vld [vmem:[%s1 + $0x108] sm:$0xf]
      %v491 = vld [vmem:[%s1 + $0x10c] sm:$0xf]
      %v492 = vld [vmem:[%s1 + $0x110] sm:$0xf]
      %v493 = vld [vmem:[%s1 + $0x114] sm:$0xf]
      %v494 = vld [vmem:[%s1 + $0x118] sm:$0xf]
      %v495 = vld [vmem:[%s1 + $0x11c] sm:$0xf]
      %v496 = vld [vmem:[%s1 + $0x120] sm:$0xf]
      %v497 = vld [vmem:[%s1 + $0x124] sm:$0xf]
      %v498 = vld [vmem:[%s1 + $0x128] sm:$0xf]
      %v499 = vld [vmem:[%s1 + $0x12c] sm:$0xf]
      %v500 = vld [vmem:[%s1 + $0x130] sm:$0xf]
      %v501 = vld [vmem:[%s1 + $0x134] sm:$0xf]
      %v502 = vld [vmem:[%s1 + $0x138] sm:$0xf]
      %v503 = vld [vmem:[%s1 + $0x13c] sm:$0xf]
      %v504 = vld [vmem:[%s1 + $0x140] sm:$0xf]
      %v505 = vld [vmem:[%s1 + $0x144] sm:$0xf]
      %v506 = vld [vmem:[%s1 + $0x148] sm:$0xf]
      %v507 = vld [vmem:[%s1 + $0x14c] sm:$0xf]
      %v508 = vld [vmem:[%s1 + $0x150] sm:$0xf]
      %v509 = vld [vmem:[%s1 + $0x154] sm:$0xf]
      %v510 = vld [vmem:[%s1 + $0x158] sm:$0xf]
      %v511 = vld [vmem:[%s1 + $0x15c] sm:$0xf]
      %v512 = vld [vmem:[%s1 + $0x160] sm:$0xf]
      %v513 = vld [vmem:[%s1 + $0x164] sm:$0xf]
      %v514 = vld [vmem:[%s1 + $0x168] sm:$0xf]
      %v515 = vld [vmem:[%s1 + $0x16c] sm:$0xf]
      %v516 = vld [vmem:[%s1 + $0x170] sm:$0xf]
      %v517 = vld [vmem:[%s1 + $0x174] sm:$0xf]
      %v518 = vld [vmem:[%s1 + $0x178] sm:$0xf]
      %v519 = vld [vmem:[%s1 + $0x17c] sm:$0xf]
      %v520 = vld [vmem:[%s1 + $0x180] sm:$0xf]
      %v521 = vld [vmem:[%s1 + $0x184] sm:$0xf]
      %v522 = vld [vmem:[%s1 + $0x188] sm:$0xf]
      %v523 = vld [vmem:[%s1 + $0x18c] sm:$0xf]
      %v524 = vld [vmem:[%s1 + $0x190] sm:$0xf]
      %v525 = vld [vmem:[%s1 + $0x194] sm:$0xf]
      %v526 = vld [vmem:[%s1 + $0x198] sm:$0xf]
      %v527 = vld [vmem:[%s1 + $0x19c] sm:$0xf]
      %v528 = vld [vmem:[%s1 + $0x1a0] sm:$0xf]
      %v529 = vld [vmem:[%s1 + $0x1a4] sm:$0xf]
      %v530 = vld [vmem:[%s1 + $0x1a8] sm:$0xf]
      %v531 = vld [vmem:[%s1 + $0x1ac] sm:$0xf]
      %v532 = vld [vmem:[%s1 + $0x1b0] sm:$0xf]
      %v533 = vld [vmem:[%s1 + $0x1b4] sm:$0xf]
      %v534 = vld [vmem:[%s1 + $0x1b8] sm:$0xf]
      %v535 = vld [vmem:[%s1 + $0x1bc] sm:$0xf]
      %v536 = vld [vmem:[%s1 + $0x1c0] sm:$0xf]
      %v537 = vld [vmem:[%s1 + $0x1c4] sm:$0xf]
      %v538 = vld [vmem:[%s1 + $0x1c8] sm:$0xf]
      %v539 = vld [vmem:[%s1 + $0x1cc] sm:$0xf]
      %v540 = vld [vmem:[%s1 + $0x1d0] sm:$0xf]
      %v541 = vld [vmem:[%s1 + $0x1d4] sm:$0xf]
      %v542 = vld [vmem:[%s1 + $0x1d8] sm:$0xf]
      %v543 = vld [vmem:[%s1 + $0x1dc] sm:$0xf]
      %v544 = vld [vmem:[%s1 + $0x1e0] sm:$0xf]
      %v545 = vld [vmem:[%s1 + $0x1e4] sm:$0xf]
      %v546 = vld [vmem:[%s1 + $0x1e8] sm:$0xf]
      %v547 = vld [vmem:[%s1 + $0x1ec] sm:$0xf]
      %v548 = vld [vmem:[%s1 + $0x1f0] sm:$0xf]
      %v549 = vld [vmem:[%s1 + $0x1f4] sm:$0xf]
      %v550 = vld [vmem:[%s1 + $0x1f8] sm:$0xf]
      %v551 = vld [vmem:[%s1 + $0x1fc] sm:$0xf]
      %v552 = vld [vmem:[%s1 + $0x200] sm:$0xf]
      %v553 = vld [vmem:[%s1 + $0x204] sm:$0xf]
      %v554 = vld [vmem:[%s1 + $0x208] sm:$0xf]
      %v555 = vld [vmem:[%s1 + $0x20c] sm:$0xf]
      %v556 = vld [vmem:[%s1 + $0x210] sm:$0xf]
      %v557 = vld [vmem:[%s1 + $0x214] sm:$0xf]
      %v558 = vld [vmem:[%s1 + $0x218] sm:$0xf]
      %v559 = vld [vmem:[%s1 + $0x21c] sm:$0xf]
      %v560 = vld [vmem:[%s1 + $0x220] sm:$0xf]
      %v561 = vld [vmem:[%s1 + $0x224] sm:$0xf]
      %v562 = vld [vmem:[%s1 + $0x228] sm:$0xf]
      %v563 = vld [vmem:[%s1 + $0x22c] sm:$0xf]
      %v564 = vld [vmem:[%s1 + $0x230] sm:$0xf]
      %v565 = vld [vmem:[%s1 + $0x234] sm:$0xf]
      %v566 = vld [vmem:[%s1 + $0x238] sm:$0xf]
      %v567 = vld [vmem:[%s1 + $0x23c] sm:$0xf]
      %v568 = vld [vmem:[%s1 + $0x240] sm:$0xf]
      %v569 = vld [vmem:[%s1 + $0x244] sm:$0xf]
      %v570 = vld [vmem:[%s1 + $0x248] sm:$0xf]
      %v571 = vld [vmem:[%s1 + $0x24c] sm:$0xf]
      %v572 = vld [vmem:[%s1 + $0x250] sm:$0xf]
      %v573 = vld [vmem:[%s1 + $0x254] sm:$0xf]
      %v574 = vld [vmem:[%s1 + $0x258] sm:$0xf]
      %v575 = vld [vmem:[%s1 + $0x25c] sm:$0xf]
      %v576 = vld [vmem:[%s1 + $0x260] sm:$0xf]
      %v577 = vld [vmem:[%s1 + $0x264] sm:$0xf]
      %v578 = vld [vmem:[%s1 + $0x268] sm:$0xf]
      %v579 = vld [vmem:[%s1 + $0x26c] sm:$0xf]
      %v580 = vld [vmem:[%s1 + $0x270] sm:$0xf]
      %v581 = vld [vmem:[%s1 + $0x274] sm:$0xf]
      %v582 = vld [vmem:[%s1 + $0x278] sm:$0xf]
      %v583 = vld [vmem:[%s1 + $0x27c] sm:$0xf]
      %v584 = vld [vmem:[%s1 + $0x280] sm:$0xf]
      %v585 = vld [vmem:[%s1 + $0x284] sm:$0xf]
      %v586 = vld [vmem:[%s1 + $0x288] sm:$0xf]
      %v587 = vld [vmem:[%s1 + $0x28c] sm:$0xf]
      %v588 = vld [vmem:[%s1 + $0x290] sm:$0xf]
      %v589 = vld [vmem:[%s1 + $0x294] sm:$0xf]
      %v590 = vld [vmem:[%s1 + $0x298] sm:$0xf]
      %v591 = vld [vmem:[%s1 + $0x29c] sm:$0xf]
      %v592 = vld [vmem:[%s1 + $0x2a0] sm:$0xf]
      %v593 = vld [vmem:[%s1 + $0x2a4] sm:$0xf]
      %v594 = vld [vmem:[%s1 + $0x2a8] sm:$0xf]
      %v595 = vld [vmem:[%s1 + $0x2ac] sm:$0xf]
      %v596 = vld [vmem:[%s1 + $0x2b0] sm:$0xf]
      %v597 = vld [vmem:[%s1 + $0x2b4] sm:$0xf]
      %v598 = vld [vmem:[%s1 + $0x2b8] sm:$0xf]
      %v599 = vld [vmem:[%s1 + $0x2bc] sm:$0xf]
      %v600 = vld [vmem:[%s1 + $0x2c0] sm:$0xf]
      %v601 = vld [vmem:[%s1 + $0x2c4] sm:$0xf]
      %v602 = vld [vmem:[%s1 + $0x2c8] sm:$0xf]
      %v603 = vld [vmem:[%s1 + $0x2cc] sm:$0xf]
      %v604 = vld [vmem:[%s1 + $0x2d0] sm:$0xf]
      %v605 = vld [vmem:[%s1 + $0x2d4] sm:$0xf]
      %v606 = vld [vmem:[%s1 + $0x2d8] sm:$0xf]
      %v607 = vld [vmem:[%s1 + $0x2dc] sm:$0xf]
      %v608 = vld [vmem:[%s1 + $0x2e0] sm:$0xf]
      %v609 = vld [vmem:[%s1 + $0x2e4] sm:$0xf]
      %v610 = vld [vmem:[%s1 + $0x2e8] sm:$0xf]
      %v611 = vld [vmem:[%s1 + $0x2ec] sm:$0xf]
      %v612 = vld [vmem:[%s1 + $0x2f0] sm:$0xf]
      %v613 = vld [vmem:[%s1 + $0x2f4] sm:$0xf]
      %v614 = vld [vmem:[%s1 + $0x2f8] sm:$0xf]
      %v615 = vld [vmem:[%s1 + $0x2fc] sm:$0xf]
      %v616 = vld [vmem:[%s1 + $0x300] sm:$0xf]
      %v617 = vld [vmem:[%s1 + $0x304] sm:$0xf]
      %v618 = vld [vmem:[%s1 + $0x308] sm:$0xf]
      %v619 = vld [vmem:[%s1 + $0x30c] sm:$0xf]
      %v620 = vld [vmem:[%s1 + $0x310] sm:$0xf]
      %v621 = vld [vmem:[%s1 + $0x314] sm:$0xf]
      %v622 = vld [vmem:[%s1 + $0x318] sm:$0xf]
      %v623 = vld [vmem:[%s1 + $0x31c] sm:$0xf]
      %v624 = vld [vmem:[%s1 + $0x320] sm:$0xf]
      %v625 = vld [vmem:[%s1 + $0x324] sm:$0xf]
      %v626 = vld [vmem:[%s1 + $0x328] sm:$0xf]
      %v627 = vld [vmem:[%s1 + $0x32c] sm:$0xf]
      %v628 = vld [vmem:[%s1 + $0x330] sm:$0xf]
      %v629 = vld [vmem:[%s1 + $0x334] sm:$0xf]
      %v630 = vld [vmem:[%s1 + $0x338] sm:$0xf]
      %v631 = vld [vmem:[%s1 + $0x33c] sm:$0xf]
      %v632 = vld [vmem:[%s1 + $0x340] sm:$0xf]
      %v633 = vld [vmem:[%s1 + $0x344] sm:$0xf]
      %v634 = vld [vmem:[%s1 + $0x348] sm:$0xf]
      %v635 = vld [vmem:[%s1 + $0x34c] sm:$0xf]
      %v636 = vld [vmem:[%s1 + $0x350] sm:$0xf]
      %v637 = vld [vmem:[%s1 + $0x354] sm:$0xf]
      %v638 = vld [vmem:[%s1 + $0x358] sm:$0xf]
      %v639 = vld [vmem:[%s1 + $0x35c] sm:$0xf]
      %v640 = vld [vmem:[%s1 + $0x360] sm:$0xf]
      %v641 = vld [vmem:[%s1 + $0x364] sm:$0xf]
      %v642 = vld [vmem:[%s1 + $0x368] sm:$0xf]
      %v643 = vld [vmem:[%s1 + $0x36c] sm:$0xf]
      %v644 = vld [vmem:[%s1 + $0x370] sm:$0xf]
      %v645 = vld [vmem:[%s1 + $0x374] sm:$0xf]
      %v646 = vld [vmem:[%s1 + $0x378] sm:$0xf]
      %v647 = vld [vmem:[%s1 + $0x37c] sm:$0xf]
      %v648 = vld [vmem:[%s1 + $0x380] sm:$0xf]
      %v649 = vld [vmem:[%s1 + $0x384] sm:$0xf]
      %v650 = vld [vmem:[%s1 + $0x388] sm:$0xf]
      %v651 = vld [vmem:[%s1 + $0x38c] sm:$0xf]
      %v652 = vld [vmem:[%s1 + $0x390] sm:$0xf]
      %v653 = vld [vmem:[%s1 + $0x394] sm:$0xf]
      %v654 = vld [vmem:[%s1 + $0x398] sm:$0xf]
      %v655 = vld [vmem:[%s1 + $0x39c] sm:$0xf]
      %v656 = vld [vmem:[%s1 + $0x3a0] sm:$0xf]
      %v657 = vld [vmem:[%s1 + $0x3a4] sm:$0xf]
      %v658 = vld [vmem:[%s1 + $0x3a8] sm:$0xf]
      %v659 = vld [vmem:[%s1 + $0x3ac] sm:$0xf]
      %v660 = vld [vmem:[%s1 + $0x3b0] sm:$0xf]
      %v661 = vld [vmem:[%s1 + $0x3b4] sm:$0xf]
      %v662 = vld [vmem:[%s1 + $0x3b8] sm:$0xf]
      %v663 = vld [vmem:[%s1 + $0x3bc] sm:$0xf]
      %v664 = vld [vmem:[%s1 + $0x3c0] sm:$0xf]
      %v665 = vld [vmem:[%s1 + $0x3c4] sm:$0xf]
      %v666 = vld [vmem:[%s1 + $0x3c8] sm:$0xf]
      %v667 = vld [vmem:[%s1 + $0x3cc] sm:$0xf]
      %v668 = vld [vmem:[%s1 + $0x3d0] sm:$0xf]
      %v669 = vld [vmem:[%s1 + $0x3d4] sm:$0xf]
      %v670 = vld [vmem:[%s1 + $0x3d8] sm:$0xf]
      %v671 = vld [vmem:[%s1 + $0x3dc] sm:$0xf]
      %v672 = vld [vmem:[%s1 + $0x3e0] sm:$0xf]
      %v673 = vld [vmem:[%s1 + $0x3e4] sm:$0xf]
      %v674 = vld [vmem:[%s1 + $0x3e8] sm:$0xf]
      %v675 = vld [vmem:[%s1 + $0x3ec] sm:$0xf]
      %v676 = vld [vmem:[%s1 + $0x3f0] sm:$0xf]
      %v677 = vld [vmem:[%s1 + $0x3f4] sm:$0xf]
      %v678 = vld [vmem:[%s1 + $0x3f8] sm:$0xf]
      %v679 = vld [vmem:[%s1 + $0x3fc] sm:$0xf]
      %v680 = vld [vmem:[%s1 + $0x400] sm:$0xf]
      %v681 = vld [vmem:[%s1 + $0x404] sm:$0xf]
      %v682 = vld [vmem:[%s1 + $0x408] sm:$0xf]
      %v683 = vld [vmem:[%s1 + $0x40c] sm:$0xf]
      %v684 = vld [vmem:[%s1 + $0x410] sm:$0xf]
      %v685 = vld [vmem:[%s1 + $0x414] sm:$0xf]
      %v686 = vld [vmem:[%s1 + $0x418] sm:$0xf]
      %v687 = vld [vmem:[%s1 + $0x41c] sm:$0xf]
      %v688 = vld [vmem:[%s1 + $0x420] sm:$0xf]
      %v689 = vld [vmem:[%s1 + $0x424] sm:$0xf]
      %v690 = vld [vmem:[%s1 + $0x428] sm:$0xf]
      %v691 = vld [vmem:[%s1 + $0x42c] sm:$0xf]
      %v692 = vld [vmem:[%s1 + $0x430] sm:$0xf]
      %v693 = vld [vmem:[%s1 + $0x434] sm:$0xf]
      %v694 = vld [vmem:[%s1 + $0x438] sm:$0xf]
      %v695 = vld [vmem:[%s1 + $0x43c] sm:$0xf]
      %v696 = vld [vmem:[%s1 + $0x440] sm:$0xf]
      %v697 = vld [vmem:[%s1 + $0x444] sm:$0xf]
      %v698 = vld [vmem:[%s1 + $0x448] sm:$0xf]
      %v699 = vld [vmem:[%s1 + $0x44c] sm:$0xf]
      %v700 = vld [vmem:[%s1 + $0x450] sm:$0xf]
      %v701 = vld [vmem:[%s1 + $0x454] sm:$0xf]
      %v702 = vld [vmem:[%s1 + $0x458] sm:$0xf]
      %v703 = vld [vmem:[%s1 + $0x45c] sm:$0xf]
      %v704 = vld [vmem:[%s1 + $0x460] sm:$0xf]
      %v705 = vld [vmem:[%s1 + $0x464] sm:$0xf]
      %v706 = vld [vmem:[%s1 + $0x468] sm:$0xf]
      %v707 = vld [vmem:[%s1 + $0x46c] sm:$0xf]
      %v708 = vld [vmem:[%s1 + $0x470] sm:$0xf]
      %v709 = vld [vmem:[%s1 + $0x474] sm:$0xf]
      %v710 = vld [vmem:[%s1 + $0x478] sm:$0xf]
      %v711 = vld [vmem:[%s1 + $0x47c] sm:$0xf]
      %v712 = vld [vmem:[%s1 + $0x480] sm:$0xf]
      %v713 = vld [vmem:[%s1 + $0x484] sm:$0xf]
      %v714 = vld [vmem:[%s1 + $0x488] sm:$0xf]
      %v715 = vld [vmem:[%s1 + $0x48c] sm:$0xf]
      %v716 = vld [vmem:[%s1 + $0x490] sm:$0xf]
      %v717 = vld [vmem:[%s1 + $0x494] sm:$0xf]
      %v718 = vld [vmem:[%s1 + $0x498] sm:$0xf]
      %v719 = vld [vmem:[%s1 + $0x49c] sm:$0xf]
      %v720 = vld [vmem:[%s1 + $0x4a0] sm:$0xf]
      %v721 = vld [vmem:[%s1 + $0x4a4] sm:$0xf]
      %v722 = vld [vmem:[%s1 + $0x4a8] sm:$0xf]
      %v723 = vld [vmem:[%s1 + $0x4ac] sm:$0xf]
      %v724 = vld [vmem:[%s1 + $0x4b0] sm:$0xf]
      %v725 = vld [vmem:[%s1 + $0x4b4] sm:$0xf]
      %v726 = vld [vmem:[%s1 + $0x4b8] sm:$0xf]
      %v727 = vld [vmem:[%s1 + $0x4bc] sm:$0xf]
      %v728 = vld [vmem:[%s1 + $0x4c0] sm:$0xf]
      %v729 = vld [vmem:[%s1 + $0x4c4] sm:$0xf]
      %v730 = vld [vmem:[%s1 + $0x4c8] sm:$0xf]
      %v731 = vld [vmem:[%s1 + $0x4cc] sm:$0xf]
      %v732 = vld [vmem:[%s1 + $0x4d0] sm:$0xf]
      %v733 = vld [vmem:[%s1 + $0x4d4] sm:$0xf]
      %v734 = vld [vmem:[%s1 + $0x4d8] sm:$0xf]
      %v735 = vld [vmem:[%s1 + $0x4dc] sm:$0xf]
      %v736 = vld [vmem:[%s1 + $0x4e0] sm:$0xf]
      %v737 = vld [vmem:[%s1 + $0x4e4] sm:$0xf]
      %v738 = vld [vmem:[%s1 + $0x4e8] sm:$0xf]
      %v739 = vld [vmem:[%s1 + $0x4ec] sm:$0xf]
      %v740 = vld [vmem:[%s1 + $0x4f0] sm:$0xf]
      %v741 = vld [vmem:[%s1 + $0x4f4] sm:$0xf]
      %v742 = vld [vmem:[%s1 + $0x4f8] sm:$0xf]
      %v743 = vld [vmem:[%s1 + $0x4fc] sm:$0xf]
      %v744 = vld [vmem:[%s1 + $0x500] sm:$0xf]
      %v745 = vld [vmem:[%s1 + $0x504] sm:$0xf]
      %v746 = vld [vmem:[%s1 + $0x508] sm:$0xf]
      %v747 = vld [vmem:[%s1 + $0x50c] sm:$0xf]
      %v748 = vld [vmem:[%s1 + $0x510] sm:$0xf]
      %v749 = vld [vmem:[%s1 + $0x514] sm:$0xf]
      %v750 = vld [vmem:[%s1 + $0x518] sm:$0xf]
      %v751 = vld [vmem:[%s1 + $0x51c] sm:$0xf]
      %v752 = vld [vmem:[%s1 + $0x520] sm:$0xf]
      %v753 = vld [vmem:[%s1 + $0x524] sm:$0xf]
      %v754 = vld [vmem:[%s1 + $0x528] sm:$0xf]
      %v755 = vld [vmem:[%s1 + $0x52c] sm:$0xf]
      %v756 = vld [vmem:[%s1 + $0x530] sm:$0xf]
      %v757 = vld [vmem:[%s1 + $0x534] sm:$0xf]
      %v758 = vld [vmem:[%s1 + $0x538] sm:$0xf]
      %v759 = vld [vmem:[%s1 + $0x53c] sm:$0xf]
      %v760 = vld [vmem:[%s1 + $0x540] sm:$0xf]
      %v761 = vld [vmem:[%s1 + $0x544] sm:$0xf]
      %v762 = vld [vmem:[%s1 + $0x548] sm:$0xf]
      %v763 = vld [vmem:[%s1 + $0x54c] sm:$0xf]
      %v764 = vld [vmem:[%s1 + $0x550] sm:$0xf]
      %v765 = vld [vmem:[%s1 + $0x554] sm:$0xf]
      %v766 = vld [vmem:[%s1 + $0x558] sm:$0xf]
      %v767 = vld [vmem:[%s1 + $0x55c] sm:$0xf]
      %v768 = vld [vmem:[%s1 + $0x560] sm:$0xf]
      %v769 = vld [vmem:[%s1 + $0x564] sm:$0xf]
      %v770 = vld [vmem:[%s1 + $0x568] sm:$0xf]
      %v771 = vld [vmem:[%s1 + $0x56c] sm:$0xf]
      %v772 = vld [vmem:[%s1 + $0x570] sm:$0xf]
      %v773 = vld [vmem:[%s1 + $0x574] sm:$0xf]
      %v774 = vld [vmem:[%s1 + $0x578] sm:$0xf]
      %v775 = vld [vmem:[%s1 + $0x57c] sm:$0xf]
      %v776 = vld [vmem:[%s1 + $0x580] sm:$0xf]
      %v777 = vld [vmem:[%s1 + $0x584] sm:$0xf]
      %v778 = vld [vmem:[%s1 + $0x588] sm:$0xf]
      %v779 = vld [vmem:[%s1 + $0x58c] sm:$0xf]
      %v780 = vld [vmem:[%s1 + $0x590] sm:$0xf]
      %v781 = vld [vmem:[%s1 + $0x594] sm:$0xf]
      %v782 = vld [vmem:[%s1 + $0x598] sm:$0xf]
      %v783 = vld [vmem:[%s1 + $0x59c] sm:$0xf]
      %v784 = vld [vmem:[%s1 + $0x5a0] sm:$0xf]
      %v785 = vld [vmem:[%s1 + $0x5a4] sm:$0xf]
      %v786 = vld [vmem:[%s1 + $0x5a8] sm:$0xf]
      %v787 = vld [vmem:[%s1 + $0x5ac] sm:$0xf]
      %v788 = vld [vmem:[%s1 + $0x5b0] sm:$0xf]
      %v789 = vld [vmem:[%s1 + $0x5b4] sm:$0xf]
      %v790 = vld [vmem:[%s1 + $0x5b8] sm:$0xf]
      %v791 = vld [vmem:[%s1 + $0x5bc] sm:$0xf]
      %v792 = vld [vmem:[%s1 + $0x5c0] sm:$0xf]
      %v793 = vld [vmem:[%s1 + $0x5c4] sm:$0xf]
      %v794 = vld [vmem:[%s1 + $0x5c8] sm:$0xf]
      %v795 = vld [vmem:[%s1 + $0x5cc] sm:$0xf]
      %v796 = vld [vmem:[%s1 + $0x5d0] sm:$0xf]
      %v797 = vld [vmem:[%s1 + $0x5d4] sm:$0xf]
      %v798 = vld [vmem:[%s1 + $0x5d8] sm:$0xf]
      %v799 = vld [vmem:[%s1 + $0x5dc] sm:$0xf]
      %v800 = vld [vmem:[%s1 + $0x5e0] sm:$0xf]
      %v801 = vld [vmem:[%s1 + $0x5e4] sm:$0xf]
      %v802 = vld [vmem:[%s1 + $0x5e8] sm:$0xf]
      %v803 = vld [vmem:[%s1 + $0x5ec] sm:$0xf]
      %v804 = vld [vmem:[%s1 + $0x5f0] sm:$0xf]
      %v805 = vld [vmem:[%s1 + $0x5f4] sm:$0xf]
      %v806 = vld [vmem:[%s1 + $0x5f8] sm:$0xf]
      %v807 = vld [vmem:[%s1 + $0x5fc] sm:$0xf]
      %v808 = vperm.slane %v423, 0
      %v1001 = vunpack.c.l.b16 %v231
      %v1002 = vunpack.c.h.b16 %v231
      %v1003 = vunpack.c.l.b16 %v232
      %v1004 = vunpack.c.h.b16 %v232
      %v1005 = vunpack.c.l.b16 %v233
      %v1006 = vunpack.c.h.b16 %v233
      %v1007 = vunpack.c.l.b16 %v234
      %v1008 = vunpack.c.h.b16 %v234
      %v1009 = vunpack.c.l.b16 %v235
      %v1010 = vunpack.c.h.b16 %v235
      %v1011 = vunpack.c.l.b16 %v236
      %v1012 = vunpack.c.h.b16 %v236
      %v1013 = vunpack.c.l.b16 %v237
      %v1014 = vunpack.c.h.b16 %v237
      %v1015 = vunpack.c.l.b16 %v238
      %v1016 = vunpack.c.h.b16 %v238
      %v1017 = vunpack.c.l.b16 %v239
      %v1018 = vunpack.c.h.b16 %v239
      %v1019 = vunpack.c.l.b16 %v240
      %v1020 = vunpack.c.h.b16 %v240
      %v1021 = vunpack.c.l.b16 %v241
      %v1022 = vunpack.c.h.b16 %v241
      %v1023 = vunpack.c.l.b16 %v242
      %v1024 = vunpack.c.h.b16 %v242
      %v1025 = vunpack.c.l.b16 %v243
      %v1026 = vunpack.c.h.b16 %v243
      %v1027 = vunpack.c.l.b16 %v244
      %v1028 = vunpack.c.h.b16 %v244
      %v1029 = vunpack.c.l.b16 %v245
      %v1030 = vunpack.c.h.b16 %v245
      %v1031 = vunpack.c.l.b16 %v246
      %v1032 = vunpack.c.h.b16 %v246
      %v1033 = vunpack.c.l.b16 %v247
      %v1034 = vunpack.c.h.b16 %v247
      %v1035 = vunpack.c.l.b16 %v248
      %v1036 = vunpack.c.h.b16 %v248
      %v1037 = vunpack.c.l.b16 %v249
      %v1038 = vunpack.c.h.b16 %v249
      %v1039 = vunpack.c.l.b16 %v250
      %v1040 = vunpack.c.h.b16 %v250
      %v1041 = vunpack.c.l.b16 %v251
      %v1042 = vunpack.c.h.b16 %v251
      %v1043 = vunpack.c.l.b16 %v252
      %v1044 = vunpack.c.h.b16 %v252
      %v1045 = vunpack.c.l.b16 %v253
      %v1046 = vunpack.c.h.b16 %v253
      %v1047 = vunpack.c.l.b16 %v254
      %v1048 = vunpack.c.h.b16 %v254
      %v1049 = vunpack.c.l.b16 %v255
      %v1050 = vunpack.c.h.b16 %v255
      %v1051 = vunpack.c.l.b16 %v256
      %v1052 = vunpack.c.h.b16 %v256
      %v1053 = vunpack.c.l.b16 %v257
      %v1054 = vunpack.c.h.b16 %v257
      %v1055 = vunpack.c.l.b16 %v258
      %v1056 = vunpack.c.h.b16 %v258
      %v1057 = vunpack.c.l.b16 %v259
      %v1058 = vunpack.c.h.b16 %v259
      %v1059 = vunpack.c.l.b16 %v260
      %v1060 = vunpack.c.h.b16 %v260
      %v1061 = vunpack.c.l.b16 %v261
      %v1062 = vunpack.c.h.b16 %v261
      %v1063 = vunpack.c.l.b16 %v262
      %v1064 = vunpack.c.h.b16 %v262
      %v1065 = vunpack.c.l.b16 %v263
      %v1066 = vunpack.c.h.b16 %v263
      %v1067 = vunpack.c.l.b16 %v264
      %v1068 = vunpack.c.h.b16 %v264
      %v1069 = vunpack.c.l.b16 %v265
      %v1070 = vunpack.c.h.b16 %v265
      %v1071 = vunpack.c.l.b16 %v266
      %v1072 = vunpack.c.h.b16 %v266
      %v1073 = vunpack.c.l.b16 %v267
      %v1074 = vunpack.c.h.b16 %v267
      %v1075 = vunpack.c.l.b16 %v268
      %v1076 = vunpack.c.h.b16 %v268
      %v1077 = vunpack.c.l.b16 %v269
      %v1078 = vunpack.c.h.b16 %v269
      %v1079 = vunpack.c.l.b16 %v270
      %v1080 = vunpack.c.h.b16 %v270
      %v1081 = vunpack.c.l.b16 %v271
      %v1082 = vunpack.c.h.b16 %v271
      %v1083 = vunpack.c.l.b16 %v272
      %v1084 = vunpack.c.h.b16 %v272
      %v1085 = vunpack.c.l.b16 %v273
      %v1086 = vunpack.c.h.b16 %v273
      %v1087 = vunpack.c.l.b16 %v274
      %v1088 = vunpack.c.h.b16 %v274
      %v1089 = vunpack.c.l.b16 %v275
      %v1090 = vunpack.c.h.b16 %v275
      %v1091 = vunpack.c.l.b16 %v276
      %v1092 = vunpack.c.h.b16 %v276
      %v1093 = vunpack.c.l.b16 %v277
      %v1094 = vunpack.c.h.b16 %v277
      %v1095 = vunpack.c.l.b16 %v278
      %v1096 = vunpack.c.h.b16 %v278
      %v1097 = vunpack.c.l.b16 %v279
      %v1098 = vunpack.c.h.b16 %v279
      %v1099 = vunpack.c.l.b16 %v280
      %v1100 = vunpack.c.h.b16 %v280
      %v1101 = vunpack.c.l.b16 %v281
      %v1102 = vunpack.c.h.b16 %v281
      %v1103 = vunpack.c.l.b16 %v282
      %v1104 = vunpack.c.h.b16 %v282
      %v1105 = vunpack.c.l.b16 %v283
      %v1106 = vunpack.c.h.b16 %v283
      %v1107 = vunpack.c.l.b16 %v284
      %v1108 = vunpack.c.h.b16 %v284
      %v1109 = vunpack.c.l.b16 %v285
      %v1110 = vunpack.c.h.b16 %v285
      %v1111 = vunpack.c.l.b16 %v286
      %v1112 = vunpack.c.h.b16 %v286
      %v1113 = vunpack.c.l.b16 %v287
      %v1114 = vunpack.c.h.b16 %v287
      %v1115 = vunpack.c.l.b16 %v288
      %v1116 = vunpack.c.h.b16 %v288
      %v1117 = vunpack.c.l.b16 %v289
      %v1118 = vunpack.c.h.b16 %v289
      %v1119 = vunpack.c.l.b16 %v290
      %v1120 = vunpack.c.h.b16 %v290
      %v1121 = vunpack.c.l.b16 %v291
      %v1122 = vunpack.c.h.b16 %v291
      %v1123 = vunpack.c.l.b16 %v292
      %v1124 = vunpack.c.h.b16 %v292
      %v1125 = vunpack.c.l.b16 %v293
      %v1126 = vunpack.c.h.b16 %v293
      %v1127 = vunpack.c.l.b16 %v294
      %v1128 = vunpack.c.h.b16 %v294
      %v1129 = vunpack.c.l.b16 %v295
      %v1130 = vunpack.c.h.b16 %v295
      %v1131 = vunpack.c.l.b16 %v296
      %v1132 = vunpack.c.h.b16 %v296
      %v1133 = vunpack.c.l.b16 %v297
      %v1134 = vunpack.c.h.b16 %v297
      %v1135 = vunpack.c.l.b16 %v298
      %v1136 = vunpack.c.h.b16 %v298
      %v1137 = vunpack.c.l.b16 %v299
      %v1138 = vunpack.c.h.b16 %v299
      %v1139 = vunpack.c.l.b16 %v300
      %v1140 = vunpack.c.h.b16 %v300
      %v1141 = vunpack.c.l.b16 %v301
      %v1142 = vunpack.c.h.b16 %v301
      %v1143 = vunpack.c.l.b16 %v302
      %v1144 = vunpack.c.h.b16 %v302
      %v1145 = vunpack.c.l.b16 %v303
      %v1146 = vunpack.c.h.b16 %v303
      %v1147 = vunpack.c.l.b16 %v304
      %v1148 = vunpack.c.h.b16 %v304
      %v1149 = vunpack.c.l.b16 %v305
      %v1150 = vunpack.c.h.b16 %v305
      %v1151 = vunpack.c.l.b16 %v306
      %v1152 = vunpack.c.h.b16 %v306
      %v1153 = vunpack.c.l.b16 %v307
      %v1154 = vunpack.c.h.b16 %v307
      %v1155 = vunpack.c.l.b16 %v308
      %v1156 = vunpack.c.h.b16 %v308
      %v1157 = vunpack.c.l.b16 %v309
      %v1158 = vunpack.c.h.b16 %v309
      %v1159 = vunpack.c.l.b16 %v310
      %v1160 = vunpack.c.h.b16 %v310
      %v1161 = vunpack.c.l.b16 %v311
      %v1162 = vunpack.c.h.b16 %v311
      %v1163 = vunpack.c.l.b16 %v312
      %v1164 = vunpack.c.h.b16 %v312
      %v1165 = vunpack.c.l.b16 %v313
      %v1166 = vunpack.c.h.b16 %v313
      %v1167 = vunpack.c.l.b16 %v314
      %v1168 = vunpack.c.h.b16 %v314
      %v1169 = vunpack.c.l.b16 %v315
      %v1170 = vunpack.c.h.b16 %v315
      %v1171 = vunpack.c.l.b16 %v316
      %v1172 = vunpack.c.h.b16 %v316
      %v1173 = vunpack.c.l.b16 %v317
      %v1174 = vunpack.c.h.b16 %v317
      %v1175 = vunpack.c.l.b16 %v318
      %v1176 = vunpack.c.h.b16 %v318
      %v1177 = vunpack.c.l.b16 %v319
      %v1178 = vunpack.c.h.b16 %v319
      %v1179 = vunpack.c.l.b16 %v320
      %v1180 = vunpack.c.h.b16 %v320
      %v1181 = vunpack.c.l.b16 %v321
      %v1182 = vunpack.c.h.b16 %v321
      %v1183 = vunpack.c.l.b16 %v322
      %v1184 = vunpack.c.h.b16 %v322
      %v1185 = vunpack.c.l.b16 %v323
      %v1186 = vunpack.c.h.b16 %v323
      %v1187 = vunpack.c.l.b16 %v324
      %v1188 = vunpack.c.h.b16 %v324
      %v1189 = vunpack.c.l.b16 %v325
      %v1190 = vunpack.c.h.b16 %v325
      %v1191 = vunpack.c.l.b16 %v326
      %v1192 = vunpack.c.h.b16 %v326
      %v1193 = vunpack.c.l.b16 %v327
      %v1194 = vunpack.c.h.b16 %v327
      %v1195 = vunpack.c.l.b16 %v328
      %v1196 = vunpack.c.h.b16 %v328
      %v1197 = vunpack.c.l.b16 %v329
      %v1198 = vunpack.c.h.b16 %v329
      %v1199 = vunpack.c.l.b16 %v330
      %v1200 = vunpack.c.h.b16 %v330
      %v1201 = vunpack.c.l.b16 %v331
      %v1202 = vunpack.c.h.b16 %v331
      %v1203 = vunpack.c.l.b16 %v332
      %v1204 = vunpack.c.h.b16 %v332
      %v1205 = vunpack.c.l.b16 %v333
      %v1206 = vunpack.c.h.b16 %v333
      %v1207 = vunpack.c.l.b16 %v334
      %v1208 = vunpack.c.h.b16 %v334
      %v1209 = vunpack.c.l.b16 %v335
      %v1210 = vunpack.c.h.b16 %v335
      %v1211 = vunpack.c.l.b16 %v336
      %v1212 = vunpack.c.h.b16 %v336
      %v1213 = vunpack.c.l.b16 %v337
      %v1214 = vunpack.c.h.b16 %v337
      %v1215 = vunpack.c.l.b16 %v338
      %v1216 = vunpack.c.h.b16 %v338
      %v1217 = vunpack.c.l.b16 %v339
      %v1218 = vunpack.c.h.b16 %v339
      %v1219 = vunpack.c.l.b16 %v340
      %v1220 = vunpack.c.h.b16 %v340
      %v1221 = vunpack.c.l.b16 %v341
      %v1222 = vunpack.c.h.b16 %v341
      %v1223 = vunpack.c.l.b16 %v342
      %v1224 = vunpack.c.h.b16 %v342
      %v1225 = vunpack.c.l.b16 %v343
      %v1226 = vunpack.c.h.b16 %v343
      %v1227 = vunpack.c.l.b16 %v344
      %v1228 = vunpack.c.h.b16 %v344
      %v1229 = vunpack.c.l.b16 %v345
      %v1230 = vunpack.c.h.b16 %v345
      %v1231 = vunpack.c.l.b16 %v346
      %v1232 = vunpack.c.h.b16 %v346
      %v1233 = vunpack.c.l.b16 %v347
      %v1234 = vunpack.c.h.b16 %v347
      %v1235 = vunpack.c.l.b16 %v348
      %v1236 = vunpack.c.h.b16 %v348
      %v1237 = vunpack.c.l.b16 %v349
      %v1238 = vunpack.c.h.b16 %v349
      %v1239 = vunpack.c.l.b16 %v350
      %v1240 = vunpack.c.h.b16 %v350
      %v1241 = vunpack.c.l.b16 %v351
      %v1242 = vunpack.c.h.b16 %v351
      %v1243 = vunpack.c.l.b16 %v352
      %v1244 = vunpack.c.h.b16 %v352
      %v1245 = vunpack.c.l.b16 %v353
      %v1246 = vunpack.c.h.b16 %v353
      %v1247 = vunpack.c.l.b16 %v354
      %v1248 = vunpack.c.h.b16 %v354
      %v1249 = vunpack.c.l.b16 %v355
      %v1250 = vunpack.c.h.b16 %v355
      %v1251 = vunpack.c.l.b16 %v356
      %v1252 = vunpack.c.h.b16 %v356
      %v1253 = vunpack.c.l.b16 %v357
      %v1254 = vunpack.c.h.b16 %v357
      %v1255 = vunpack.c.l.b16 %v358
      %v1256 = vunpack.c.h.b16 %v358
      %v1257 = vunpack.c.l.b16 %v359
      %v1258 = vunpack.c.h.b16 %v359
      %v1259 = vunpack.c.l.b16 %v360
      %v1260 = vunpack.c.h.b16 %v360
      %v1261 = vunpack.c.l.b16 %v361
      %v1262 = vunpack.c.h.b16 %v361
      %v1263 = vunpack.c.l.b16 %v362
      %v1264 = vunpack.c.h.b16 %v362
      %v1265 = vunpack.c.l.b16 %v363
      %v1266 = vunpack.c.h.b16 %v363
      %v1267 = vunpack.c.l.b16 %v364
      %v1268 = vunpack.c.h.b16 %v364
      %v1269 = vunpack.c.l.b16 %v365
      %v1270 = vunpack.c.h.b16 %v365
      %v1271 = vunpack.c.l.b16 %v366
      %v1272 = vunpack.c.h.b16 %v366
      %v1273 = vunpack.c.l.b16 %v367
      %v1274 = vunpack.c.h.b16 %v367
      %v1275 = vunpack.c.l.b16 %v368
      %v1276 = vunpack.c.h.b16 %v368
      %v1277 = vunpack.c.l.b16 %v369
      %v1278 = vunpack.c.h.b16 %v369
      %v1279 = vunpack.c.l.b16 %v370
      %v1280 = vunpack.c.h.b16 %v370
      %v1281 = vunpack.c.l.b16 %v371
      %v1282 = vunpack.c.h.b16 %v371
      %v1283 = vunpack.c.l.b16 %v372
      %v1284 = vunpack.c.h.b16 %v372
      %v1285 = vunpack.c.l.b16 %v373
      %v1286 = vunpack.c.h.b16 %v373
      %v1287 = vunpack.c.l.b16 %v374
      %v1288 = vunpack.c.h.b16 %v374
      %v1289 = vunpack.c.l.b16 %v375
      %v1290 = vunpack.c.h.b16 %v375
      %v1291 = vunpack.c.l.b16 %v376
      %v1292 = vunpack.c.h.b16 %v376
      %v1293 = vunpack.c.l.b16 %v377
      %v1294 = vunpack.c.h.b16 %v377
      %v1295 = vunpack.c.l.b16 %v378
      %v1296 = vunpack.c.h.b16 %v378
      %v1297 = vunpack.c.l.b16 %v379
      %v1298 = vunpack.c.h.b16 %v379
      %v1299 = vunpack.c.l.b16 %v380
      %v1300 = vunpack.c.h.b16 %v380
      %v1301 = vunpack.c.l.b16 %v381
      %v1302 = vunpack.c.h.b16 %v381
      %v1303 = vunpack.c.l.b16 %v382
      %v1304 = vunpack.c.h.b16 %v382
      %v1305 = vunpack.c.l.b16 %v383
      %v1306 = vunpack.c.h.b16 %v383
      %v1307 = vunpack.c.l.b16 %v384
      %v1308 = vunpack.c.h.b16 %v384
      %v1309 = vunpack.c.l.b16 %v385
      %v1310 = vunpack.c.h.b16 %v385
      %v1311 = vunpack.c.l.b16 %v386
      %v1312 = vunpack.c.h.b16 %v386
      %v1313 = vunpack.c.l.b16 %v387
      %v1314 = vunpack.c.h.b16 %v387
      %v1315 = vunpack.c.l.b16 %v388
      %v1316 = vunpack.c.h.b16 %v388
      %v1317 = vunpack.c.l.b16 %v389
      %v1318 = vunpack.c.h.b16 %v389
      %v1319 = vunpack.c.l.b16 %v390
      %v1320 = vunpack.c.h.b16 %v390
      %v1321 = vunpack.c.l.b16 %v391
      %v1322 = vunpack.c.h.b16 %v391
      %v1323 = vunpack.c.l.b16 %v392
      %v1324 = vunpack.c.h.b16 %v392
      %v1325 = vunpack.c.l.b16 %v393
      %v1326 = vunpack.c.h.b16 %v393
      %v1327 = vunpack.c.l.b16 %v394
      %v1328 = vunpack.c.h.b16 %v394
      %v1329 = vunpack.c.l.b16 %v395
      %v1330 = vunpack.c.h.b16 %v395
      %v1331 = vunpack.c.l.b16 %v396
      %v1332 = vunpack.c.h.b16 %v396
      %v1333 = vunpack.c.l.b16 %v397
      %v1334 = vunpack.c.h.b16 %v397
      %v1335 = vunpack.c.l.b16 %v398
      %v1336 = vunpack.c.h.b16 %v398
      %v1337 = vunpack.c.l.b16 %v399
      %v1338 = vunpack.c.h.b16 %v399
      %v1339 = vunpack.c.l.b16 %v400
      %v1340 = vunpack.c.h.b16 %v400
      %v1341 = vunpack.c.l.b16 %v401
      %v1342 = vunpack.c.h.b16 %v401
      %v1343 = vunpack.c.l.b16 %v402
      %v1344 = vunpack.c.h.b16 %v402
      %v1345 = vunpack.c.l.b16 %v403
      %v1346 = vunpack.c.h.b16 %v403
      %v1347 = vunpack.c.l.b16 %v404
      %v1348 = vunpack.c.h.b16 %v404
      %v1349 = vunpack.c.l.b16 %v405
      %v1350 = vunpack.c.h.b16 %v405
      %v1351 = vunpack.c.l.b16 %v406
      %v1352 = vunpack.c.h.b16 %v406
      %v1353 = vunpack.c.l.b16 %v407
      %v1354 = vunpack.c.h.b16 %v407
      %v1355 = vunpack.c.l.b16 %v408
      %v1356 = vunpack.c.h.b16 %v408
      %v1357 = vunpack.c.l.b16 %v409
      %v1358 = vunpack.c.h.b16 %v409
      %v1359 = vunpack.c.l.b16 %v410
      %v1360 = vunpack.c.h.b16 %v410
      %v1361 = vunpack.c.l.b16 %v411
      %v1362 = vunpack.c.h.b16 %v411
      %v1363 = vunpack.c.l.b16 %v412
      %v1364 = vunpack.c.h.b16 %v412
      %v1365 = vunpack.c.l.b16 %v413
      %v1366 = vunpack.c.h.b16 %v413
      %v1367 = vunpack.c.l.b16 %v414
      %v1368 = vunpack.c.h.b16 %v414
      %v1369 = vunpack.c.l.b16 %v415
      %v1370 = vunpack.c.h.b16 %v415
      %v1371 = vunpack.c.l.b16 %v416
      %v1372 = vunpack.c.h.b16 %v416
      %v1373 = vunpack.c.l.b16 %v417
      %v1374 = vunpack.c.h.b16 %v417
      %v1375 = vunpack.c.l.b16 %v418
      %v1376 = vunpack.c.h.b16 %v418
      %v1377 = vunpack.c.l.b16 %v419
      %v1378 = vunpack.c.h.b16 %v419
      %v1379 = vunpack.c.l.b16 %v420
      %v1380 = vunpack.c.h.b16 %v420
      %v1381 = vunpack.c.l.b16 %v421
      %v1382 = vunpack.c.h.b16 %v421
      %v1383 = vunpack.c.l.b16 %v422
      %v1384 = vunpack.c.h.b16 %v422
      %v1385 = vpack.c.b16 %v1025, %v1001
      %v1386 = vpack.c.b16 %v1026, %v1002
      %v1387 = vpack.c.b16 %v1027, %v1003
      %v1388 = vpack.c.b16 %v1028, %v1004
      %v1389 = vpack.c.b16 %v1029, %v1005
      %v1390 = vpack.c.b16 %v1030, %v1006
      %v1391 = vpack.c.b16 %v1031, %v1007
      %v1392 = vpack.c.b16 %v1032, %v1008
      %v1393 = vpack.c.b16 %v1033, %v1009
      %v1394 = vpack.c.b16 %v1034, %v1010
      %v1395 = vpack.c.b16 %v1035, %v1011
      %v1396 = vpack.c.b16 %v1036, %v1012
      %v1397 = vpack.c.b16 %v1037, %v1013
      %v1398 = vpack.c.b16 %v1038, %v1014
      %v1399 = vpack.c.b16 %v1039, %v1015
      %v1400 = vpack.c.b16 %v1040, %v1016
      %v1401 = vpack.c.b16 %v1041, %v1017
      %v1402 = vpack.c.b16 %v1042, %v1018
      %v1403 = vpack.c.b16 %v1043, %v1019
      %v1404 = vpack.c.b16 %v1044, %v1020
      %v1405 = vpack.c.b16 %v1045, %v1021
      %v1406 = vpack.c.b16 %v1046, %v1022
      %v1407 = vpack.c.b16 %v1047, %v1023
      %v1408 = vpack.c.b16 %v1048, %v1024
      %v1409 = vpack.c.b16 %v1073, %v1049
      %v1410 = vpack.c.b16 %v1074, %v1050
      %v1411 = vpack.c.b16 %v1075, %v1051
      %v1412 = vpack.c.b16 %v1076, %v1052
      %v1413 = vpack.c.b16 %v1077, %v1053
      %v1414 = vpack.c.b16 %v1078, %v1054
      %v1415 = vpack.c.b16 %v1079, %v1055
      %v1416 = vpack.c.b16 %v1080, %v1056
      %v1417 = vpack.c.b16 %v1081, %v1057
      %v1418 = vpack.c.b16 %v1082, %v1058
      %v1419 = vpack.c.b16 %v1083, %v1059
      %v1420 = vpack.c.b16 %v1084, %v1060
      %v1421 = vpack.c.b16 %v1085, %v1061
      %v1422 = vpack.c.b16 %v1086, %v1062
      %v1423 = vpack.c.b16 %v1087, %v1063
      %v1424 = vpack.c.b16 %v1088, %v1064
      %v1425 = vpack.c.b16 %v1089, %v1065
      %v1426 = vpack.c.b16 %v1090, %v1066
      %v1427 = vpack.c.b16 %v1091, %v1067
      %v1428 = vpack.c.b16 %v1092, %v1068
      %v1429 = vpack.c.b16 %v1093, %v1069
      %v1430 = vpack.c.b16 %v1094, %v1070
      %v1431 = vpack.c.b16 %v1095, %v1071
      %v1432 = vpack.c.b16 %v1096, %v1072
      %v1433 = vpack.c.b16 %v1121, %v1097
      %v1434 = vpack.c.b16 %v1122, %v1098
      %v1435 = vpack.c.b16 %v1123, %v1099
      %v1436 = vpack.c.b16 %v1124, %v1100
      %v1437 = vpack.c.b16 %v1125, %v1101
      %v1438 = vpack.c.b16 %v1126, %v1102
      %v1439 = vpack.c.b16 %v1127, %v1103
      %v1440 = vpack.c.b16 %v1128, %v1104
      %v1441 = vpack.c.b16 %v1129, %v1105
      %v1442 = vpack.c.b16 %v1130, %v1106
      %v1443 = vpack.c.b16 %v1131, %v1107
      %v1444 = vpack.c.b16 %v1132, %v1108
      %v1445 = vpack.c.b16 %v1133, %v1109
      %v1446 = vpack.c.b16 %v1134, %v1110
      %v1447 = vpack.c.b16 %v1135, %v1111
      %v1448 = vpack.c.b16 %v1136, %v1112
      %v1449 = vpack.c.b16 %v1137, %v1113
      %v1450 = vpack.c.b16 %v1138, %v1114
      %v1451 = vpack.c.b16 %v1139, %v1115
      %v1452 = vpack.c.b16 %v1140, %v1116
      %v1453 = vpack.c.b16 %v1141, %v1117
      %v1454 = vpack.c.b16 %v1142, %v1118
      %v1455 = vpack.c.b16 %v1143, %v1119
      %v1456 = vpack.c.b16 %v1144, %v1120
      %v1457 = vpack.c.b16 %v1169, %v1145
      %v1458 = vpack.c.b16 %v1170, %v1146
      %v1459 = vpack.c.b16 %v1171, %v1147
      %v1460 = vpack.c.b16 %v1172, %v1148
      %v1461 = vpack.c.b16 %v1173, %v1149
      %v1462 = vpack.c.b16 %v1174, %v1150
      %v1463 = vpack.c.b16 %v1175, %v1151
      %v1464 = vpack.c.b16 %v1176, %v1152
      %v1465 = vpack.c.b16 %v1177, %v1153
      %v1466 = vpack.c.b16 %v1178, %v1154
      %v1467 = vpack.c.b16 %v1179, %v1155
      %v1468 = vpack.c.b16 %v1180, %v1156
      %v1469 = vpack.c.b16 %v1181, %v1157
      %v1470 = vpack.c.b16 %v1182, %v1158
      %v1471 = vpack.c.b16 %v1183, %v1159
      %v1472 = vpack.c.b16 %v1184, %v1160
      %v1473 = vpack.c.b16 %v1185, %v1161
      %v1474 = vpack.c.b16 %v1186, %v1162
      %v1475 = vpack.c.b16 %v1187, %v1163
      %v1476 = vpack.c.b16 %v1188, %v1164
      %v1477 = vpack.c.b16 %v1189, %v1165
      %v1478 = vpack.c.b16 %v1190, %v1166
      %v1479 = vpack.c.b16 %v1191, %v1167
      %v1480 = vpack.c.b16 %v1192, %v1168
      %v1481 = vpack.c.b16 %v1217, %v1193
      %v1482 = vpack.c.b16 %v1218, %v1194
      %v1483 = vpack.c.b16 %v1219, %v1195
      %v1484 = vpack.c.b16 %v1220, %v1196
      %v1485 = vpack.c.b16 %v1221, %v1197
      %v1486 = vpack.c.b16 %v1222, %v1198
      %v1487 = vpack.c.b16 %v1223, %v1199
      %v1488 = vpack.c.b16 %v1224, %v1200
      %v1489 = vpack.c.b16 %v1225, %v1201
      %v1490 = vpack.c.b16 %v1226, %v1202
      %v1491 = vpack.c.b16 %v1227, %v1203
      %v1492 = vpack.c.b16 %v1228, %v1204
      %v1493 = vpack.c.b16 %v1229, %v1205
      %v1494 = vpack.c.b16 %v1230, %v1206
      %v1495 = vpack.c.b16 %v1231, %v1207
      %v1496 = vpack.c.b16 %v1232, %v1208
      %v1497 = vpack.c.b16 %v1233, %v1209
      %v1498 = vpack.c.b16 %v1234, %v1210
      %v1499 = vpack.c.b16 %v1235, %v1211
      %v1500 = vpack.c.b16 %v1236, %v1212
      %v1501 = vpack.c.b16 %v1237, %v1213
      %v1502 = vpack.c.b16 %v1238, %v1214
      %v1503 = vpack.c.b16 %v1239, %v1215
      %v1504 = vpack.c.b16 %v1240, %v1216
      %v1505 = vpack.c.b16 %v1265, %v1241
      %v1506 = vpack.c.b16 %v1266, %v1242
      %v1507 = vpack.c.b16 %v1267, %v1243
      %v1508 = vpack.c.b16 %v1268, %v1244
      %v1509 = vpack.c.b16 %v1269, %v1245
      %v1510 = vpack.c.b16 %v1270, %v1246
      %v1511 = vpack.c.b16 %v1271, %v1247
      %v1512 = vpack.c.b16 %v1272, %v1248
      %v1513 = vpack.c.b16 %v1273, %v1249
      %v1514 = vpack.c.b16 %v1274, %v1250
      %v1515 = vpack.c.b16 %v1275, %v1251
      %v1516 = vpack.c.b16 %v1276, %v1252
      %v1517 = vpack.c.b16 %v1277, %v1253
      %v1518 = vpack.c.b16 %v1278, %v1254
      %v1519 = vpack.c.b16 %v1279, %v1255
      %v1520 = vpack.c.b16 %v1280, %v1256
      %v1521 = vpack.c.b16 %v1281, %v1257
      %v1522 = vpack.c.b16 %v1282, %v1258
      %v1523 = vpack.c.b16 %v1283, %v1259
      %v1524 = vpack.c.b16 %v1284, %v1260
      %v1525 = vpack.c.b16 %v1285, %v1261
      %v1526 = vpack.c.b16 %v1286, %v1262
      %v1527 = vpack.c.b16 %v1287, %v1263
      %v1528 = vpack.c.b16 %v1288, %v1264
      %v1529 = vpack.c.b16 %v1313, %v1289
      %v1530 = vpack.c.b16 %v1314, %v1290
      %v1531 = vpack.c.b16 %v1315, %v1291
      %v1532 = vpack.c.b16 %v1316, %v1292
      %v1533 = vpack.c.b16 %v1317, %v1293
      %v1534 = vpack.c.b16 %v1318, %v1294
      %v1535 = vpack.c.b16 %v1319, %v1295
      %v1536 = vpack.c.b16 %v1320, %v1296
      %v1537 = vpack.c.b16 %v1321, %v1297
      %v1538 = vpack.c.b16 %v1322, %v1298
      %v1539 = vpack.c.b16 %v1323, %v1299
      %v1540 = vpack.c.b16 %v1324, %v1300
      %v1541 = vpack.c.b16 %v1325, %v1301
      %v1542 = vpack.c.b16 %v1326, %v1302
      %v1543 = vpack.c.b16 %v1327, %v1303
      %v1544 = vpack.c.b16 %v1328, %v1304
      %v1545 = vpack.c.b16 %v1329, %v1305
      %v1546 = vpack.c.b16 %v1330, %v1306
      %v1547 = vpack.c.b16 %v1331, %v1307
      %v1548 = vpack.c.b16 %v1332, %v1308
      %v1549 = vpack.c.b16 %v1333, %v1309
      %v1550 = vpack.c.b16 %v1334, %v1310
      %v1551 = vpack.c.b16 %v1335, %v1311
      %v1552 = vpack.c.b16 %v1336, %v1312
      %v1553 = vpack.c.b16 %v1361, %v1337
      %v1554 = vpack.c.b16 %v1362, %v1338
      %v1555 = vpack.c.b16 %v1363, %v1339
      %v1556 = vpack.c.b16 %v1364, %v1340
      %v1557 = vpack.c.b16 %v1365, %v1341
      %v1558 = vpack.c.b16 %v1366, %v1342
      %v1559 = vpack.c.b16 %v1367, %v1343
      %v1560 = vpack.c.b16 %v1368, %v1344
      %v1561 = vpack.c.b16 %v1369, %v1345
      %v1562 = vpack.c.b16 %v1370, %v1346
      %v1563 = vpack.c.b16 %v1371, %v1347
      %v1564 = vpack.c.b16 %v1372, %v1348
      %v1565 = vpack.c.b16 %v1373, %v1349
      %v1566 = vpack.c.b16 %v1374, %v1350
      %v1567 = vpack.c.b16 %v1375, %v1351
      %v1568 = vpack.c.b16 %v1376, %v1352
      %v1569 = vpack.c.b16 %v1377, %v1353
      %v1570 = vpack.c.b16 %v1378, %v1354
      %v1571 = vpack.c.b16 %v1379, %v1355
      %v1572 = vpack.c.b16 %v1380, %v1356
      %v1573 = vpack.c.b16 %v1381, %v1357
      %v1574 = vpack.c.b16 %v1382, %v1358
      %v1575 = vpack.c.b16 %v1383, %v1359
      %v1576 = vpack.c.b16 %v1384, %v1360
      %v2153 = vunpack.c.l.b16 %v424
      %v2154 = vunpack.c.l.b16 %v425
      %v2155 = vunpack.c.l.b16 %v426
      %v2156 = vunpack.c.l.b16 %v427
      %v2157 = vunpack.c.l.b16 %v428
      %v2158 = vunpack.c.l.b16 %v429
      %v2159 = vunpack.c.l.b16 %v430
      %v2160 = vunpack.c.l.b16 %v431
      %v2161 = vunpack.c.l.b16 %v432
      %v2162 = vunpack.c.l.b16 %v433
      %v2163 = vunpack.c.l.b16 %v434
      %v2164 = vunpack.c.l.b16 %v435
      %v2165 = vunpack.c.l.b16 %v436
      %v2166 = vunpack.c.l.b16 %v437
      %v2167 = vunpack.c.l.b16 %v438
      %v2168 = vunpack.c.l.b16 %v439
      %v2169 = vunpack.c.l.b16 %v440
      %v2170 = vunpack.c.l.b16 %v441
      %v2171 = vunpack.c.l.b16 %v442
      %v2172 = vunpack.c.l.b16 %v443
      %v2173 = vunpack.c.l.b16 %v444
      %v2174 = vunpack.c.l.b16 %v445
      %v2175 = vunpack.c.l.b16 %v446
      %v2176 = vunpack.c.l.b16 %v447
      %v2177 = vunpack.c.l.b16 %v448
      %v2178 = vunpack.c.l.b16 %v449
      %v2179 = vunpack.c.l.b16 %v450
      %v2180 = vunpack.c.l.b16 %v451
      %v2181 = vunpack.c.l.b16 %v452
      %v2182 = vunpack.c.l.b16 %v453
      %v2183 = vunpack.c.l.b16 %v454
      %v2184 = vunpack.c.l.b16 %v455
      %v2185 = vunpack.c.l.b16 %v456
      %v2186 = vunpack.c.l.b16 %v457
      %v2187 = vunpack.c.l.b16 %v458
      %v2188 = vunpack.c.l.b16 %v459
      %v2189 = vunpack.c.l.b16 %v460
      %v2190 = vunpack.c.l.b16 %v461
      %v2191 = vunpack.c.l.b16 %v462
      %v2192 = vunpack.c.l.b16 %v463
      %v2193 = vunpack.c.l.b16 %v464
      %v2194 = vunpack.c.l.b16 %v465
      %v2195 = vunpack.c.l.b16 %v466
      %v2196 = vunpack.c.l.b16 %v467
      %v2197 = vunpack.c.l.b16 %v468
      %v2198 = vunpack.c.l.b16 %v469
      %v2199 = vunpack.c.l.b16 %v470
      %v2200 = vunpack.c.l.b16 %v471
      %v2201 = vunpack.c.l.b16 %v472
      %v2202 = vunpack.c.l.b16 %v473
      %v2203 = vunpack.c.l.b16 %v474
      %v2204 = vunpack.c.l.b16 %v475
      %v2205 = vunpack.c.l.b16 %v476
      %v2206 = vunpack.c.l.b16 %v477
      %v2207 = vunpack.c.l.b16 %v478
      %v2208 = vunpack.c.l.b16 %v479
      %v2209 = vunpack.c.l.b16 %v480
      %v2210 = vunpack.c.l.b16 %v481
      %v2211 = vunpack.c.l.b16 %v482
      %v2212 = vunpack.c.l.b16 %v483
      %v2213 = vunpack.c.l.b16 %v484
      %v2214 = vunpack.c.l.b16 %v485
      %v2215 = vunpack.c.l.b16 %v486
      %v2216 = vunpack.c.l.b16 %v487
      %v2217 = vunpack.c.l.b16 %v488
      %v2218 = vunpack.c.l.b16 %v489
      %v2219 = vunpack.c.l.b16 %v490
      %v2220 = vunpack.c.l.b16 %v491
      %v2221 = vunpack.c.l.b16 %v492
      %v2222 = vunpack.c.l.b16 %v493
      %v2223 = vunpack.c.l.b16 %v494
      %v2224 = vunpack.c.l.b16 %v495
      %v2225 = vunpack.c.l.b16 %v496
      %v2226 = vunpack.c.l.b16 %v497
      %v2227 = vunpack.c.l.b16 %v498
      %v2228 = vunpack.c.l.b16 %v499
      %v2229 = vunpack.c.l.b16 %v500
      %v2230 = vunpack.c.l.b16 %v501
      %v2231 = vunpack.c.l.b16 %v502
      %v2232 = vunpack.c.l.b16 %v503
      %v2233 = vunpack.c.l.b16 %v504
      %v2234 = vunpack.c.l.b16 %v505
      %v2235 = vunpack.c.l.b16 %v506
      %v2236 = vunpack.c.l.b16 %v507
      %v2237 = vunpack.c.l.b16 %v508
      %v2238 = vunpack.c.l.b16 %v509
      %v2239 = vunpack.c.l.b16 %v510
      %v2240 = vunpack.c.l.b16 %v511
      %v2241 = vunpack.c.l.b16 %v512
      %v2242 = vunpack.c.l.b16 %v513
      %v2243 = vunpack.c.l.b16 %v514
      %v2244 = vunpack.c.l.b16 %v515
      %v2245 = vunpack.c.l.b16 %v516
      %v2246 = vunpack.c.l.b16 %v517
      %v2247 = vunpack.c.l.b16 %v518
      %v2248 = vunpack.c.l.b16 %v519
      %v2249 = vunpack.c.l.b16 %v520
      %v2250 = vunpack.c.l.b16 %v521
      %v2251 = vunpack.c.l.b16 %v522
      %v2252 = vunpack.c.l.b16 %v523
      %v2253 = vunpack.c.l.b16 %v524
      %v2254 = vunpack.c.l.b16 %v525
      %v2255 = vunpack.c.l.b16 %v526
      %v2256 = vunpack.c.l.b16 %v527
      %v2257 = vunpack.c.l.b16 %v528
      %v2258 = vunpack.c.l.b16 %v529
      %v2259 = vunpack.c.l.b16 %v530
      %v2260 = vunpack.c.l.b16 %v531
      %v2261 = vunpack.c.l.b16 %v532
      %v2262 = vunpack.c.l.b16 %v533
      %v2263 = vunpack.c.l.b16 %v534
      %v2264 = vunpack.c.l.b16 %v535
      %v2265 = vunpack.c.l.b16 %v536
      %v2266 = vunpack.c.l.b16 %v537
      %v2267 = vunpack.c.l.b16 %v538
      %v2268 = vunpack.c.l.b16 %v539
      %v2269 = vunpack.c.l.b16 %v540
      %v2270 = vunpack.c.l.b16 %v541
      %v2271 = vunpack.c.l.b16 %v542
      %v2272 = vunpack.c.l.b16 %v543
      %v2273 = vunpack.c.l.b16 %v544
      %v2274 = vunpack.c.l.b16 %v545
      %v2275 = vunpack.c.l.b16 %v546
      %v2276 = vunpack.c.l.b16 %v547
      %v2277 = vunpack.c.l.b16 %v548
      %v2278 = vunpack.c.l.b16 %v549
      %v2279 = vunpack.c.l.b16 %v550
      %v2280 = vunpack.c.l.b16 %v551
      %v2281 = vunpack.c.l.b16 %v552
      %v2282 = vunpack.c.l.b16 %v553
      %v2283 = vunpack.c.l.b16 %v554
      %v2284 = vunpack.c.l.b16 %v555
      %v2285 = vunpack.c.l.b16 %v556
      %v2286 = vunpack.c.l.b16 %v557
      %v2287 = vunpack.c.l.b16 %v558
      %v2288 = vunpack.c.l.b16 %v559
      %v2289 = vunpack.c.l.b16 %v560
      %v2290 = vunpack.c.l.b16 %v561
      %v2291 = vunpack.c.l.b16 %v562
      %v2292 = vunpack.c.l.b16 %v563
      %v2293 = vunpack.c.l.b16 %v564
      %v2294 = vunpack.c.l.b16 %v565
      %v2295 = vunpack.c.l.b16 %v566
      %v2296 = vunpack.c.l.b16 %v567
      %v2297 = vunpack.c.l.b16 %v568
      %v2298 = vunpack.c.l.b16 %v569
      %v2299 = vunpack.c.l.b16 %v570
      %v2300 = vunpack.c.l.b16 %v571
      %v2301 = vunpack.c.l.b16 %v572
      %v2302 = vunpack.c.l.b16 %v573
      %v2303 = vunpack.c.l.b16 %v574
      %v2304 = vunpack.c.l.b16 %v575
      %v2305 = vunpack.c.l.b16 %v576
      %v2306 = vunpack.c.l.b16 %v577
      %v2307 = vunpack.c.l.b16 %v578
      %v2308 = vunpack.c.l.b16 %v579
      %v2309 = vunpack.c.l.b16 %v580
      %v2310 = vunpack.c.l.b16 %v581
      %v2311 = vunpack.c.l.b16 %v582
      %v2312 = vunpack.c.l.b16 %v583
      %v2313 = vunpack.c.l.b16 %v584
      %v2314 = vunpack.c.l.b16 %v585
      %v2315 = vunpack.c.l.b16 %v586
      %v2316 = vunpack.c.l.b16 %v587
      %v2317 = vunpack.c.l.b16 %v588
      %v2318 = vunpack.c.l.b16 %v589
      %v2319 = vunpack.c.l.b16 %v590
      %v2320 = vunpack.c.l.b16 %v591
      %v2321 = vunpack.c.l.b16 %v592
      %v2322 = vunpack.c.l.b16 %v593
      %v2323 = vunpack.c.l.b16 %v594
      %v2324 = vunpack.c.l.b16 %v595
      %v2325 = vunpack.c.l.b16 %v596
      %v2326 = vunpack.c.l.b16 %v597
      %v2327 = vunpack.c.l.b16 %v598
      %v2328 = vunpack.c.l.b16 %v599
      %v2329 = vunpack.c.l.b16 %v600
      %v2330 = vunpack.c.l.b16 %v601
      %v2331 = vunpack.c.l.b16 %v602
      %v2332 = vunpack.c.l.b16 %v603
      %v2333 = vunpack.c.l.b16 %v604
      %v2334 = vunpack.c.l.b16 %v605
      %v2335 = vunpack.c.l.b16 %v606
      %v2336 = vunpack.c.l.b16 %v607
      %v2337 = vunpack.c.l.b16 %v608
      %v2338 = vunpack.c.l.b16 %v609
      %v2339 = vunpack.c.l.b16 %v610
      %v2340 = vunpack.c.l.b16 %v611
      %v2341 = vunpack.c.l.b16 %v612
      %v2342 = vunpack.c.l.b16 %v613
      %v2343 = vunpack.c.l.b16 %v614
      %v2344 = vunpack.c.l.b16 %v615
      %v2345 = vunpack.c.l.b16 %v616
      %v2346 = vunpack.c.l.b16 %v617
      %v2347 = vunpack.c.l.b16 %v618
      %v2348 = vunpack.c.l.b16 %v619
      %v2349 = vunpack.c.l.b16 %v620
      %v2350 = vunpack.c.l.b16 %v621
      %v2351 = vunpack.c.l.b16 %v622
      %v2352 = vunpack.c.l.b16 %v623
      %v2353 = vunpack.c.l.b16 %v624
      %v2354 = vunpack.c.l.b16 %v625
      %v2355 = vunpack.c.l.b16 %v626
      %v2356 = vunpack.c.l.b16 %v627
      %v2357 = vunpack.c.l.b16 %v628
      %v2358 = vunpack.c.l.b16 %v629
      %v2359 = vunpack.c.l.b16 %v630
      %v2360 = vunpack.c.l.b16 %v631
      %v2361 = vunpack.c.l.b16 %v632
      %v2362 = vunpack.c.l.b16 %v633
      %v2363 = vunpack.c.l.b16 %v634
      %v2364 = vunpack.c.l.b16 %v635
      %v2365 = vunpack.c.l.b16 %v636
      %v2366 = vunpack.c.l.b16 %v637
      %v2367 = vunpack.c.l.b16 %v638
      %v2368 = vunpack.c.l.b16 %v639
      %v2369 = vunpack.c.l.b16 %v640
      %v2370 = vunpack.c.l.b16 %v641
      %v2371 = vunpack.c.l.b16 %v642
      %v2372 = vunpack.c.l.b16 %v643
      %v2373 = vunpack.c.l.b16 %v644
      %v2374 = vunpack.c.l.b16 %v645
      %v2375 = vunpack.c.l.b16 %v646
      %v2376 = vunpack.c.l.b16 %v647
      %v2377 = vunpack.c.l.b16 %v648
      %v2378 = vunpack.c.l.b16 %v649
      %v2379 = vunpack.c.l.b16 %v650
      %v2380 = vunpack.c.l.b16 %v651
      %v2381 = vunpack.c.l.b16 %v652
      %v2382 = vunpack.c.l.b16 %v653
      %v2383 = vunpack.c.l.b16 %v654
      %v2384 = vunpack.c.l.b16 %v655
      %v2385 = vunpack.c.l.b16 %v656
      %v2386 = vunpack.c.l.b16 %v657
      %v2387 = vunpack.c.l.b16 %v658
      %v2388 = vunpack.c.l.b16 %v659
      %v2389 = vunpack.c.l.b16 %v660
      %v2390 = vunpack.c.l.b16 %v661
      %v2391 = vunpack.c.l.b16 %v662
      %v2392 = vunpack.c.l.b16 %v663
      %v2393 = vunpack.c.l.b16 %v664
      %v2394 = vunpack.c.l.b16 %v665
      %v2395 = vunpack.c.l.b16 %v666
      %v2396 = vunpack.c.l.b16 %v667
      %v2397 = vunpack.c.l.b16 %v668
      %v2398 = vunpack.c.l.b16 %v669
      %v2399 = vunpack.c.l.b16 %v670
      %v2400 = vunpack.c.l.b16 %v671
      %v2401 = vunpack.c.l.b16 %v672
      %v2402 = vunpack.c.l.b16 %v673
      %v2403 = vunpack.c.l.b16 %v674
      %v2404 = vunpack.c.l.b16 %v675
      %v2405 = vunpack.c.l.b16 %v676
      %v2406 = vunpack.c.l.b16 %v677
      %v2407 = vunpack.c.l.b16 %v678
      %v2408 = vunpack.c.l.b16 %v679
      %v2409 = vunpack.c.l.b16 %v680
      %v2410 = vunpack.c.l.b16 %v681
      %v2411 = vunpack.c.l.b16 %v682
      %v2412 = vunpack.c.l.b16 %v683
      %v2413 = vunpack.c.l.b16 %v684
      %v2414 = vunpack.c.l.b16 %v685
      %v2415 = vunpack.c.l.b16 %v686
      %v2416 = vunpack.c.l.b16 %v687
      %v2417 = vunpack.c.l.b16 %v688
      %v2418 = vunpack.c.l.b16 %v689
      %v2419 = vunpack.c.l.b16 %v690
      %v2420 = vunpack.c.l.b16 %v691
      %v2421 = vunpack.c.l.b16 %v692
      %v2422 = vunpack.c.l.b16 %v693
      %v2423 = vunpack.c.l.b16 %v694
      %v2424 = vunpack.c.l.b16 %v695
      %v2425 = vunpack.c.l.b16 %v696
      %v2426 = vunpack.c.l.b16 %v697
      %v2427 = vunpack.c.l.b16 %v698
      %v2428 = vunpack.c.l.b16 %v699
      %v2429 = vunpack.c.l.b16 %v700
      %v2430 = vunpack.c.l.b16 %v701
      %v2431 = vunpack.c.l.b16 %v702
      %v2432 = vunpack.c.l.b16 %v703
      %v2433 = vunpack.c.l.b16 %v704
      %v2434 = vunpack.c.l.b16 %v705
      %v2435 = vunpack.c.l.b16 %v706
      %v2436 = vunpack.c.l.b16 %v707
      %v2437 = vunpack.c.l.b16 %v708
      %v2438 = vunpack.c.l.b16 %v709
      %v2439 = vunpack.c.l.b16 %v710
      %v2440 = vunpack.c.l.b16 %v711
      %v2441 = vunpack.c.l.b16 %v712
      %v2442 = vunpack.c.l.b16 %v713
      %v2443 = vunpack.c.l.b16 %v714
      %v2444 = vunpack.c.l.b16 %v715
      %v2445 = vunpack.c.l.b16 %v716
      %v2446 = vunpack.c.l.b16 %v717
      %v2447 = vunpack.c.l.b16 %v718
      %v2448 = vunpack.c.l.b16 %v719
      %v2449 = vunpack.c.l.b16 %v720
      %v2450 = vunpack.c.l.b16 %v721
      %v2451 = vunpack.c.l.b16 %v722
      %v2452 = vunpack.c.l.b16 %v723
      %v2453 = vunpack.c.l.b16 %v724
      %v2454 = vunpack.c.l.b16 %v725
      %v2455 = vunpack.c.l.b16 %v726
      %v2456 = vunpack.c.l.b16 %v727
      %v2457 = vunpack.c.l.b16 %v728
      %v2458 = vunpack.c.l.b16 %v729
      %v2459 = vunpack.c.l.b16 %v730
      %v2460 = vunpack.c.l.b16 %v731
      %v2461 = vunpack.c.l.b16 %v732
      %v2462 = vunpack.c.l.b16 %v733
      %v2463 = vunpack.c.l.b16 %v734
      %v2464 = vunpack.c.l.b16 %v735
      %v2465 = vunpack.c.l.b16 %v736
      %v2466 = vunpack.c.l.b16 %v737
      %v2467 = vunpack.c.l.b16 %v738
      %v2468 = vunpack.c.l.b16 %v739
      %v2469 = vunpack.c.l.b16 %v740
      %v2470 = vunpack.c.l.b16 %v741
      %v2471 = vunpack.c.l.b16 %v742
      %v2472 = vunpack.c.l.b16 %v743
      %v2473 = vunpack.c.l.b16 %v744
      %v2474 = vunpack.c.l.b16 %v745
      %v2475 = vunpack.c.l.b16 %v746
      %v2476 = vunpack.c.l.b16 %v747
      %v2477 = vunpack.c.l.b16 %v748
      %v2478 = vunpack.c.l.b16 %v749
      %v2479 = vunpack.c.l.b16 %v750
      %v2480 = vunpack.c.l.b16 %v751
      %v2481 = vunpack.c.l.b16 %v752
      %v2482 = vunpack.c.l.b16 %v753
      %v2483 = vunpack.c.l.b16 %v754
      %v2484 = vunpack.c.l.b16 %v755
      %v2485 = vunpack.c.l.b16 %v756
      %v2486 = vunpack.c.l.b16 %v757
      %v2487 = vunpack.c.l.b16 %v758
      %v2488 = vunpack.c.l.b16 %v759
      %v2489 = vunpack.c.l.b16 %v760
      %v2490 = vunpack.c.l.b16 %v761
      %v2491 = vunpack.c.l.b16 %v762
      %v2492 = vunpack.c.l.b16 %v763
      %v2493 = vunpack.c.l.b16 %v764
      %v2494 = vunpack.c.l.b16 %v765
      %v2495 = vunpack.c.l.b16 %v766
      %v2496 = vunpack.c.l.b16 %v767
      %v2497 = vunpack.c.l.b16 %v768
      %v2498 = vunpack.c.l.b16 %v769
      %v2499 = vunpack.c.l.b16 %v770
      %v2500 = vunpack.c.l.b16 %v771
      %v2501 = vunpack.c.l.b16 %v772
      %v2502 = vunpack.c.l.b16 %v773
      %v2503 = vunpack.c.l.b16 %v774
      %v2504 = vunpack.c.l.b16 %v775
      %v2505 = vunpack.c.l.b16 %v776
      %v2506 = vunpack.c.l.b16 %v777
      %v2507 = vunpack.c.l.b16 %v778
      %v2508 = vunpack.c.l.b16 %v779
      %v2509 = vunpack.c.l.b16 %v780
      %v2510 = vunpack.c.l.b16 %v781
      %v2511 = vunpack.c.l.b16 %v782
      %v2512 = vunpack.c.l.b16 %v783
      %v2513 = vunpack.c.l.b16 %v784
      %v2514 = vunpack.c.l.b16 %v785
      %v2515 = vunpack.c.l.b16 %v786
      %v2516 = vunpack.c.l.b16 %v787
      %v2517 = vunpack.c.l.b16 %v788
      %v2518 = vunpack.c.l.b16 %v789
      %v2519 = vunpack.c.l.b16 %v790
      %v2520 = vunpack.c.l.b16 %v791
      %v2521 = vunpack.c.l.b16 %v792
      %v2522 = vunpack.c.l.b16 %v793
      %v2523 = vunpack.c.l.b16 %v794
      %v2524 = vunpack.c.l.b16 %v795
      %v2525 = vunpack.c.l.b16 %v796
      %v2526 = vunpack.c.l.b16 %v797
      %v2527 = vunpack.c.l.b16 %v798
      %v2528 = vunpack.c.l.b16 %v799
      %v2529 = vunpack.c.l.b16 %v800
      %v2530 = vunpack.c.l.b16 %v801
      %v2531 = vunpack.c.l.b16 %v802
      %v2532 = vunpack.c.l.b16 %v803
      %v2533 = vunpack.c.l.b16 %v804
      %v2534 = vunpack.c.l.b16 %v805
      %v2535 = vunpack.c.l.b16 %v806
      %v2536 = vunpack.c.l.b16 %v807
      %v2537 = vpack.c.b16 %v2154, %v2153
      %v2538 = vpack.c.b16 %v2156, %v2155
      %v2539 = vpack.c.b16 %v2158, %v2157
      %v2540 = vpack.c.b16 %v2160, %v2159
      %v2541 = vpack.c.b16 %v2162, %v2161
      %v2542 = vpack.c.b16 %v2164, %v2163
      %v2543 = vpack.c.b16 %v2166, %v2165
      %v2544 = vpack.c.b16 %v2168, %v2167
      %v2545 = vpack.c.b16 %v2170, %v2169
      %v2546 = vpack.c.b16 %v2172, %v2171
      %v2547 = vpack.c.b16 %v2174, %v2173
      %v2548 = vpack.c.b16 %v2176, %v2175
      %v2549 = vpack.c.b16 %v2178, %v2177
      %v2550 = vpack.c.b16 %v2180, %v2179
      %v2551 = vpack.c.b16 %v2182, %v2181
      %v2552 = vpack.c.b16 %v2184, %v2183
      %v2553 = vpack.c.b16 %v2186, %v2185
      %v2554 = vpack.c.b16 %v2188, %v2187
      %v2555 = vpack.c.b16 %v2190, %v2189
      %v2556 = vpack.c.b16 %v2192, %v2191
      %v2557 = vpack.c.b16 %v2194, %v2193
      %v2558 = vpack.c.b16 %v2196, %v2195
      %v2559 = vpack.c.b16 %v2198, %v2197
      %v2560 = vpack.c.b16 %v2200, %v2199
      %v2561 = vpack.c.b16 %v2202, %v2201
      %v2562 = vpack.c.b16 %v2204, %v2203
      %v2563 = vpack.c.b16 %v2206, %v2205
      %v2564 = vpack.c.b16 %v2208, %v2207
      %v2565 = vpack.c.b16 %v2210, %v2209
      %v2566 = vpack.c.b16 %v2212, %v2211
      %v2567 = vpack.c.b16 %v2214, %v2213
      %v2568 = vpack.c.b16 %v2216, %v2215
      %v2569 = vpack.c.b16 %v2218, %v2217
      %v2570 = vpack.c.b16 %v2220, %v2219
      %v2571 = vpack.c.b16 %v2222, %v2221
      %v2572 = vpack.c.b16 %v2224, %v2223
      %v2573 = vpack.c.b16 %v2226, %v2225
      %v2574 = vpack.c.b16 %v2228, %v2227
      %v2575 = vpack.c.b16 %v2230, %v2229
      %v2576 = vpack.c.b16 %v2232, %v2231
      %v2577 = vpack.c.b16 %v2234, %v2233
      %v2578 = vpack.c.b16 %v2236, %v2235
      %v2579 = vpack.c.b16 %v2238, %v2237
      %v2580 = vpack.c.b16 %v2240, %v2239
      %v2581 = vpack.c.b16 %v2242, %v2241
      %v2582 = vpack.c.b16 %v2244, %v2243
      %v2583 = vpack.c.b16 %v2246, %v2245
      %v2584 = vpack.c.b16 %v2248, %v2247
      %v2585 = vpack.c.b16 %v2250, %v2249
      %v2586 = vpack.c.b16 %v2252, %v2251
      %v2587 = vpack.c.b16 %v2254, %v2253
      %v2588 = vpack.c.b16 %v2256, %v2255
      %v2589 = vpack.c.b16 %v2258, %v2257
      %v2590 = vpack.c.b16 %v2260, %v2259
      %v2591 = vpack.c.b16 %v2262, %v2261
      %v2592 = vpack.c.b16 %v2264, %v2263
      %v2593 = vpack.c.b16 %v2266, %v2265
      %v2594 = vpack.c.b16 %v2268, %v2267
      %v2595 = vpack.c.b16 %v2270, %v2269
      %v2596 = vpack.c.b16 %v2272, %v2271
      %v2597 = vpack.c.b16 %v2274, %v2273
      %v2598 = vpack.c.b16 %v2276, %v2275
      %v2599 = vpack.c.b16 %v2278, %v2277
      %v2600 = vpack.c.b16 %v2280, %v2279
      %v2601 = vpack.c.b16 %v2282, %v2281
      %v2602 = vpack.c.b16 %v2284, %v2283
      %v2603 = vpack.c.b16 %v2286, %v2285
      %v2604 = vpack.c.b16 %v2288, %v2287
      %v2605 = vpack.c.b16 %v2290, %v2289
      %v2606 = vpack.c.b16 %v2292, %v2291
      %v2607 = vpack.c.b16 %v2294, %v2293
      %v2608 = vpack.c.b16 %v2296, %v2295
      %v2609 = vpack.c.b16 %v2298, %v2297
      %v2610 = vpack.c.b16 %v2300, %v2299
      %v2611 = vpack.c.b16 %v2302, %v2301
      %v2612 = vpack.c.b16 %v2304, %v2303
      %v2613 = vpack.c.b16 %v2306, %v2305
      %v2614 = vpack.c.b16 %v2308, %v2307
      %v2615 = vpack.c.b16 %v2310, %v2309
      %v2616 = vpack.c.b16 %v2312, %v2311
      %v2617 = vpack.c.b16 %v2314, %v2313
      %v2618 = vpack.c.b16 %v2316, %v2315
      %v2619 = vpack.c.b16 %v2318, %v2317
      %v2620 = vpack.c.b16 %v2320, %v2319
      %v2621 = vpack.c.b16 %v2322, %v2321
      %v2622 = vpack.c.b16 %v2324, %v2323
      %v2623 = vpack.c.b16 %v2326, %v2325
      %v2624 = vpack.c.b16 %v2328, %v2327
      %v2625 = vpack.c.b16 %v2330, %v2329
      %v2626 = vpack.c.b16 %v2332, %v2331
      %v2627 = vpack.c.b16 %v2334, %v2333
      %v2628 = vpack.c.b16 %v2336, %v2335
      %v2629 = vpack.c.b16 %v2338, %v2337
      %v2630 = vpack.c.b16 %v2340, %v2339
      %v2631 = vpack.c.b16 %v2342, %v2341
      %v2632 = vpack.c.b16 %v2344, %v2343
      %v2633 = vpack.c.b16 %v2346, %v2345
      %v2634 = vpack.c.b16 %v2348, %v2347
      %v2635 = vpack.c.b16 %v2350, %v2349
      %v2636 = vpack.c.b16 %v2352, %v2351
      %v2637 = vpack.c.b16 %v2354, %v2353
      %v2638 = vpack.c.b16 %v2356, %v2355
      %v2639 = vpack.c.b16 %v2358, %v2357
      %v2640 = vpack.c.b16 %v2360, %v2359
      %v2641 = vpack.c.b16 %v2362, %v2361
      %v2642 = vpack.c.b16 %v2364, %v2363
      %v2643 = vpack.c.b16 %v2366, %v2365
      %v2644 = vpack.c.b16 %v2368, %v2367
      %v2645 = vpack.c.b16 %v2370, %v2369
      %v2646 = vpack.c.b16 %v2372, %v2371
      %v2647 = vpack.c.b16 %v2374, %v2373
      %v2648 = vpack.c.b16 %v2376, %v2375
      %v2649 = vpack.c.b16 %v2378, %v2377
      %v2650 = vpack.c.b16 %v2380, %v2379
      %v2651 = vpack.c.b16 %v2382, %v2381
      %v2652 = vpack.c.b16 %v2384, %v2383
      %v2653 = vpack.c.b16 %v2386, %v2385
      %v2654 = vpack.c.b16 %v2388, %v2387
      %v2655 = vpack.c.b16 %v2390, %v2389
      %v2656 = vpack.c.b16 %v2392, %v2391
      %v2657 = vpack.c.b16 %v2394, %v2393
      %v2658 = vpack.c.b16 %v2396, %v2395
      %v2659 = vpack.c.b16 %v2398, %v2397
      %v2660 = vpack.c.b16 %v2400, %v2399
      %v2661 = vpack.c.b16 %v2402, %v2401
      %v2662 = vpack.c.b16 %v2404, %v2403
      %v2663 = vpack.c.b16 %v2406, %v2405
      %v2664 = vpack.c.b16 %v2408, %v2407
      %v2665 = vpack.c.b16 %v2410, %v2409
      %v2666 = vpack.c.b16 %v2412, %v2411
      %v2667 = vpack.c.b16 %v2414, %v2413
      %v2668 = vpack.c.b16 %v2416, %v2415
      %v2669 = vpack.c.b16 %v2418, %v2417
      %v2670 = vpack.c.b16 %v2420, %v2419
      %v2671 = vpack.c.b16 %v2422, %v2421
      %v2672 = vpack.c.b16 %v2424, %v2423
      %v2673 = vpack.c.b16 %v2426, %v2425
      %v2674 = vpack.c.b16 %v2428, %v2427
      %v2675 = vpack.c.b16 %v2430, %v2429
      %v2676 = vpack.c.b16 %v2432, %v2431
      %v2677 = vpack.c.b16 %v2434, %v2433
      %v2678 = vpack.c.b16 %v2436, %v2435
      %v2679 = vpack.c.b16 %v2438, %v2437
      %v2680 = vpack.c.b16 %v2440, %v2439
      %v2681 = vpack.c.b16 %v2442, %v2441
      %v2682 = vpack.c.b16 %v2444, %v2443
      %v2683 = vpack.c.b16 %v2446, %v2445
      %v2684 = vpack.c.b16 %v2448, %v2447
      %v2685 = vpack.c.b16 %v2450, %v2449
      %v2686 = vpack.c.b16 %v2452, %v2451
      %v2687 = vpack.c.b16 %v2454, %v2453
      %v2688 = vpack.c.b16 %v2456, %v2455
      %v2689 = vpack.c.b16 %v2458, %v2457
      %v2690 = vpack.c.b16 %v2460, %v2459
      %v2691 = vpack.c.b16 %v2462, %v2461
      %v2692 = vpack.c.b16 %v2464, %v2463
      %v2693 = vpack.c.b16 %v2466, %v2465
      %v2694 = vpack.c.b16 %v2468, %v2467
      %v2695 = vpack.c.b16 %v2470, %v2469
      %v2696 = vpack.c.b16 %v2472, %v2471
      %v2697 = vpack.c.b16 %v2474, %v2473
      %v2698 = vpack.c.b16 %v2476, %v2475
      %v2699 = vpack.c.b16 %v2478, %v2477
      %v2700 = vpack.c.b16 %v2480, %v2479
      %v2701 = vpack.c.b16 %v2482, %v2481
      %v2702 = vpack.c.b16 %v2484, %v2483
      %v2703 = vpack.c.b16 %v2486, %v2485
      %v2704 = vpack.c.b16 %v2488, %v2487
      %v2705 = vpack.c.b16 %v2490, %v2489
      %v2706 = vpack.c.b16 %v2492, %v2491
      %v2707 = vpack.c.b16 %v2494, %v2493
      %v2708 = vpack.c.b16 %v2496, %v2495
      %v2709 = vpack.c.b16 %v2498, %v2497
      %v2710 = vpack.c.b16 %v2500, %v2499
      %v2711 = vpack.c.b16 %v2502, %v2501
      %v2712 = vpack.c.b16 %v2504, %v2503
      %v2713 = vpack.c.b16 %v2506, %v2505
      %v2714 = vpack.c.b16 %v2508, %v2507
      %v2715 = vpack.c.b16 %v2510, %v2509
      %v2716 = vpack.c.b16 %v2512, %v2511
      %v2717 = vpack.c.b16 %v2514, %v2513
      %v2718 = vpack.c.b16 %v2516, %v2515
      %v2719 = vpack.c.b16 %v2518, %v2517
      %v2720 = vpack.c.b16 %v2520, %v2519
      %v2721 = vpack.c.b16 %v2522, %v2521
      %v2722 = vpack.c.b16 %v2524, %v2523
      %v2723 = vpack.c.b16 %v2526, %v2525
      %v2724 = vpack.c.b16 %v2528, %v2527
      %v2725 = vpack.c.b16 %v2530, %v2529
      %v2726 = vpack.c.b16 %v2532, %v2531
      %v2727 = vpack.c.b16 %v2534, %v2533
      %v2728 = vpack.c.b16 %v2536, %v2535
      %2921 = vmatpush.bf16.msra.mxu0 %v2544
      %2922 = vmatpush.bf16.msra.mxu0 %v2543
      %2923 = vmatpush.bf16.msra.mxu0 %v2542
      %2924 = vmatpush.bf16.msra.mxu0 %v2541
      %2925 = vmatpush.bf16.msra.mxu0 %v2540
      %2926 = vmatpush.bf16.msra.mxu0 %v2539
      %2927 = vmatpush.bf16.msra.mxu0 %v2538
      %2928 = vmatpush.bf16.msra.mxu0 %v2537
      %2929 = vmatmul.bf16.gmra.mxu0 %v1385
      %v2930 = vpop.f32.mrf.mxu0
      %v2931 = vadd.f32 %v808, %v2930
      %v2932 = vpop.f32.mrf.mxu0
      %v2933 = vadd.f32 %v808, %v2932
      %2934 = vmatmul.bf16.gmra.mxu0 %v1409
      %v2935 = vpop.f32.mrf.mxu0
      %v2936 = vadd.f32 %v808, %v2935
      %v2937 = vpop.f32.mrf.mxu0
      %v2938 = vadd.f32 %v808, %v2937
      %2939 = vmatmul.bf16.gmra.mxu0 %v1433
      %v2940 = vpop.f32.mrf.mxu0
      %v2941 = vadd.f32 %v808, %v2940
      %v2942 = vpop.f32.mrf.mxu0
      %v2943 = vadd.f32 %v808, %v2942
      %2944 = vmatmul.bf16.gmra.mxu0 %v1457
      %v2945 = vpop.f32.mrf.mxu0
      %v2946 = vadd.f32 %v808, %v2945
      %v2947 = vpop.f32.mrf.mxu0
      %v2948 = vadd.f32 %v808, %v2947
      %2949 = vmatmul.bf16.gmra.mxu0 %v1481
      %v2950 = vpop.f32.mrf.mxu0
      %v2951 = vadd.f32 %v808, %v2950
      %v2952 = vpop.f32.mrf.mxu0
      %v2953 = vadd.f32 %v808, %v2952
      %2954 = vmatmul.bf16.gmra.mxu0 %v1505
      %v2955 = vpop.f32.mrf.mxu0
      %v2956 = vadd.f32 %v808, %v2955
      %v2957 = vpop.f32.mrf.mxu0
      %v2958 = vadd.f32 %v808, %v2957
      %2959 = vmatmul.bf16.gmra.mxu0 %v1529
      %v2960 = vpop.f32.mrf.mxu0
      %v2961 = vadd.f32 %v808, %v2960
      %v2962 = vpop.f32.mrf.mxu0
      %v2963 = vadd.f32 %v808, %v2962
      %2964 = vmatmul.bf16.gmra.mxu0 %v1553
      %v2965 = vpop.f32.mrf.mxu0
      %v2966 = vadd.f32 %v808, %v2965
      %v2967 = vpop.f32.mrf.mxu0
      %v2968 = vadd.f32 %v808, %v2967
      %2969 = vdwg.mxu0
      %2970 = vmatpush.bf16.msra.mxu0 %v2552
      %2971 = vmatpush.bf16.msra.mxu0 %v2551
      %2972 = vmatpush.bf16.msra.mxu0 %v2550
      %2973 = vmatpush.bf16.msra.mxu0 %v2549
      %2974 = vmatpush.bf16.msra.mxu0 %v2548
      %2975 = vmatpush.bf16.msra.mxu0 %v2547
      %2976 = vmatpush.bf16.msra.mxu0 %v2546
      %2977 = vmatpush.bf16.msra.mxu0 %v2545
      %2978 = vmatmul.bf16.gmra.mxu0 %v1386
      %v2979 = vpop.f32.mrf.mxu0
      %v2980 = vadd.f32 %v2931, %v2979
      %v2981 = vpop.f32.mrf.mxu0
      %v2982 = vadd.f32 %v2933, %v2981
      %2983 = vmatmul.bf16.gmra.mxu0 %v1410
      %v2984 = vpop.f32.mrf.mxu0
      %v2985 = vadd.f32 %v2936, %v2984
      %v2986 = vpop.f32.mrf.mxu0
      %v2987 = vadd.f32 %v2938, %v2986
      %2988 = vmatmul.bf16.gmra.mxu0 %v1434
      %v2989 = vpop.f32.mrf.mxu0
      %v2990 = vadd.f32 %v2941, %v2989
      %v2991 = vpop.f32.mrf.mxu0
      %v2992 = vadd.f32 %v2943, %v2991
      %2993 = vmatmul.bf16.gmra.mxu0 %v1458
      %v2994 = vpop.f32.mrf.mxu0
      %v2995 = vadd.f32 %v2946, %v2994
      %v2996 = vpop.f32.mrf.mxu0
      %v2997 = vadd.f32 %v2948, %v2996
      %2998 = vmatmul.bf16.gmra.mxu0 %v1482
      %v2999 = vpop.f32.mrf.mxu0
      %v3000 = vadd.f32 %v2951, %v2999
      %v3001 = vpop.f32.mrf.mxu0
      %v3002 = vadd.f32 %v2953, %v3001
      %3003 = vmatmul.bf16.gmra.mxu0 %v1506
      %v3004 = vpop.f32.mrf.mxu0
      %v3005 = vadd.f32 %v2956, %v3004
      %v3006 = vpop.f32.mrf.mxu0
      %v3007 = vadd.f32 %v2958, %v3006
      %3008 = vmatmul.bf16.gmra.mxu0 %v1530
      %v3009 = vpop.f32.mrf.mxu0
      %v3010 = vadd.f32 %v2961, %v3009
      %v3011 = vpop.f32.mrf.mxu0
      %v3012 = vadd.f32 %v2963, %v3011
      %3013 = vmatmul.bf16.gmra.mxu0 %v1554
      %v3014 = vpop.f32.mrf.mxu0
      %v3015 = vadd.f32 %v2966, %v3014
      %v3016 = vpop.f32.mrf.mxu0
      %v3017 = vadd.f32 %v2968, %v3016
      %3018 = vdwg.mxu0
      %3019 = vmatpush.bf16.msra.mxu0 %v2560
      %3020 = vmatpush.bf16.msra.mxu0 %v2559
      %3021 = vmatpush.bf16.msra.mxu0 %v2558
      %3022 = vmatpush.bf16.msra.mxu0 %v2557
      %3023 = vmatpush.bf16.msra.mxu0 %v2556
      %3024 = vmatpush.bf16.msra.mxu0 %v2555
      %3025 = vmatpush.bf16.msra.mxu0 %v2554
      %3026 = vmatpush.bf16.msra.mxu0 %v2553
      %3027 = vmatmul.bf16.gmra.mxu0 %v1387
      %v3028 = vpop.f32.mrf.mxu0
      %v3029 = vadd.f32 %v2980, %v3028
      %v3030 = vpop.f32.mrf.mxu0
      %v3031 = vadd.f32 %v2982, %v3030
      %3032 = vmatmul.bf16.gmra.mxu0 %v1411
      %v3033 = vpop.f32.mrf.mxu0
      %v3034 = vadd.f32 %v2985, %v3033
      %v3035 = vpop.f32.mrf.mxu0
      %v3036 = vadd.f32 %v2987, %v3035
      %3037 = vmatmul.bf16.gmra.mxu0 %v1435
      %v3038 = vpop.f32.mrf.mxu0
      %v3039 = vadd.f32 %v2990, %v3038
      %v3040 = vpop.f32.mrf.mxu0
      %v3041 = vadd.f32 %v2992, %v3040
      %3042 = vmatmul.bf16.gmra.mxu0 %v1459
      %v3043 = vpop.f32.mrf.mxu0
      %v3044 = vadd.f32 %v2995, %v3043
      %v3045 = vpop.f32.mrf.mxu0
      %v3046 = vadd.f32 %v2997, %v3045
      %3047 = vmatmul.bf16.gmra.mxu0 %v1483
      %v3048 = vpop.f32.mrf.mxu0
      %v3049 = vadd.f32 %v3000, %v3048
      %v3050 = vpop.f32.mrf.mxu0
      %v3051 = vadd.f32 %v3002, %v3050
      %3052 = vmatmul.bf16.gmra.mxu0 %v1507
      %v3053 = vpop.f32.mrf.mxu0
      %v3054 = vadd.f32 %v3005, %v3053
      %v3055 = vpop.f32.mrf.mxu0
      %v3056 = vadd.f32 %v3007, %v3055
      %3057 = vmatmul.bf16.gmra.mxu0 %v1531
      %v3058 = vpop.f32.mrf.mxu0
      %v3059 = vadd.f32 %v3010, %v3058
      %v3060 = vpop.f32.mrf.mxu0
      %v3061 = vadd.f32 %v3012, %v3060
      %3062 = vmatmul.bf16.gmra.mxu0 %v1555
      %v3063 = vpop.f32.mrf.mxu0
      %v3064 = vadd.f32 %v3015, %v3063
      %v3065 = vpop.f32.mrf.mxu0
      %v3066 = vadd.f32 %v3017, %v3065
      %3067 = vdwg.mxu0
      %3068 = vmatpush.bf16.msra.mxu0 %v2568
      %3069 = vmatpush.bf16.msra.mxu0 %v2567
      %3070 = vmatpush.bf16.msra.mxu0 %v2566
      %3071 = vmatpush.bf16.msra.mxu0 %v2565
      %3072 = vmatpush.bf16.msra.mxu0 %v2564
      %3073 = vmatpush.bf16.msra.mxu0 %v2563
      %3074 = vmatpush.bf16.msra.mxu0 %v2562
      %3075 = vmatpush.bf16.msra.mxu0 %v2561
      %3076 = vmatmul.bf16.gmra.mxu0 %v1388
      %v3077 = vpop.f32.mrf.mxu0
      %v3078 = vadd.f32 %v3029, %v3077
      %v3079 = vpop.f32.mrf.mxu0
      %v3080 = vadd.f32 %v3031, %v3079
      %3081 = vmatmul.bf16.gmra.mxu0 %v1412
      %v3082 = vpop.f32.mrf.mxu0
      %v3083 = vadd.f32 %v3034, %v3082
      %v3084 = vpop.f32.mrf.mxu0
      %v3085 = vadd.f32 %v3036, %v3084
      %3086 = vmatmul.bf16.gmra.mxu0 %v1436
      %v3087 = vpop.f32.mrf.mxu0
      %v3088 = vadd.f32 %v3039, %v3087
      %v3089 = vpop.f32.mrf.mxu0
      %v3090 = vadd.f32 %v3041, %v3089
      %3091 = vmatmul.bf16.gmra.mxu0 %v1460
      %v3092 = vpop.f32.mrf.mxu0
      %v3093 = vadd.f32 %v3044, %v3092
      %v3094 = vpop.f32.mrf.mxu0
      %v3095 = vadd.f32 %v3046, %v3094
      %3096 = vmatmul.bf16.gmra.mxu0 %v1484
      %v3097 = vpop.f32.mrf.mxu0
      %v3098 = vadd.f32 %v3049, %v3097
      %v3099 = vpop.f32.mrf.mxu0
      %v3100 = vadd.f32 %v3051, %v3099
      %3101 = vmatmul.bf16.gmra.mxu0 %v1508
      %v3102 = vpop.f32.mrf.mxu0
      %v3103 = vadd.f32 %v3054, %v3102
      %v3104 = vpop.f32.mrf.mxu0
      %v3105 = vadd.f32 %v3056, %v3104
      %3106 = vmatmul.bf16.gmra.mxu0 %v1532
      %v3107 = vpop.f32.mrf.mxu0
      %v3108 = vadd.f32 %v3059, %v3107
      %v3109 = vpop.f32.mrf.mxu0
      %v3110 = vadd.f32 %v3061, %v3109
      %3111 = vmatmul.bf16.gmra.mxu0 %v1556
      %v3112 = vpop.f32.mrf.mxu0
      %v3113 = vadd.f32 %v3064, %v3112
      %v3114 = vpop.f32.mrf.mxu0
      %v3115 = vadd.f32 %v3066, %v3114
      %3116 = vdwg.mxu0
      %3117 = vmatpush.bf16.msra.mxu0 %v2576
      %3118 = vmatpush.bf16.msra.mxu0 %v2575
      %3119 = vmatpush.bf16.msra.mxu0 %v2574
      %3120 = vmatpush.bf16.msra.mxu0 %v2573
      %3121 = vmatpush.bf16.msra.mxu0 %v2572
      %3122 = vmatpush.bf16.msra.mxu0 %v2571
      %3123 = vmatpush.bf16.msra.mxu0 %v2570
      %3124 = vmatpush.bf16.msra.mxu0 %v2569
      %3125 = vmatmul.bf16.gmra.mxu0 %v1389
      %v3126 = vpop.f32.mrf.mxu0
      %v3127 = vadd.f32 %v3078, %v3126
      %v3128 = vpop.f32.mrf.mxu0
      %v3129 = vadd.f32 %v3080, %v3128
      %3130 = vmatmul.bf16.gmra.mxu0 %v1413
      %v3131 = vpop.f32.mrf.mxu0
      %v3132 = vadd.f32 %v3083, %v3131
      %v3133 = vpop.f32.mrf.mxu0
      %v3134 = vadd.f32 %v3085, %v3133
      %3135 = vmatmul.bf16.gmra.mxu0 %v1437
      %v3136 = vpop.f32.mrf.mxu0
      %v3137 = vadd.f32 %v3088, %v3136
      %v3138 = vpop.f32.mrf.mxu0
      %v3139 = vadd.f32 %v3090, %v3138
      %3140 = vmatmul.bf16.gmra.mxu0 %v1461
      %v3141 = vpop.f32.mrf.mxu0
      %v3142 = vadd.f32 %v3093, %v3141
      %v3143 = vpop.f32.mrf.mxu0
      %v3144 = vadd.f32 %v3095, %v3143
      %3145 = vmatmul.bf16.gmra.mxu0 %v1485
      %v3146 = vpop.f32.mrf.mxu0
      %v3147 = vadd.f32 %v3098, %v3146
      %v3148 = vpop.f32.mrf.mxu0
      %v3149 = vadd.f32 %v3100, %v3148
      %3150 = vmatmul.bf16.gmra.mxu0 %v1509
      %v3151 = vpop.f32.mrf.mxu0
      %v3152 = vadd.f32 %v3103, %v3151
      %v3153 = vpop.f32.mrf.mxu0
      %v3154 = vadd.f32 %v3105, %v3153
      %3155 = vmatmul.bf16.gmra.mxu0 %v1533
      %v3156 = vpop.f32.mrf.mxu0
      %v3157 = vadd.f32 %v3108, %v3156
      %v3158 = vpop.f32.mrf.mxu0
      %v3159 = vadd.f32 %v3110, %v3158
      %3160 = vmatmul.bf16.gmra.mxu0 %v1557
      %v3161 = vpop.f32.mrf.mxu0
      %v3162 = vadd.f32 %v3113, %v3161
      %v3163 = vpop.f32.mrf.mxu0
      %v3164 = vadd.f32 %v3115, %v3163
      %3165 = vdwg.mxu0
      %3166 = vmatpush.bf16.msra.mxu0 %v2584
      %3167 = vmatpush.bf16.msra.mxu0 %v2583
      %3168 = vmatpush.bf16.msra.mxu0 %v2582
      %3169 = vmatpush.bf16.msra.mxu0 %v2581
      %3170 = vmatpush.bf16.msra.mxu0 %v2580
      %3171 = vmatpush.bf16.msra.mxu0 %v2579
      %3172 = vmatpush.bf16.msra.mxu0 %v2578
      %3173 = vmatpush.bf16.msra.mxu0 %v2577
      %3174 = vmatmul.bf16.gmra.mxu0 %v1390
      %v3175 = vpop.f32.mrf.mxu0
      %v3176 = vadd.f32 %v3127, %v3175
      %v3177 = vpop.f32.mrf.mxu0
      %v3178 = vadd.f32 %v3129, %v3177
      %3179 = vmatmul.bf16.gmra.mxu0 %v1414
      %v3180 = vpop.f32.mrf.mxu0
      %v3181 = vadd.f32 %v3132, %v3180
      %v3182 = vpop.f32.mrf.mxu0
      %v3183 = vadd.f32 %v3134, %v3182
      %3184 = vmatmul.bf16.gmra.mxu0 %v1438
      %v3185 = vpop.f32.mrf.mxu0
      %v3186 = vadd.f32 %v3137, %v3185
      %v3187 = vpop.f32.mrf.mxu0
      %v3188 = vadd.f32 %v3139, %v3187
      %3189 = vmatmul.bf16.gmra.mxu0 %v1462
      %v3190 = vpop.f32.mrf.mxu0
      %v3191 = vadd.f32 %v3142, %v3190
      %v3192 = vpop.f32.mrf.mxu0
      %v3193 = vadd.f32 %v3144, %v3192
      %3194 = vmatmul.bf16.gmra.mxu0 %v1486
      %v3195 = vpop.f32.mrf.mxu0
      %v3196 = vadd.f32 %v3147, %v3195
      %v3197 = vpop.f32.mrf.mxu0
      %v3198 = vadd.f32 %v3149, %v3197
      %3199 = vmatmul.bf16.gmra.mxu0 %v1510
      %v3200 = vpop.f32.mrf.mxu0
      %v3201 = vadd.f32 %v3152, %v3200
      %v3202 = vpop.f32.mrf.mxu0
      %v3203 = vadd.f32 %v3154, %v3202
      %3204 = vmatmul.bf16.gmra.mxu0 %v1534
      %v3205 = vpop.f32.mrf.mxu0
      %v3206 = vadd.f32 %v3157, %v3205
      %v3207 = vpop.f32.mrf.mxu0
      %v3208 = vadd.f32 %v3159, %v3207
      %3209 = vmatmul.bf16.gmra.mxu0 %v1558
      %v3210 = vpop.f32.mrf.mxu0
      %v3211 = vadd.f32 %v3162, %v3210
      %v3212 = vpop.f32.mrf.mxu0
      %v3213 = vadd.f32 %v3164, %v3212
      %3214 = vdwg.mxu0
      %3215 = vmatpush.bf16.msra.mxu0 %v2592
      %3216 = vmatpush.bf16.msra.mxu0 %v2591
      %3217 = vmatpush.bf16.msra.mxu0 %v2590
      %3218 = vmatpush.bf16.msra.mxu0 %v2589
      %3219 = vmatpush.bf16.msra.mxu0 %v2588
      %3220 = vmatpush.bf16.msra.mxu0 %v2587
      %3221 = vmatpush.bf16.msra.mxu0 %v2586
      %3222 = vmatpush.bf16.msra.mxu0 %v2585
      %3223 = vmatmul.bf16.gmra.mxu0 %v1391
      %v3224 = vpop.f32.mrf.mxu0
      %v3225 = vadd.f32 %v3176, %v3224
      %v3226 = vpop.f32.mrf.mxu0
      %v3227 = vadd.f32 %v3178, %v3226
      %3228 = vmatmul.bf16.gmra.mxu0 %v1415
      %v3229 = vpop.f32.mrf.mxu0
      %v3230 = vadd.f32 %v3181, %v3229
      %v3231 = vpop.f32.mrf.mxu0
      %v3232 = vadd.f32 %v3183, %v3231
      %3233 = vmatmul.bf16.gmra.mxu0 %v1439
      %v3234 = vpop.f32.mrf.mxu0
      %v3235 = vadd.f32 %v3186, %v3234
      %v3236 = vpop.f32.mrf.mxu0
      %v3237 = vadd.f32 %v3188, %v3236
      %3238 = vmatmul.bf16.gmra.mxu0 %v1463
      %v3239 = vpop.f32.mrf.mxu0
      %v3240 = vadd.f32 %v3191, %v3239
      %v3241 = vpop.f32.mrf.mxu0
      %v3242 = vadd.f32 %v3193, %v3241
      %3243 = vmatmul.bf16.gmra.mxu0 %v1487
      %v3244 = vpop.f32.mrf.mxu0
      %v3245 = vadd.f32 %v3196, %v3244
      %v3246 = vpop.f32.mrf.mxu0
      %v3247 = vadd.f32 %v3198, %v3246
      %3248 = vmatmul.bf16.gmra.mxu0 %v1511
      %v3249 = vpop.f32.mrf.mxu0
      %v3250 = vadd.f32 %v3201, %v3249
      %v3251 = vpop.f32.mrf.mxu0
      %v3252 = vadd.f32 %v3203, %v3251
      %3253 = vmatmul.bf16.gmra.mxu0 %v1535
      %v3254 = vpop.f32.mrf.mxu0
      %v3255 = vadd.f32 %v3206, %v3254
      %v3256 = vpop.f32.mrf.mxu0
      %v3257 = vadd.f32 %v3208, %v3256
      %3258 = vmatmul.bf16.gmra.mxu0 %v1559
      %v3259 = vpop.f32.mrf.mxu0
      %v3260 = vadd.f32 %v3211, %v3259
      %v3261 = vpop.f32.mrf.mxu0
      %v3262 = vadd.f32 %v3213, %v3261
      %3263 = vdwg.mxu0
      %3264 = vmatpush.bf16.msra.mxu0 %v2600
      %3265 = vmatpush.bf16.msra.mxu0 %v2599
      %3266 = vmatpush.bf16.msra.mxu0 %v2598
      %3267 = vmatpush.bf16.msra.mxu0 %v2597
      %3268 = vmatpush.bf16.msra.mxu0 %v2596
      %3269 = vmatpush.bf16.msra.mxu0 %v2595
      %3270 = vmatpush.bf16.msra.mxu0 %v2594
      %3271 = vmatpush.bf16.msra.mxu0 %v2593
      %3272 = vmatmul.bf16.gmra.mxu0 %v1392
      %v3273 = vpop.f32.mrf.mxu0
      %v3274 = vadd.f32 %v3225, %v3273
      %v3275 = vpop.f32.mrf.mxu0
      %v3276 = vadd.f32 %v3227, %v3275
      %3277 = vmatmul.bf16.gmra.mxu0 %v1416
      %v3278 = vpop.f32.mrf.mxu0
      %v3279 = vadd.f32 %v3230, %v3278
      %v3280 = vpop.f32.mrf.mxu0
      %v3281 = vadd.f32 %v3232, %v3280
      %3282 = vmatmul.bf16.gmra.mxu0 %v1440
      %v3283 = vpop.f32.mrf.mxu0
      %v3284 = vadd.f32 %v3235, %v3283
      %v3285 = vpop.f32.mrf.mxu0
      %v3286 = vadd.f32 %v3237, %v3285
      %3287 = vmatmul.bf16.gmra.mxu0 %v1464
      %v3288 = vpop.f32.mrf.mxu0
      %v3289 = vadd.f32 %v3240, %v3288
      %v3290 = vpop.f32.mrf.mxu0
      %v3291 = vadd.f32 %v3242, %v3290
      %3292 = vmatmul.bf16.gmra.mxu0 %v1488
      %v3293 = vpop.f32.mrf.mxu0
      %v3294 = vadd.f32 %v3245, %v3293
      %v3295 = vpop.f32.mrf.mxu0
      %v3296 = vadd.f32 %v3247, %v3295
      %3297 = vmatmul.bf16.gmra.mxu0 %v1512
      %v3298 = vpop.f32.mrf.mxu0
      %v3299 = vadd.f32 %v3250, %v3298
      %v3300 = vpop.f32.mrf.mxu0
      %v3301 = vadd.f32 %v3252, %v3300
      %3302 = vmatmul.bf16.gmra.mxu0 %v1536
      %v3303 = vpop.f32.mrf.mxu0
      %v3304 = vadd.f32 %v3255, %v3303
      %v3305 = vpop.f32.mrf.mxu0
      %v3306 = vadd.f32 %v3257, %v3305
      %3307 = vmatmul.bf16.gmra.mxu0 %v1560
      %v3308 = vpop.f32.mrf.mxu0
      %v3309 = vadd.f32 %v3260, %v3308
      %v3310 = vpop.f32.mrf.mxu0
      %v3311 = vadd.f32 %v3262, %v3310
      %3312 = vdwg.mxu0
      %3313 = vmatpush.bf16.msra.mxu0 %v2608
      %3314 = vmatpush.bf16.msra.mxu0 %v2607
      %3315 = vmatpush.bf16.msra.mxu0 %v2606
      %3316 = vmatpush.bf16.msra.mxu0 %v2605
      %3317 = vmatpush.bf16.msra.mxu0 %v2604
      %3318 = vmatpush.bf16.msra.mxu0 %v2603
      %3319 = vmatpush.bf16.msra.mxu0 %v2602
      %3320 = vmatpush.bf16.msra.mxu0 %v2601
      %3321 = vmatmul.bf16.gmra.mxu0 %v1393
      %v3322 = vpop.f32.mrf.mxu0
      %v3323 = vadd.f32 %v3274, %v3322
      %v3324 = vpop.f32.mrf.mxu0
      %v3325 = vadd.f32 %v3276, %v3324
      %3326 = vmatmul.bf16.gmra.mxu0 %v1417
      %v3327 = vpop.f32.mrf.mxu0
      %v3328 = vadd.f32 %v3279, %v3327
      %v3329 = vpop.f32.mrf.mxu0
      %v3330 = vadd.f32 %v3281, %v3329
      %3331 = vmatmul.bf16.gmra.mxu0 %v1441
      %v3332 = vpop.f32.mrf.mxu0
      %v3333 = vadd.f32 %v3284, %v3332
      %v3334 = vpop.f32.mrf.mxu0
      %v3335 = vadd.f32 %v3286, %v3334
      %3336 = vmatmul.bf16.gmra.mxu0 %v1465
      %v3337 = vpop.f32.mrf.mxu0
      %v3338 = vadd.f32 %v3289, %v3337
      %v3339 = vpop.f32.mrf.mxu0
      %v3340 = vadd.f32 %v3291, %v3339
      %3341 = vmatmul.bf16.gmra.mxu0 %v1489
      %v3342 = vpop.f32.mrf.mxu0
      %v3343 = vadd.f32 %v3294, %v3342
      %v3344 = vpop.f32.mrf.mxu0
      %v3345 = vadd.f32 %v3296, %v3344
      %3346 = vmatmul.bf16.gmra.mxu0 %v1513
      %v3347 = vpop.f32.mrf.mxu0
      %v3348 = vadd.f32 %v3299, %v3347
      %v3349 = vpop.f32.mrf.mxu0
      %v3350 = vadd.f32 %v3301, %v3349
      %3351 = vmatmul.bf16.gmra.mxu0 %v1537
      %v3352 = vpop.f32.mrf.mxu0
      %v3353 = vadd.f32 %v3304, %v3352
      %v3354 = vpop.f32.mrf.mxu0
      %v3355 = vadd.f32 %v3306, %v3354
      %3356 = vmatmul.bf16.gmra.mxu0 %v1561
      %v3357 = vpop.f32.mrf.mxu0
      %v3358 = vadd.f32 %v3309, %v3357
      %v3359 = vpop.f32.mrf.mxu0
      %v3360 = vadd.f32 %v3311, %v3359
      %3361 = vdwg.mxu0
      %3362 = vmatpush.bf16.msra.mxu0 %v2616
      %3363 = vmatpush.bf16.msra.mxu0 %v2615
      %3364 = vmatpush.bf16.msra.mxu0 %v2614
      %3365 = vmatpush.bf16.msra.mxu0 %v2613
      %3366 = vmatpush.bf16.msra.mxu0 %v2612
      %3367 = vmatpush.bf16.msra.mxu0 %v2611
      %3368 = vmatpush.bf16.msra.mxu0 %v2610
      %3369 = vmatpush.bf16.msra.mxu0 %v2609
      %3370 = vmatmul.bf16.gmra.mxu0 %v1394
      %v3371 = vpop.f32.mrf.mxu0
      %v3372 = vadd.f32 %v3323, %v3371
      %v3373 = vpop.f32.mrf.mxu0
      %v3374 = vadd.f32 %v3325, %v3373
      %3375 = vmatmul.bf16.gmra.mxu0 %v1418
      %v3376 = vpop.f32.mrf.mxu0
      %v3377 = vadd.f32 %v3328, %v3376
      %v3378 = vpop.f32.mrf.mxu0
      %v3379 = vadd.f32 %v3330, %v3378
      %3380 = vmatmul.bf16.gmra.mxu0 %v1442
      %v3381 = vpop.f32.mrf.mxu0
      %v3382 = vadd.f32 %v3333, %v3381
      %v3383 = vpop.f32.mrf.mxu0
      %v3384 = vadd.f32 %v3335, %v3383
      %3385 = vmatmul.bf16.gmra.mxu0 %v1466
      %v3386 = vpop.f32.mrf.mxu0
      %v3387 = vadd.f32 %v3338, %v3386
      %v3388 = vpop.f32.mrf.mxu0
      %v3389 = vadd.f32 %v3340, %v3388
      %3390 = vmatmul.bf16.gmra.mxu0 %v1490
      %v3391 = vpop.f32.mrf.mxu0
      %v3392 = vadd.f32 %v3343, %v3391
      %v3393 = vpop.f32.mrf.mxu0
      %v3394 = vadd.f32 %v3345, %v3393
      %3395 = vmatmul.bf16.gmra.mxu0 %v1514
      %v3396 = vpop.f32.mrf.mxu0
      %v3397 = vadd.f32 %v3348, %v3396
      %v3398 = vpop.f32.mrf.mxu0
      %v3399 = vadd.f32 %v3350, %v3398
      %3400 = vmatmul.bf16.gmra.mxu0 %v1538
      %v3401 = vpop.f32.mrf.mxu0
      %v3402 = vadd.f32 %v3353, %v3401
      %v3403 = vpop.f32.mrf.mxu0
      %v3404 = vadd.f32 %v3355, %v3403
      %3405 = vmatmul.bf16.gmra.mxu0 %v1562
      %v3406 = vpop.f32.mrf.mxu0
      %v3407 = vadd.f32 %v3358, %v3406
      %v3408 = vpop.f32.mrf.mxu0
      %v3409 = vadd.f32 %v3360, %v3408
      %3410 = vdwg.mxu0
      %3411 = vmatpush.bf16.msra.mxu0 %v2624
      %3412 = vmatpush.bf16.msra.mxu0 %v2623
      %3413 = vmatpush.bf16.msra.mxu0 %v2622
      %3414 = vmatpush.bf16.msra.mxu0 %v2621
      %3415 = vmatpush.bf16.msra.mxu0 %v2620
      %3416 = vmatpush.bf16.msra.mxu0 %v2619
      %3417 = vmatpush.bf16.msra.mxu0 %v2618
      %3418 = vmatpush.bf16.msra.mxu0 %v2617
      %3419 = vmatmul.bf16.gmra.mxu0 %v1395
      %v3420 = vpop.f32.mrf.mxu0
      %v3421 = vadd.f32 %v3372, %v3420
      %v3422 = vpop.f32.mrf.mxu0
      %v3423 = vadd.f32 %v3374, %v3422
      %3424 = vmatmul.bf16.gmra.mxu0 %v1419
      %v3425 = vpop.f32.mrf.mxu0
      %v3426 = vadd.f32 %v3377, %v3425
      %v3427 = vpop.f32.mrf.mxu0
      %v3428 = vadd.f32 %v3379, %v3427
      %3429 = vmatmul.bf16.gmra.mxu0 %v1443
      %v3430 = vpop.f32.mrf.mxu0
      %v3431 = vadd.f32 %v3382, %v3430
      %v3432 = vpop.f32.mrf.mxu0
      %v3433 = vadd.f32 %v3384, %v3432
      %3434 = vmatmul.bf16.gmra.mxu0 %v1467
      %v3435 = vpop.f32.mrf.mxu0
      %v3436 = vadd.f32 %v3387, %v3435
      %v3437 = vpop.f32.mrf.mxu0
      %v3438 = vadd.f32 %v3389, %v3437
      %3439 = vmatmul.bf16.gmra.mxu0 %v1491
      %v3440 = vpop.f32.mrf.mxu0
      %v3441 = vadd.f32 %v3392, %v3440
      %v3442 = vpop.f32.mrf.mxu0
      %v3443 = vadd.f32 %v3394, %v3442
      %3444 = vmatmul.bf16.gmra.mxu0 %v1515
      %v3445 = vpop.f32.mrf.mxu0
      %v3446 = vadd.f32 %v3397, %v3445
      %v3447 = vpop.f32.mrf.mxu0
      %v3448 = vadd.f32 %v3399, %v3447
      %3449 = vmatmul.bf16.gmra.mxu0 %v1539
      %v3450 = vpop.f32.mrf.mxu0
      %v3451 = vadd.f32 %v3402, %v3450
      %v3452 = vpop.f32.mrf.mxu0
      %v3453 = vadd.f32 %v3404, %v3452
      %3454 = vmatmul.bf16.gmra.mxu0 %v1563
      %v3455 = vpop.f32.mrf.mxu0
      %v3456 = vadd.f32 %v3407, %v3455
      %v3457 = vpop.f32.mrf.mxu0
      %v3458 = vadd.f32 %v3409, %v3457
      %3459 = vdwg.mxu0
      %3460 = vmatpush.bf16.msra.mxu0 %v2632
      %3461 = vmatpush.bf16.msra.mxu0 %v2631
      %3462 = vmatpush.bf16.msra.mxu0 %v2630
      %3463 = vmatpush.bf16.msra.mxu0 %v2629
      %3464 = vmatpush.bf16.msra.mxu0 %v2628
      %3465 = vmatpush.bf16.msra.mxu0 %v2627
      %3466 = vmatpush.bf16.msra.mxu0 %v2626
      %3467 = vmatpush.bf16.msra.mxu0 %v2625
      %3468 = vmatmul.bf16.gmra.mxu0 %v1396
      %v3469 = vpop.f32.mrf.mxu0
      %v3470 = vadd.f32 %v3421, %v3469
      %v3471 = vpop.f32.mrf.mxu0
      %v3472 = vadd.f32 %v3423, %v3471
      %3473 = vmatmul.bf16.gmra.mxu0 %v1420
      %v3474 = vpop.f32.mrf.mxu0
      %v3475 = vadd.f32 %v3426, %v3474
      %v3476 = vpop.f32.mrf.mxu0
      %v3477 = vadd.f32 %v3428, %v3476
      %3478 = vmatmul.bf16.gmra.mxu0 %v1444
      %v3479 = vpop.f32.mrf.mxu0
      %v3480 = vadd.f32 %v3431, %v3479
      %v3481 = vpop.f32.mrf.mxu0
      %v3482 = vadd.f32 %v3433, %v3481
      %3483 = vmatmul.bf16.gmra.mxu0 %v1468
      %v3484 = vpop.f32.mrf.mxu0
      %v3485 = vadd.f32 %v3436, %v3484
      %v3486 = vpop.f32.mrf.mxu0
      %v3487 = vadd.f32 %v3438, %v3486
      %3488 = vmatmul.bf16.gmra.mxu0 %v1492
      %v3489 = vpop.f32.mrf.mxu0
      %v3490 = vadd.f32 %v3441, %v3489
      %v3491 = vpop.f32.mrf.mxu0
      %v3492 = vadd.f32 %v3443, %v3491
      %3493 = vmatmul.bf16.gmra.mxu0 %v1516
      %v3494 = vpop.f32.mrf.mxu0
      %v3495 = vadd.f32 %v3446, %v3494
      %v3496 = vpop.f32.mrf.mxu0
      %v3497 = vadd.f32 %v3448, %v3496
      %3498 = vmatmul.bf16.gmra.mxu0 %v1540
      %v3499 = vpop.f32.mrf.mxu0
      %v3500 = vadd.f32 %v3451, %v3499
      %v3501 = vpop.f32.mrf.mxu0
      %v3502 = vadd.f32 %v3453, %v3501
      %3503 = vmatmul.bf16.gmra.mxu0 %v1564
      %v3504 = vpop.f32.mrf.mxu0
      %v3505 = vadd.f32 %v3456, %v3504
      %v3506 = vpop.f32.mrf.mxu0
      %v3507 = vadd.f32 %v3458, %v3506
      %3508 = vdwg.mxu0
      %3509 = vmatpush.bf16.msra.mxu0 %v2640
      %3510 = vmatpush.bf16.msra.mxu0 %v2639
      %3511 = vmatpush.bf16.msra.mxu0 %v2638
      %3512 = vmatpush.bf16.msra.mxu0 %v2637
      %3513 = vmatpush.bf16.msra.mxu0 %v2636
      %3514 = vmatpush.bf16.msra.mxu0 %v2635
      %3515 = vmatpush.bf16.msra.mxu0 %v2634
      %3516 = vmatpush.bf16.msra.mxu0 %v2633
      %3517 = vmatmul.bf16.gmra.mxu0 %v1397
      %v3518 = vpop.f32.mrf.mxu0
      %v3519 = vadd.f32 %v3470, %v3518
      %v3520 = vpop.f32.mrf.mxu0
      %v3521 = vadd.f32 %v3472, %v3520
      %3522 = vmatmul.bf16.gmra.mxu0 %v1421
      %v3523 = vpop.f32.mrf.mxu0
      %v3524 = vadd.f32 %v3475, %v3523
      %v3525 = vpop.f32.mrf.mxu0
      %v3526 = vadd.f32 %v3477, %v3525
      %3527 = vmatmul.bf16.gmra.mxu0 %v1445
      %v3528 = vpop.f32.mrf.mxu0
      %v3529 = vadd.f32 %v3480, %v3528
      %v3530 = vpop.f32.mrf.mxu0
      %v3531 = vadd.f32 %v3482, %v3530
      %3532 = vmatmul.bf16.gmra.mxu0 %v1469
      %v3533 = vpop.f32.mrf.mxu0
      %v3534 = vadd.f32 %v3485, %v3533
      %v3535 = vpop.f32.mrf.mxu0
      %v3536 = vadd.f32 %v3487, %v3535
      %3537 = vmatmul.bf16.gmra.mxu0 %v1493
      %v3538 = vpop.f32.mrf.mxu0
      %v3539 = vadd.f32 %v3490, %v3538
      %v3540 = vpop.f32.mrf.mxu0
      %v3541 = vadd.f32 %v3492, %v3540
      %3542 = vmatmul.bf16.gmra.mxu0 %v1517
      %v3543 = vpop.f32.mrf.mxu0
      %v3544 = vadd.f32 %v3495, %v3543
      %v3545 = vpop.f32.mrf.mxu0
      %v3546 = vadd.f32 %v3497, %v3545
      %3547 = vmatmul.bf16.gmra.mxu0 %v1541
      %v3548 = vpop.f32.mrf.mxu0
      %v3549 = vadd.f32 %v3500, %v3548
      %v3550 = vpop.f32.mrf.mxu0
      %v3551 = vadd.f32 %v3502, %v3550
      %3552 = vmatmul.bf16.gmra.mxu0 %v1565
      %v3553 = vpop.f32.mrf.mxu0
      %v3554 = vadd.f32 %v3505, %v3553
      %v3555 = vpop.f32.mrf.mxu0
      %v3556 = vadd.f32 %v3507, %v3555
      %3557 = vdwg.mxu0
      %3558 = vmatpush.bf16.msra.mxu0 %v2648
      %3559 = vmatpush.bf16.msra.mxu0 %v2647
      %3560 = vmatpush.bf16.msra.mxu0 %v2646
      %3561 = vmatpush.bf16.msra.mxu0 %v2645
      %3562 = vmatpush.bf16.msra.mxu0 %v2644
      %3563 = vmatpush.bf16.msra.mxu0 %v2643
      %3564 = vmatpush.bf16.msra.mxu0 %v2642
      %3565 = vmatpush.bf16.msra.mxu0 %v2641
      %3566 = vmatmul.bf16.gmra.mxu0 %v1398
      %v3567 = vpop.f32.mrf.mxu0
      %v3568 = vadd.f32 %v3519, %v3567
      %v3569 = vpop.f32.mrf.mxu0
      %v3570 = vadd.f32 %v3521, %v3569
      %3571 = vmatmul.bf16.gmra.mxu0 %v1422
      %v3572 = vpop.f32.mrf.mxu0
      %v3573 = vadd.f32 %v3524, %v3572
      %v3574 = vpop.f32.mrf.mxu0
      %v3575 = vadd.f32 %v3526, %v3574
      %3576 = vmatmul.bf16.gmra.mxu0 %v1446
      %v3577 = vpop.f32.mrf.mxu0
      %v3578 = vadd.f32 %v3529, %v3577
      %v3579 = vpop.f32.mrf.mxu0
      %v3580 = vadd.f32 %v3531, %v3579
      %3581 = vmatmul.bf16.gmra.mxu0 %v1470
      %v3582 = vpop.f32.mrf.mxu0
      %v3583 = vadd.f32 %v3534, %v3582
      %v3584 = vpop.f32.mrf.mxu0
      %v3585 = vadd.f32 %v3536, %v3584
      %3586 = vmatmul.bf16.gmra.mxu0 %v1494
      %v3587 = vpop.f32.mrf.mxu0
      %v3588 = vadd.f32 %v3539, %v3587
      %v3589 = vpop.f32.mrf.mxu0
      %v3590 = vadd.f32 %v3541, %v3589
      %3591 = vmatmul.bf16.gmra.mxu0 %v1518
      %v3592 = vpop.f32.mrf.mxu0
      %v3593 = vadd.f32 %v3544, %v3592
      %v3594 = vpop.f32.mrf.mxu0
      %v3595 = vadd.f32 %v3546, %v3594
      %3596 = vmatmul.bf16.gmra.mxu0 %v1542
      %v3597 = vpop.f32.mrf.mxu0
      %v3598 = vadd.f32 %v3549, %v3597
      %v3599 = vpop.f32.mrf.mxu0
      %v3600 = vadd.f32 %v3551, %v3599
      %3601 = vmatmul.bf16.gmra.mxu0 %v1566
      %v3602 = vpop.f32.mrf.mxu0
      %v3603 = vadd.f32 %v3554, %v3602
      %v3604 = vpop.f32.mrf.mxu0
      %v3605 = vadd.f32 %v3556, %v3604
      %3606 = vdwg.mxu0
      %3607 = vmatpush.bf16.msra.mxu0 %v2656
      %3608 = vmatpush.bf16.msra.mxu0 %v2655
      %3609 = vmatpush.bf16.msra.mxu0 %v2654
      %3610 = vmatpush.bf16.msra.mxu0 %v2653
      %3611 = vmatpush.bf16.msra.mxu0 %v2652
      %3612 = vmatpush.bf16.msra.mxu0 %v2651
      %3613 = vmatpush.bf16.msra.mxu0 %v2650
      %3614 = vmatpush.bf16.msra.mxu0 %v2649
      %3615 = vmatmul.bf16.gmra.mxu0 %v1399
      %v3616 = vpop.f32.mrf.mxu0
      %v3617 = vadd.f32 %v3568, %v3616
      %v3618 = vpop.f32.mrf.mxu0
      %v3619 = vadd.f32 %v3570, %v3618
      %3620 = vmatmul.bf16.gmra.mxu0 %v1423
      %v3621 = vpop.f32.mrf.mxu0
      %v3622 = vadd.f32 %v3573, %v3621
      %v3623 = vpop.f32.mrf.mxu0
      %v3624 = vadd.f32 %v3575, %v3623
      %3625 = vmatmul.bf16.gmra.mxu0 %v1447
      %v3626 = vpop.f32.mrf.mxu0
      %v3627 = vadd.f32 %v3578, %v3626
      %v3628 = vpop.f32.mrf.mxu0
      %v3629 = vadd.f32 %v3580, %v3628
      %3630 = vmatmul.bf16.gmra.mxu0 %v1471
      %v3631 = vpop.f32.mrf.mxu0
      %v3632 = vadd.f32 %v3583, %v3631
      %v3633 = vpop.f32.mrf.mxu0
      %v3634 = vadd.f32 %v3585, %v3633
      %3635 = vmatmul.bf16.gmra.mxu0 %v1495
      %v3636 = vpop.f32.mrf.mxu0
      %v3637 = vadd.f32 %v3588, %v3636
      %v3638 = vpop.f32.mrf.mxu0
      %v3639 = vadd.f32 %v3590, %v3638
      %3640 = vmatmul.bf16.gmra.mxu0 %v1519
      %v3641 = vpop.f32.mrf.mxu0
      %v3642 = vadd.f32 %v3593, %v3641
      %v3643 = vpop.f32.mrf.mxu0
      %v3644 = vadd.f32 %v3595, %v3643
      %3645 = vmatmul.bf16.gmra.mxu0 %v1543
      %v3646 = vpop.f32.mrf.mxu0
      %v3647 = vadd.f32 %v3598, %v3646
      %v3648 = vpop.f32.mrf.mxu0
      %v3649 = vadd.f32 %v3600, %v3648
      %3650 = vmatmul.bf16.gmra.mxu0 %v1567
      %v3651 = vpop.f32.mrf.mxu0
      %v3652 = vadd.f32 %v3603, %v3651
      %v3653 = vpop.f32.mrf.mxu0
      %v3654 = vadd.f32 %v3605, %v3653
      %3655 = vdwg.mxu0
      %3656 = vmatpush.bf16.msra.mxu0 %v2664
      %3657 = vmatpush.bf16.msra.mxu0 %v2663
      %3658 = vmatpush.bf16.msra.mxu0 %v2662
      %3659 = vmatpush.bf16.msra.mxu0 %v2661
      %3660 = vmatpush.bf16.msra.mxu0 %v2660
      %3661 = vmatpush.bf16.msra.mxu0 %v2659
      %3662 = vmatpush.bf16.msra.mxu0 %v2658
      %3663 = vmatpush.bf16.msra.mxu0 %v2657
      %3664 = vmatmul.bf16.gmra.mxu0 %v1400
      %v3665 = vpop.f32.mrf.mxu0
      %v3666 = vadd.f32 %v3617, %v3665
      %v3667 = vpop.f32.mrf.mxu0
      %v3668 = vadd.f32 %v3619, %v3667
      %3669 = vmatmul.bf16.gmra.mxu0 %v1424
      %v3670 = vpop.f32.mrf.mxu0
      %v3671 = vadd.f32 %v3622, %v3670
      %v3672 = vpop.f32.mrf.mxu0
      %v3673 = vadd.f32 %v3624, %v3672
      %3674 = vmatmul.bf16.gmra.mxu0 %v1448
      %v3675 = vpop.f32.mrf.mxu0
      %v3676 = vadd.f32 %v3627, %v3675
      %v3677 = vpop.f32.mrf.mxu0
      %v3678 = vadd.f32 %v3629, %v3677
      %3679 = vmatmul.bf16.gmra.mxu0 %v1472
      %v3680 = vpop.f32.mrf.mxu0
      %v3681 = vadd.f32 %v3632, %v3680
      %v3682 = vpop.f32.mrf.mxu0
      %v3683 = vadd.f32 %v3634, %v3682
      %3684 = vmatmul.bf16.gmra.mxu0 %v1496
      %v3685 = vpop.f32.mrf.mxu0
      %v3686 = vadd.f32 %v3637, %v3685
      %v3687 = vpop.f32.mrf.mxu0
      %v3688 = vadd.f32 %v3639, %v3687
      %3689 = vmatmul.bf16.gmra.mxu0 %v1520
      %v3690 = vpop.f32.mrf.mxu0
      %v3691 = vadd.f32 %v3642, %v3690
      %v3692 = vpop.f32.mrf.mxu0
      %v3693 = vadd.f32 %v3644, %v3692
      %3694 = vmatmul.bf16.gmra.mxu0 %v1544
      %v3695 = vpop.f32.mrf.mxu0
      %v3696 = vadd.f32 %v3647, %v3695
      %v3697 = vpop.f32.mrf.mxu0
      %v3698 = vadd.f32 %v3649, %v3697
      %3699 = vmatmul.bf16.gmra.mxu0 %v1568
      %v3700 = vpop.f32.mrf.mxu0
      %v3701 = vadd.f32 %v3652, %v3700
      %v3702 = vpop.f32.mrf.mxu0
      %v3703 = vadd.f32 %v3654, %v3702
      %3704 = vdwg.mxu0
      %3705 = vmatpush.bf16.msra.mxu0 %v2672
      %3706 = vmatpush.bf16.msra.mxu0 %v2671
      %3707 = vmatpush.bf16.msra.mxu0 %v2670
      %3708 = vmatpush.bf16.msra.mxu0 %v2669
      %3709 = vmatpush.bf16.msra.mxu0 %v2668
      %3710 = vmatpush.bf16.msra.mxu0 %v2667
      %3711 = vmatpush.bf16.msra.mxu0 %v2666
      %3712 = vmatpush.bf16.msra.mxu0 %v2665
      %3713 = vmatmul.bf16.gmra.mxu0 %v1401
      %v3714 = vpop.f32.mrf.mxu0
      %v3715 = vadd.f32 %v3666, %v3714
      %v3716 = vpop.f32.mrf.mxu0
      %v3717 = vadd.f32 %v3668, %v3716
      %3718 = vmatmul.bf16.gmra.mxu0 %v1425
      %v3719 = vpop.f32.mrf.mxu0
      %v3720 = vadd.f32 %v3671, %v3719
      %v3721 = vpop.f32.mrf.mxu0
      %v3722 = vadd.f32 %v3673, %v3721
      %3723 = vmatmul.bf16.gmra.mxu0 %v1449
      %v3724 = vpop.f32.mrf.mxu0
      %v3725 = vadd.f32 %v3676, %v3724
      %v3726 = vpop.f32.mrf.mxu0
      %v3727 = vadd.f32 %v3678, %v3726
      %3728 = vmatmul.bf16.gmra.mxu0 %v1473
      %v3729 = vpop.f32.mrf.mxu0
      %v3730 = vadd.f32 %v3681, %v3729
      %v3731 = vpop.f32.mrf.mxu0
      %v3732 = vadd.f32 %v3683, %v3731
      %3733 = vmatmul.bf16.gmra.mxu0 %v1497
      %v3734 = vpop.f32.mrf.mxu0
      %v3735 = vadd.f32 %v3686, %v3734
      %v3736 = vpop.f32.mrf.mxu0
      %v3737 = vadd.f32 %v3688, %v3736
      %3738 = vmatmul.bf16.gmra.mxu0 %v1521
      %v3739 = vpop.f32.mrf.mxu0
      %v3740 = vadd.f32 %v3691, %v3739
      %v3741 = vpop.f32.mrf.mxu0
      %v3742 = vadd.f32 %v3693, %v3741
      %3743 = vmatmul.bf16.gmra.mxu0 %v1545
      %v3744 = vpop.f32.mrf.mxu0
      %v3745 = vadd.f32 %v3696, %v3744
      %v3746 = vpop.f32.mrf.mxu0
      %v3747 = vadd.f32 %v3698, %v3746
      %3748 = vmatmul.bf16.gmra.mxu0 %v1569
      %v3749 = vpop.f32.mrf.mxu0
      %v3750 = vadd.f32 %v3701, %v3749
      %v3751 = vpop.f32.mrf.mxu0
      %v3752 = vadd.f32 %v3703, %v3751
      %3753 = vdwg.mxu0
      %3754 = vmatpush.bf16.msra.mxu0 %v2680
      %3755 = vmatpush.bf16.msra.mxu0 %v2679
      %3756 = vmatpush.bf16.msra.mxu0 %v2678
      %3757 = vmatpush.bf16.msra.mxu0 %v2677
      %3758 = vmatpush.bf16.msra.mxu0 %v2676
      %3759 = vmatpush.bf16.msra.mxu0 %v2675
      %3760 = vmatpush.bf16.msra.mxu0 %v2674
      %3761 = vmatpush.bf16.msra.mxu0 %v2673
      %3762 = vmatmul.bf16.gmra.mxu0 %v1402
      %v3763 = vpop.f32.mrf.mxu0
      %v3764 = vadd.f32 %v3715, %v3763
      %v3765 = vpop.f32.mrf.mxu0
      %v3766 = vadd.f32 %v3717, %v3765
      %3767 = vmatmul.bf16.gmra.mxu0 %v1426
      %v3768 = vpop.f32.mrf.mxu0
      %v3769 = vadd.f32 %v3720, %v3768
      %v3770 = vpop.f32.mrf.mxu0
      %v3771 = vadd.f32 %v3722, %v3770
      %3772 = vmatmul.bf16.gmra.mxu0 %v1450
      %v3773 = vpop.f32.mrf.mxu0
      %v3774 = vadd.f32 %v3725, %v3773
      %v3775 = vpop.f32.mrf.mxu0
      %v3776 = vadd.f32 %v3727, %v3775
      %3777 = vmatmul.bf16.gmra.mxu0 %v1474
      %v3778 = vpop.f32.mrf.mxu0
      %v3779 = vadd.f32 %v3730, %v3778
      %v3780 = vpop.f32.mrf.mxu0
      %v3781 = vadd.f32 %v3732, %v3780
      %3782 = vmatmul.bf16.gmra.mxu0 %v1498
      %v3783 = vpop.f32.mrf.mxu0
      %v3784 = vadd.f32 %v3735, %v3783
      %v3785 = vpop.f32.mrf.mxu0
      %v3786 = vadd.f32 %v3737, %v3785
      %3787 = vmatmul.bf16.gmra.mxu0 %v1522
      %v3788 = vpop.f32.mrf.mxu0
      %v3789 = vadd.f32 %v3740, %v3788
      %v3790 = vpop.f32.mrf.mxu0
      %v3791 = vadd.f32 %v3742, %v3790
      %3792 = vmatmul.bf16.gmra.mxu0 %v1546
      %v3793 = vpop.f32.mrf.mxu0
      %v3794 = vadd.f32 %v3745, %v3793
      %v3795 = vpop.f32.mrf.mxu0
      %v3796 = vadd.f32 %v3747, %v3795
      %3797 = vmatmul.bf16.gmra.mxu0 %v1570
      %v3798 = vpop.f32.mrf.mxu0
      %v3799 = vadd.f32 %v3750, %v3798
      %v3800 = vpop.f32.mrf.mxu0
      %v3801 = vadd.f32 %v3752, %v3800
      %3802 = vdwg.mxu0
      %3803 = vmatpush.bf16.msra.mxu0 %v2688
      %3804 = vmatpush.bf16.msra.mxu0 %v2687
      %3805 = vmatpush.bf16.msra.mxu0 %v2686
      %3806 = vmatpush.bf16.msra.mxu0 %v2685
      %3807 = vmatpush.bf16.msra.mxu0 %v2684
      %3808 = vmatpush.bf16.msra.mxu0 %v2683
      %3809 = vmatpush.bf16.msra.mxu0 %v2682
      %3810 = vmatpush.bf16.msra.mxu0 %v2681
      %3811 = vmatmul.bf16.gmra.mxu0 %v1403
      %v3812 = vpop.f32.mrf.mxu0
      %v3813 = vadd.f32 %v3764, %v3812
      %v3814 = vpop.f32.mrf.mxu0
      %v3815 = vadd.f32 %v3766, %v3814
      %3816 = vmatmul.bf16.gmra.mxu0 %v1427
      %v3817 = vpop.f32.mrf.mxu0
      %v3818 = vadd.f32 %v3769, %v3817
      %v3819 = vpop.f32.mrf.mxu0
      %v3820 = vadd.f32 %v3771, %v3819
      %3821 = vmatmul.bf16.gmra.mxu0 %v1451
      %v3822 = vpop.f32.mrf.mxu0
      %v3823 = vadd.f32 %v3774, %v3822
      %v3824 = vpop.f32.mrf.mxu0
      %v3825 = vadd.f32 %v3776, %v3824
      %3826 = vmatmul.bf16.gmra.mxu0 %v1475
      %v3827 = vpop.f32.mrf.mxu0
      %v3828 = vadd.f32 %v3779, %v3827
      %v3829 = vpop.f32.mrf.mxu0
      %v3830 = vadd.f32 %v3781, %v3829
      %3831 = vmatmul.bf16.gmra.mxu0 %v1499
      %v3832 = vpop.f32.mrf.mxu0
      %v3833 = vadd.f32 %v3784, %v3832
      %v3834 = vpop.f32.mrf.mxu0
      %v3835 = vadd.f32 %v3786, %v3834
      %3836 = vmatmul.bf16.gmra.mxu0 %v1523
      %v3837 = vpop.f32.mrf.mxu0
      %v3838 = vadd.f32 %v3789, %v3837
      %v3839 = vpop.f32.mrf.mxu0
      %v3840 = vadd.f32 %v3791, %v3839
      %3841 = vmatmul.bf16.gmra.mxu0 %v1547
      %v3842 = vpop.f32.mrf.mxu0
      %v3843 = vadd.f32 %v3794, %v3842
      %v3844 = vpop.f32.mrf.mxu0
      %v3845 = vadd.f32 %v3796, %v3844
      %3846 = vmatmul.bf16.gmra.mxu0 %v1571
      %v3847 = vpop.f32.mrf.mxu0
      %v3848 = vadd.f32 %v3799, %v3847
      %v3849 = vpop.f32.mrf.mxu0
      %v3850 = vadd.f32 %v3801, %v3849
      %3851 = vdwg.mxu0
      %3852 = vmatpush.bf16.msra.mxu0 %v2696
      %3853 = vmatpush.bf16.msra.mxu0 %v2695
      %3854 = vmatpush.bf16.msra.mxu0 %v2694
      %3855 = vmatpush.bf16.msra.mxu0 %v2693
      %3856 = vmatpush.bf16.msra.mxu0 %v2692
      %3857 = vmatpush.bf16.msra.mxu0 %v2691
      %3858 = vmatpush.bf16.msra.mxu0 %v2690
      %3859 = vmatpush.bf16.msra.mxu0 %v2689
      %3860 = vmatmul.bf16.gmra.mxu0 %v1404
      %v3861 = vpop.f32.mrf.mxu0
      %v3862 = vadd.f32 %v3813, %v3861
      %v3863 = vpop.f32.mrf.mxu0
      %v3864 = vadd.f32 %v3815, %v3863
      %3865 = vmatmul.bf16.gmra.mxu0 %v1428
      %v3866 = vpop.f32.mrf.mxu0
      %v3867 = vadd.f32 %v3818, %v3866
      %v3868 = vpop.f32.mrf.mxu0
      %v3869 = vadd.f32 %v3820, %v3868
      %3870 = vmatmul.bf16.gmra.mxu0 %v1452
      %v3871 = vpop.f32.mrf.mxu0
      %v3872 = vadd.f32 %v3823, %v3871
      %v3873 = vpop.f32.mrf.mxu0
      %v3874 = vadd.f32 %v3825, %v3873
      %3875 = vmatmul.bf16.gmra.mxu0 %v1476
      %v3876 = vpop.f32.mrf.mxu0
      %v3877 = vadd.f32 %v3828, %v3876
      %v3878 = vpop.f32.mrf.mxu0
      %v3879 = vadd.f32 %v3830, %v3878
      %3880 = vmatmul.bf16.gmra.mxu0 %v1500
      %v3881 = vpop.f32.mrf.mxu0
      %v3882 = vadd.f32 %v3833, %v3881
      %v3883 = vpop.f32.mrf.mxu0
      %v3884 = vadd.f32 %v3835, %v3883
      %3885 = vmatmul.bf16.gmra.mxu0 %v1524
      %v3886 = vpop.f32.mrf.mxu0
      %v3887 = vadd.f32 %v3838, %v3886
      %v3888 = vpop.f32.mrf.mxu0
      %v3889 = vadd.f32 %v3840, %v3888
      %3890 = vmatmul.bf16.gmra.mxu0 %v1548
      %v3891 = vpop.f32.mrf.mxu0
      %v3892 = vadd.f32 %v3843, %v3891
      %v3893 = vpop.f32.mrf.mxu0
      %v3894 = vadd.f32 %v3845, %v3893
      %3895 = vmatmul.bf16.gmra.mxu0 %v1572
      %v3896 = vpop.f32.mrf.mxu0
      %v3897 = vadd.f32 %v3848, %v3896
      %v3898 = vpop.f32.mrf.mxu0
      %v3899 = vadd.f32 %v3850, %v3898
      %3900 = vdwg.mxu0
      %3901 = vmatpush.bf16.msra.mxu0 %v2704
      %3902 = vmatpush.bf16.msra.mxu0 %v2703
      %3903 = vmatpush.bf16.msra.mxu0 %v2702
      %3904 = vmatpush.bf16.msra.mxu0 %v2701
      %3905 = vmatpush.bf16.msra.mxu0 %v2700
      %3906 = vmatpush.bf16.msra.mxu0 %v2699
      %3907 = vmatpush.bf16.msra.mxu0 %v2698
      %3908 = vmatpush.bf16.msra.mxu0 %v2697
      %3909 = vmatmul.bf16.gmra.mxu0 %v1405
      %v3910 = vpop.f32.mrf.mxu0
      %v3911 = vadd.f32 %v3862, %v3910
      %v3912 = vpop.f32.mrf.mxu0
      %v3913 = vadd.f32 %v3864, %v3912
      %3914 = vmatmul.bf16.gmra.mxu0 %v1429
      %v3915 = vpop.f32.mrf.mxu0
      %v3916 = vadd.f32 %v3867, %v3915
      %v3917 = vpop.f32.mrf.mxu0
      %v3918 = vadd.f32 %v3869, %v3917
      %3919 = vmatmul.bf16.gmra.mxu0 %v1453
      %v3920 = vpop.f32.mrf.mxu0
      %v3921 = vadd.f32 %v3872, %v3920
      %v3922 = vpop.f32.mrf.mxu0
      %v3923 = vadd.f32 %v3874, %v3922
      %3924 = vmatmul.bf16.gmra.mxu0 %v1477
      %v3925 = vpop.f32.mrf.mxu0
      %v3926 = vadd.f32 %v3877, %v3925
      %v3927 = vpop.f32.mrf.mxu0
      %v3928 = vadd.f32 %v3879, %v3927
      %3929 = vmatmul.bf16.gmra.mxu0 %v1501
      %v3930 = vpop.f32.mrf.mxu0
      %v3931 = vadd.f32 %v3882, %v3930
      %v3932 = vpop.f32.mrf.mxu0
      %v3933 = vadd.f32 %v3884, %v3932
      %3934 = vmatmul.bf16.gmra.mxu0 %v1525
      %v3935 = vpop.f32.mrf.mxu0
      %v3936 = vadd.f32 %v3887, %v3935
      %v3937 = vpop.f32.mrf.mxu0
      %v3938 = vadd.f32 %v3889, %v3937
      %3939 = vmatmul.bf16.gmra.mxu0 %v1549
      %v3940 = vpop.f32.mrf.mxu0
      %v3941 = vadd.f32 %v3892, %v3940
      %v3942 = vpop.f32.mrf.mxu0
      %v3943 = vadd.f32 %v3894, %v3942
      %3944 = vmatmul.bf16.gmra.mxu0 %v1573
      %v3945 = vpop.f32.mrf.mxu0
      %v3946 = vadd.f32 %v3897, %v3945
      %v3947 = vpop.f32.mrf.mxu0
      %v3948 = vadd.f32 %v3899, %v3947
      %3949 = vdwg.mxu0
      %3950 = vmatpush.bf16.msra.mxu0 %v2712
      %3951 = vmatpush.bf16.msra.mxu0 %v2711
      %3952 = vmatpush.bf16.msra.mxu0 %v2710
      %3953 = vmatpush.bf16.msra.mxu0 %v2709
      %3954 = vmatpush.bf16.msra.mxu0 %v2708
      %3955 = vmatpush.bf16.msra.mxu0 %v2707
      %3956 = vmatpush.bf16.msra.mxu0 %v2706
      %3957 = vmatpush.bf16.msra.mxu0 %v2705
      %3958 = vmatmul.bf16.gmra.mxu0 %v1406
      %v3959 = vpop.f32.mrf.mxu0
      %v3960 = vadd.f32 %v3911, %v3959
      %v3961 = vpop.f32.mrf.mxu0
      %v3962 = vadd.f32 %v3913, %v3961
      %3963 = vmatmul.bf16.gmra.mxu0 %v1430
      %v3964 = vpop.f32.mrf.mxu0
      %v3965 = vadd.f32 %v3916, %v3964
      %v3966 = vpop.f32.mrf.mxu0
      %v3967 = vadd.f32 %v3918, %v3966
      %3968 = vmatmul.bf16.gmra.mxu0 %v1454
      %v3969 = vpop.f32.mrf.mxu0
      %v3970 = vadd.f32 %v3921, %v3969
      %v3971 = vpop.f32.mrf.mxu0
      %v3972 = vadd.f32 %v3923, %v3971
      %3973 = vmatmul.bf16.gmra.mxu0 %v1478
      %v3974 = vpop.f32.mrf.mxu0
      %v3975 = vadd.f32 %v3926, %v3974
      %v3976 = vpop.f32.mrf.mxu0
      %v3977 = vadd.f32 %v3928, %v3976
      %3978 = vmatmul.bf16.gmra.mxu0 %v1502
      %v3979 = vpop.f32.mrf.mxu0
      %v3980 = vadd.f32 %v3931, %v3979
      %v3981 = vpop.f32.mrf.mxu0
      %v3982 = vadd.f32 %v3933, %v3981
      %3983 = vmatmul.bf16.gmra.mxu0 %v1526
      %v3984 = vpop.f32.mrf.mxu0
      %v3985 = vadd.f32 %v3936, %v3984
      %v3986 = vpop.f32.mrf.mxu0
      %v3987 = vadd.f32 %v3938, %v3986
      %3988 = vmatmul.bf16.gmra.mxu0 %v1550
      %v3989 = vpop.f32.mrf.mxu0
      %v3990 = vadd.f32 %v3941, %v3989
      %v3991 = vpop.f32.mrf.mxu0
      %v3992 = vadd.f32 %v3943, %v3991
      %3993 = vmatmul.bf16.gmra.mxu0 %v1574
      %v3994 = vpop.f32.mrf.mxu0
      %v3995 = vadd.f32 %v3946, %v3994
      %v3996 = vpop.f32.mrf.mxu0
      %v3997 = vadd.f32 %v3948, %v3996
      %3998 = vdwg.mxu0
      %3999 = vmatpush.bf16.msra.mxu0 %v2720
      %4000 = vmatpush.bf16.msra.mxu0 %v2719
      %4001 = vmatpush.bf16.msra.mxu0 %v2718
      %4002 = vmatpush.bf16.msra.mxu0 %v2717
      %4003 = vmatpush.bf16.msra.mxu0 %v2716
      %4004 = vmatpush.bf16.msra.mxu0 %v2715
      %4005 = vmatpush.bf16.msra.mxu0 %v2714
      %4006 = vmatpush.bf16.msra.mxu0 %v2713
      %4007 = vmatmul.bf16.gmra.mxu0 %v1407
      %v4008 = vpop.f32.mrf.mxu0
      %v4009 = vadd.f32 %v3960, %v4008
      %v4010 = vpop.f32.mrf.mxu0
      %v4011 = vadd.f32 %v3962, %v4010
      %4012 = vmatmul.bf16.gmra.mxu0 %v1431
      %v4013 = vpop.f32.mrf.mxu0
      %v4014 = vadd.f32 %v3965, %v4013
      %v4015 = vpop.f32.mrf.mxu0
      %v4016 = vadd.f32 %v3967, %v4015
      %4017 = vmatmul.bf16.gmra.mxu0 %v1455
      %v4018 = vpop.f32.mrf.mxu0
      %v4019 = vadd.f32 %v3970, %v4018
      %v4020 = vpop.f32.mrf.mxu0
      %v4021 = vadd.f32 %v3972, %v4020
      %4022 = vmatmul.bf16.gmra.mxu0 %v1479
      %v4023 = vpop.f32.mrf.mxu0
      %v4024 = vadd.f32 %v3975, %v4023
      %v4025 = vpop.f32.mrf.mxu0
      %v4026 = vadd.f32 %v3977, %v4025
      %4027 = vmatmul.bf16.gmra.mxu0 %v1503
      %v4028 = vpop.f32.mrf.mxu0
      %v4029 = vadd.f32 %v3980, %v4028
      %v4030 = vpop.f32.mrf.mxu0
      %v4031 = vadd.f32 %v3982, %v4030
      %4032 = vmatmul.bf16.gmra.mxu0 %v1527
      %v4033 = vpop.f32.mrf.mxu0
      %v4034 = vadd.f32 %v3985, %v4033
      %v4035 = vpop.f32.mrf.mxu0
      %v4036 = vadd.f32 %v3987, %v4035
      %4037 = vmatmul.bf16.gmra.mxu0 %v1551
      %v4038 = vpop.f32.mrf.mxu0
      %v4039 = vadd.f32 %v3990, %v4038
      %v4040 = vpop.f32.mrf.mxu0
      %v4041 = vadd.f32 %v3992, %v4040
      %4042 = vmatmul.bf16.gmra.mxu0 %v1575
      %v4043 = vpop.f32.mrf.mxu0
      %v4044 = vadd.f32 %v3995, %v4043
      %v4045 = vpop.f32.mrf.mxu0
      %v4046 = vadd.f32 %v3997, %v4045
      %4047 = vdwg.mxu0
      %4048 = vmatpush.bf16.msra.mxu0 %v2728
      %4049 = vmatpush.bf16.msra.mxu0 %v2727
      %4050 = vmatpush.bf16.msra.mxu0 %v2726
      %4051 = vmatpush.bf16.msra.mxu0 %v2725
      %4052 = vmatpush.bf16.msra.mxu0 %v2724
      %4053 = vmatpush.bf16.msra.mxu0 %v2723
      %4054 = vmatpush.bf16.msra.mxu0 %v2722
      %4055 = vmatpush.bf16.msra.mxu0 %v2721
      %4056 = vmatmul.bf16.gmra.mxu0 %v1408
      %v4057 = vpop.f32.mrf.mxu0
      %v4058 = vadd.f32 %v4009, %v4057
      %v4059 = vpop.f32.mrf.mxu0
      %v4060 = vadd.f32 %v4011, %v4059
      %4061 = vmatmul.bf16.gmra.mxu0 %v1432
      %v4062 = vpop.f32.mrf.mxu0
      %v4063 = vadd.f32 %v4014, %v4062
      %v4064 = vpop.f32.mrf.mxu0
      %v4065 = vadd.f32 %v4016, %v4064
      %4066 = vmatmul.bf16.gmra.mxu0 %v1456
      %v4067 = vpop.f32.mrf.mxu0
      %v4068 = vadd.f32 %v4019, %v4067
      %v4069 = vpop.f32.mrf.mxu0
      %v4070 = vadd.f32 %v4021, %v4069
      %4071 = vmatmul.bf16.gmra.mxu0 %v1480
      %v4072 = vpop.f32.mrf.mxu0
      %v4073 = vadd.f32 %v4024, %v4072
      %v4074 = vpop.f32.mrf.mxu0
      %v4075 = vadd.f32 %v4026, %v4074
      %4076 = vmatmul.bf16.gmra.mxu0 %v1504
      %v4077 = vpop.f32.mrf.mxu0
      %v4078 = vadd.f32 %v4029, %v4077
      %v4079 = vpop.f32.mrf.mxu0
      %v4080 = vadd.f32 %v4031, %v4079
      %4081 = vmatmul.bf16.gmra.mxu0 %v1528
      %v4082 = vpop.f32.mrf.mxu0
      %v4083 = vadd.f32 %v4034, %v4082
      %v4084 = vpop.f32.mrf.mxu0
      %v4085 = vadd.f32 %v4036, %v4084
      %4086 = vmatmul.bf16.gmra.mxu0 %v1552
      %v4087 = vpop.f32.mrf.mxu0
      %v4088 = vadd.f32 %v4039, %v4087
      %v4089 = vpop.f32.mrf.mxu0
      %v4090 = vadd.f32 %v4041, %v4089
      %4091 = vmatmul.bf16.gmra.mxu0 %v1576
      %v4092 = vpop.f32.mrf.mxu0
      %v4093 = vadd.f32 %v4044, %v4092
      %v4094 = vpop.f32.mrf.mxu0
      %v4095 = vadd.f32 %v4046, %v4094
      %4096 = vdwg.mxu0
      %v4097 = vmax.f32 %v4058, 0.0
      %v4098 = vmax.f32 %v4060, 0.0
      %v4099 = vmax.f32 %v4063, 0.0
      %v4100 = vmax.f32 %v4065, 0.0
      %v4101 = vmax.f32 %v4068, 0.0
      %v4102 = vmax.f32 %v4070, 0.0
      %v4103 = vmax.f32 %v4073, 0.0
      %v4104 = vmax.f32 %v4075, 0.0
      %v4105 = vmax.f32 %v4078, 0.0
      %v4106 = vmax.f32 %v4080, 0.0
      %v4107 = vmax.f32 %v4083, 0.0
      %v4108 = vmax.f32 %v4085, 0.0
      %v4109 = vmax.f32 %v4088, 0.0
      %v4110 = vmax.f32 %v4090, 0.0
      %v4111 = vmax.f32 %v4093, 0.0
      %v4112 = vmax.f32 %v4095, 0.0
      %v4113 = vpack.c.bf16 %v4098, %v4097
      %v4114 = vpack.c.bf16 %v4100, %v4099
      %v4115 = vpack.c.bf16 %v4102, %v4101
      %v4116 = vpack.c.bf16 %v4104, %v4103
      %v4117 = vpack.c.bf16 %v4106, %v4105
      %v4118 = vpack.c.bf16 %v4108, %v4107
      %v4119 = vpack.c.bf16 %v4110, %v4109
      %v4120 = vpack.c.bf16 %v4112, %v4111
      %v4121 = vld [vmem:[%s2] sm:$0xf]
      %v4122 = vld [vmem:[%s2 + $0x4] sm:$0xf]
      %v4123 = vld [vmem:[%s2 + $0x8] sm:$0xf]
      %v4124 = vld [vmem:[%s2 + $0xc] sm:$0xf]
      %v4125 = vld [vmem:[%s2 + $0x10] sm:$0xf]
      %v4126 = vld [vmem:[%s2 + $0x14] sm:$0xf]
      %v4127 = vld [vmem:[%s2 + $0x18] sm:$0xf]
      %v4128 = vld [vmem:[%s2 + $0x1c] sm:$0xf]
      %v4129 = vld [vmem:[%s2 + $0x20] sm:$0xf]
      %v4130 = vld [vmem:[%s2 + $0x24] sm:$0xf]
      %v4131 = vld [vmem:[%s2 + $0x28] sm:$0xf]
      %v4132 = vld [vmem:[%s2 + $0x2c] sm:$0xf]
      %v4133 = vld [vmem:[%s2 + $0x30] sm:$0xf]
      %v4134 = vld [vmem:[%s2 + $0x34] sm:$0xf]
      %v4135 = vld [vmem:[%s2 + $0x38] sm:$0xf]
      %v4136 = vld [vmem:[%s2 + $0x3c] sm:$0xf]
      %v4137 = vperm.slane %v423, 1
      %v4154 = vunpack.c.l.b16 %v4121
      %v4155 = vunpack.c.l.b16 %v4122
      %v4156 = vunpack.c.l.b16 %v4123
      %v4157 = vunpack.c.l.b16 %v4124
      %v4158 = vunpack.c.l.b16 %v4125
      %v4159 = vunpack.c.l.b16 %v4126
      %v4160 = vunpack.c.l.b16 %v4127
      %v4161 = vunpack.c.l.b16 %v4128
      %v4162 = vunpack.c.l.b16 %v4129
      %v4163 = vunpack.c.l.b16 %v4130
      %v4164 = vunpack.c.l.b16 %v4131
      %v4165 = vunpack.c.l.b16 %v4132
      %v4166 = vunpack.c.l.b16 %v4133
      %v4167 = vunpack.c.l.b16 %v4134
      %v4168 = vunpack.c.l.b16 %v4135
      %v4169 = vunpack.c.l.b16 %v4136
      %v4170 = vpack.c.b16 %v4155, %v4154
      %v4171 = vpack.c.b16 %v4157, %v4156
      %v4172 = vpack.c.b16 %v4159, %v4158
      %v4173 = vpack.c.b16 %v4161, %v4160
      %v4174 = vpack.c.b16 %v4163, %v4162
      %v4175 = vpack.c.b16 %v4165, %v4164
      %v4176 = vpack.c.b16 %v4167, %v4166
      %v4177 = vpack.c.b16 %v4169, %v4168
      %4186 = vmatpush.bf16.msra.mxu0 %v4177
      %4187 = vmatpush.bf16.msra.mxu0 %v4176
      %4188 = vmatpush.bf16.msra.mxu0 %v4175
      %4189 = vmatpush.bf16.msra.mxu0 %v4174
      %4190 = vmatpush.bf16.msra.mxu0 %v4173
      %4191 = vmatpush.bf16.msra.mxu0 %v4172
      %4192 = vmatpush.bf16.msra.mxu0 %v4171
      %4193 = vmatpush.bf16.msra.mxu0 %v4170
      %4194 = vmatmul.bf16.gmra.mxu0 %v4113
      %v4195 = vpop.f32.mrf.mxu0
      %v4196 = vadd.f32 %v4137, %v4195
      %v4197 = vpop.f32.mrf.mxu0
      %v4198 = vadd.f32 %v4137, %v4197
      %4199 = vmatmul.bf16.gmra.mxu0 %v4114
      %v4200 = vpop.f32.mrf.mxu0
      %v4201 = vadd.f32 %v4137, %v4200
      %v4202 = vpop.f32.mrf.mxu0
      %v4203 = vadd.f32 %v4137, %v4202
      %4204 = vmatmul.bf16.gmra.mxu0 %v4115
      %v4205 = vpop.f32.mrf.mxu0
      %v4206 = vadd.f32 %v4137, %v4205
      %v4207 = vpop.f32.mrf.mxu0
      %v4208 = vadd.f32 %v4137, %v4207
      %4209 = vmatmul.bf16.gmra.mxu0 %v4116
      %v4210 = vpop.f32.mrf.mxu0
      %v4211 = vadd.f32 %v4137, %v4210
      %v4212 = vpop.f32.mrf.mxu0
      %v4213 = vadd.f32 %v4137, %v4212
      %4214 = vmatmul.bf16.gmra.mxu0 %v4117
      %v4215 = vpop.f32.mrf.mxu0
      %v4216 = vadd.f32 %v4137, %v4215
      %v4217 = vpop.f32.mrf.mxu0
      %v4218 = vadd.f32 %v4137, %v4217
      %4219 = vmatmul.bf16.gmra.mxu0 %v4118
      %v4220 = vpop.f32.mrf.mxu0
      %v4221 = vadd.f32 %v4137, %v4220
      %v4222 = vpop.f32.mrf.mxu0
      %v4223 = vadd.f32 %v4137, %v4222
      %4224 = vmatmul.bf16.gmra.mxu0 %v4119
      %v4225 = vpop.f32.mrf.mxu0
      %v4226 = vadd.f32 %v4137, %v4225
      %v4227 = vpop.f32.mrf.mxu0
      %v4228 = vadd.f32 %v4137, %v4227
      %4229 = vmatmul.bf16.gmra.mxu0 %v4120
      %v4230 = vpop.f32.mrf.mxu0
      %v4231 = vadd.f32 %v4137, %v4230
      %v4232 = vpop.f32.mrf.mxu0
      %v4233 = vadd.f32 %v4137, %v4232
      %4234 = vdwg.mxu0
      %v4235 = vmax.f32 %v4196, 0.0
      %v4236 = vmax.f32 %v4198, 0.0
      %v4237 = vmax.f32 %v4201, 0.0
      %v4238 = vmax.f32 %v4203, 0.0
      %v4239 = vmax.f32 %v4206, 0.0
      %v4240 = vmax.f32 %v4208, 0.0
      %v4241 = vmax.f32 %v4211, 0.0
      %v4242 = vmax.f32 %v4213, 0.0
      %v4243 = vmax.f32 %v4216, 0.0
      %v4244 = vmax.f32 %v4218, 0.0
      %v4245 = vmax.f32 %v4221, 0.0
      %v4246 = vmax.f32 %v4223, 0.0
      %v4247 = vmax.f32 %v4226, 0.0
      %v4248 = vmax.f32 %v4228, 0.0
      %v4249 = vmax.f32 %v4231, 0.0
      %v4250 = vmax.f32 %v4233, 0.0
      %v4251 = vpack.c.bf16 %v4236, %v4235
      %v4252 = vpack.c.bf16 %v4238, %v4237
      %v4253 = vpack.c.bf16 %v4240, %v4239
      %v4254 = vpack.c.bf16 %v4242, %v4241
      %v4255 = vpack.c.bf16 %v4244, %v4243
      %v4256 = vpack.c.bf16 %v4246, %v4245
      %v4257 = vpack.c.bf16 %v4248, %v4247
      %v4258 = vpack.c.bf16 %v4250, %v4249
      %v4259 = vld [vmem:[%s3] sm:$0xf]
      %v4260 = vld [vmem:[%s3 + $0x4] sm:$0xf]
      %v4261 = vld [vmem:[%s3 + $0x8] sm:$0xf]
      %v4262 = vld [vmem:[%s3 + $0xc] sm:$0xf]
      %v4263 = vld [vmem:[%s3 + $0x10] sm:$0xf]
      %v4264 = vld [vmem:[%s3 + $0x14] sm:$0xf]
      %v4265 = vld [vmem:[%s3 + $0x18] sm:$0xf]
      %v4266 = vld [vmem:[%s3 + $0x1c] sm:$0xf]
      %v4267 = vld [vmem:[%s3 + $0x20] sm:$0xf]
      %v4268 = vld [vmem:[%s3 + $0x24] sm:$0xf]
      %v4269 = vld [vmem:[%s3 + $0x28] sm:$0xf]
      %v4270 = vld [vmem:[%s3 + $0x2c] sm:$0xf]
      %v4271 = vld [vmem:[%s3 + $0x30] sm:$0xf]
      %v4272 = vld [vmem:[%s3 + $0x34] sm:$0xf]
      %v4273 = vld [vmem:[%s3 + $0x38] sm:$0xf]
      %v4274 = vld [vmem:[%s3 + $0x3c] sm:$0xf]
      %v4275 = vperm.slane %v423, 2
      %v4292 = vunpack.c.l.b16 %v4259
      %v4293 = vunpack.c.l.b16 %v4260
      %v4294 = vunpack.c.l.b16 %v4261
      %v4295 = vunpack.c.l.b16 %v4262
      %v4296 = vunpack.c.l.b16 %v4263
      %v4297 = vunpack.c.l.b16 %v4264
      %v4298 = vunpack.c.l.b16 %v4265
      %v4299 = vunpack.c.l.b16 %v4266
      %v4300 = vunpack.c.l.b16 %v4267
      %v4301 = vunpack.c.l.b16 %v4268
      %v4302 = vunpack.c.l.b16 %v4269
      %v4303 = vunpack.c.l.b16 %v4270
      %v4304 = vunpack.c.l.b16 %v4271
      %v4305 = vunpack.c.l.b16 %v4272
      %v4306 = vunpack.c.l.b16 %v4273
      %v4307 = vunpack.c.l.b16 %v4274
      %v4308 = vpack.c.b16 %v4293, %v4292
      %v4309 = vpack.c.b16 %v4295, %v4294
      %v4310 = vpack.c.b16 %v4297, %v4296
      %v4311 = vpack.c.b16 %v4299, %v4298
      %v4312 = vpack.c.b16 %v4301, %v4300
      %v4313 = vpack.c.b16 %v4303, %v4302
      %v4314 = vpack.c.b16 %v4305, %v4304
      %v4315 = vpack.c.b16 %v4307, %v4306
      %4324 = vmatpush.bf16.msra.mxu0 %v4315
      %4325 = vmatpush.bf16.msra.mxu0 %v4314
      %4326 = vmatpush.bf16.msra.mxu0 %v4313
      %4327 = vmatpush.bf16.msra.mxu0 %v4312
      %4328 = vmatpush.bf16.msra.mxu0 %v4311
      %4329 = vmatpush.bf16.msra.mxu0 %v4310
      %4330 = vmatpush.bf16.msra.mxu0 %v4309
      %4331 = vmatpush.bf16.msra.mxu0 %v4308
      %4332 = vmatmul.bf16.gmra.mxu0 %v4251
      %v4333 = vpop.f32.mrf.mxu0
      %v4334 = vadd.f32 %v4275, %v4333
      %v4335 = vpop.f32.mrf.mxu0
      %v4336 = vadd.f32 %v4275, %v4335
      %4337 = vmatmul.bf16.gmra.mxu0 %v4252
      %v4338 = vpop.f32.mrf.mxu0
      %v4339 = vadd.f32 %v4275, %v4338
      %v4340 = vpop.f32.mrf.mxu0
      %v4341 = vadd.f32 %v4275, %v4340
      %4342 = vmatmul.bf16.gmra.mxu0 %v4253
      %v4343 = vpop.f32.mrf.mxu0
      %v4344 = vadd.f32 %v4275, %v4343
      %v4345 = vpop.f32.mrf.mxu0
      %v4346 = vadd.f32 %v4275, %v4345
      %4347 = vmatmul.bf16.gmra.mxu0 %v4254
      %v4348 = vpop.f32.mrf.mxu0
      %v4349 = vadd.f32 %v4275, %v4348
      %v4350 = vpop.f32.mrf.mxu0
      %v4351 = vadd.f32 %v4275, %v4350
      %4352 = vmatmul.bf16.gmra.mxu0 %v4255
      %v4353 = vpop.f32.mrf.mxu0
      %v4354 = vadd.f32 %v4275, %v4353
      %v4355 = vpop.f32.mrf.mxu0
      %v4356 = vadd.f32 %v4275, %v4355
      %4357 = vmatmul.bf16.gmra.mxu0 %v4256
      %v4358 = vpop.f32.mrf.mxu0
      %v4359 = vadd.f32 %v4275, %v4358
      %v4360 = vpop.f32.mrf.mxu0
      %v4361 = vadd.f32 %v4275, %v4360
      %4362 = vmatmul.bf16.gmra.mxu0 %v4257
      %v4363 = vpop.f32.mrf.mxu0
      %v4364 = vadd.f32 %v4275, %v4363
      %v4365 = vpop.f32.mrf.mxu0
      %v4366 = vadd.f32 %v4275, %v4365
      %4367 = vmatmul.bf16.gmra.mxu0 %v4258
      %v4368 = vpop.f32.mrf.mxu0
      %v4369 = vadd.f32 %v4275, %v4368
      %v4370 = vpop.f32.mrf.mxu0
      %v4371 = vadd.f32 %v4275, %v4370
      %4372 = vdwg.mxu0
      %4373 = vst [vmem:[%s229] sm:$0xff] %v4334
      %4374 = vst [vmem:[%s229 + $0x8] sm:$0xff] %v4336
      %4375 = vst [vmem:[%s229 + $0x10] sm:$0xff] %v4339
      %4376 = vst [vmem:[%s229 + $0x18] sm:$0xff] %v4341
      %4377 = vst [vmem:[%s229 + $0x20] sm:$0xff] %v4344
      %4378 = vst [vmem:[%s229 + $0x28] sm:$0xff] %v4346
      %4379 = vst [vmem:[%s229 + $0x30] sm:$0xff] %v4349
      %4380 = vst [vmem:[%s229 + $0x38] sm:$0xff] %v4351
      %4381 = vst [vmem:[%s229 + $0x40] sm:$0xff] %v4354
      %4382 = vst [vmem:[%s229 + $0x48] sm:$0xff] %v4356
      %4383 = vst [vmem:[%s229 + $0x50] sm:$0xff] %v4359
      %4384 = vst [vmem:[%s229 + $0x58] sm:$0xff] %v4361
      %4385 = vst [vmem:[%s229 + $0x60] sm:$0xff] %v4364
      %4386 = vst [vmem:[%s229 + $0x68] sm:$0xff] %v4366
      %4387 = vst [vmem:[%s229 + $0x70] sm:$0xff] %v4369
      %4388 = vst [vmem:[%s229 + $0x78] sm:$0xff] %v4371
      %s4389 = smul.u32 16, %s16
      %p4390 = scmp.lt.s32.totalorder %s4389, 47
      %s4391 = scalar_select %p4390, %s4389, 47
      %s4392 = smul.addr %s4391, 8
      %s4393 = scalar_lea.vmem %s5, %s4392
      // Predicated region
      $region41: #{classifier_forward.1} parent=39 // pred_check
        %p4394 = pneg %p144
      $region42: #{classifier_forward.1} parent=39 // pred_check_branch
        %4396 = sbr.rel (%p4394) target = $region44
      $region43: #{classifier_forward.1} parent=39 // pred_region
        %s4397 = smul.u32 16, %s16
      $region44: #{classifier_forward.1} parent=39 // pred_fallthru
        _
    $region40: #{classifier_forward.1} parent=5 // pred_fallthru
      _
    %p4398 = scmp.le.s32.totalorder 2, %s11
    // Predicated region
    $region45: #{classifier_forward.1} parent=5 // pred_check
      %p4399 = pneg %p4398
    $region46: #{classifier_forward.1} parent=5 // pred_check_branch
      %4401 = sbr.rel (%p4399) target = $region48
    $region47: #{classifier_forward.1} parent=5 // pred_region
      %s4402 = ssub.s32 %s11, 2
      // Predicated region
      $region49: #{classifier_forward.1} parent=47 // pred_check
        %p4403 = pneg %p150
      $region50: #{classifier_forward.1} parent=47 // pred_check_branch
        %4405 = sbr.rel (%p4403) target = $region52
      $region51: #{classifier_forward.1} parent=47 // pred_region
        %s4406 = smul.u32 16, %s17
        %p4407 = scmp.lt.s32.totalorder %s4406, 47
        %s4408 = scalar_select %p4407, %s4406, 47
        %s4409 = smul.addr %s4408, 8
        %s4410 = scalar_lea.vmem %s5, %s4409
      $region52: #{classifier_forward.1} parent=47 // pred_fallthru
        _
    $region48: #{classifier_forward.1} parent=5 // pred_fallthru
      _
  $region6: #{classifier_forward.1} parent=0 // loop_footer
    %s15 = sadd.s32 1, %s11
  $region7: #{classifier_forward.1} parent=0 // loop_footer_branch
    %10 = sbr.rel target = $region3
  $region8: #{classifier_forward.1} parent=0 // loop_exit
    _

</llo_original>
